<compile_context>
chip_gen: v7x
topology: tpu7x:2x2x1
jax: 0.10.0
libtpu: 0.0.40
codegen_flags: <defaults>
</compile_context>

<pallas_src>
import functools

import jax
import jax.numpy as jnp
import numpy as np
from jax import lax
from jax.experimental import pallas as pl
from jax.experimental.pallas import tpu as pltpu

BN_EPS = 1e-5


# ----------------------------------------------------------------------------
# Fused BasicBlock kernel (one image per grid step).
# ----------------------------------------------------------------------------
def _basic_block_kernel(*refs, stride, Hq, Ho, Wo, has_proj):
    if has_proj:
        (xph_ref, xsc_ref, w1_ref, b1_ref, w2_ref, b2_ref, ws_ref,
         o_ref, pad_ref) = refs
    else:
        (xph_ref, w1_ref, b1_ref, w2_ref, b2_ref, o_ref, pad_ref) = refs
        xsc_ref = ws_ref = None
    s = stride
    cin = w1_ref.shape[1]
    planes = w1_ref.shape[2]
    M = Ho * Wo

    # Zero only the halo border of the conv1-output scratch (the interior is
    # fully overwritten below).  Done every step so results stay correct when
    # the "parallel" grid axis is sharded across TensorCores (per-core scratch).
    zrow = jnp.zeros((Wo + 2, planes), pad_ref.dtype)
    pad_ref[0, :, :] = zrow
    pad_ref[Ho + 1, :, :] = zrow
    zcol = jnp.zeros((Ho + 2, 1, planes), pad_ref.dtype)
    pad_ref[:, pl.ds(0, 1), :] = zcol
    pad_ref[:, pl.ds(Wo + 1, 1), :] = zcol

    # ---- conv1 (3x3, stride s) + folded bn1 + relu: one GEMM per tap over
    # the whole image (M = Ho*Wo rows).  Tap (dy, dx) reads polyphase plane
    # p = (dy%s)*s + dx%s at rows [dy//s, dy//s+Ho), cols [dx//s, dx//s+Wo):
    # contiguous slabs, no im2col materialization in HBM.
    acc1 = jnp.zeros((M, planes), jnp.float32)
    for dy in range(3):
        for dx in range(3):
            p = (dy % s) * s + (dx % s)
            qy, qx = dy // s, dx // s
            lhs = xph_ref[pl.ds(p * Hq + qy, Ho), pl.ds(qx, Wo), :]   # (Ho,Wo,Cin) bf16
            acc1 += jnp.dot(lhs.reshape(M, cin), w1_ref[dy * 3 + dx],
                            preferred_element_type=jnp.float32)
    out1 = jnp.maximum(acc1 + b1_ref[...], 0.0).astype(jnp.bfloat16)  # (M, planes)
    pad_ref[pl.ds(1, Ho), pl.ds(1, Wo), :] = out1.reshape(Ho, Wo, planes)

    # ---- conv2 (3x3, stride 1) + folded bn2 + shortcut + relu.
    acc2 = jnp.zeros((M, planes), jnp.float32)
    for dy in range(3):
        for dx in range(3):
            lhs = pad_ref[pl.ds(dy, Ho), pl.ds(dx, Wo), :]            # (Ho,Wo,planes) bf16
            acc2 += jnp.dot(lhs.reshape(M, planes), w2_ref[dy * 3 + dx],
                            preferred_element_type=jnp.float32)
    if has_proj:
        # fused 1x1-conv + bn shortcut (its bias is pre-folded into b2).
        acc2 += jnp.dot(xsc_ref[...], ws_ref[...],
                        preferred_element_type=jnp.float32)
    else:
        # identity residual: center phase of the padded bf16 input (no extra
        # f32 residual stream from HBM).
        res = xph_ref[pl.ds(1, Ho), pl.ds(1, Wo), :]
        acc2 += res.reshape(M, planes).astype(jnp.float32)
    o_ref[...] = jnp.maximum(acc2 + b2_ref[...], 0.0).astype(o_ref.dtype)


# ----------------------------------------------------------------------------
# Host-side glue: polyphase layout, BN folding, parameter init.
# ----------------------------------------------------------------------------
def _polyphase(x_nhwc, stride):
    """Padded, stride-polyphase layout: (N,H,W,C) -> (N, s*s*Hq, Wq, C).

    Phase (py,px) holds xpad[:, py::s, px::s, :]; the kernel's tap windows
    become contiguous slices (no strided or expanded patch tensors in HBM).
    """
    N, H, W, C = x_nhwc.shape
    s = stride
    Ho = (H + 2 - 3) // s + 1
    Wo = (W + 2 - 3) // s + 1
    q = 2 // s
    Hq, Wq = Ho + q, Wo + q
    xp = jnp.pad(x_nhwc, ((0, 0), (1, 1), (1, 1), (0, 0)))
    phases = []
    for py in range(s):
        for px in range(s):
            ph = xp[:, py::s, px::s, :][:, :Hq, :Wq, :]
            pad_h, pad_w = Hq - ph.shape[1], Wq - ph.shape[2]
            if pad_h or pad_w:
                ph = jnp.pad(ph, ((0, 0), (0, pad_h), (0, pad_w), (0, 0)))
            phases.append(ph)
    xph = jnp.concatenate(phases, axis=1) if len(phases) > 1 else phases[0]
    return xph, (Ho, Wo, Hq, Wq)


def _fold_bn(bn):
    gamma, beta, mean, var = bn
    scale = gamma / jnp.sqrt(var + BN_EPS)
    bias = beta - mean * scale
    return scale, bias


def _prepare(params, in_planes, planes, has_proj):
    """Fold inference-mode BN into bf16 weights + f32 biases."""
    s1, b1 = _fold_bn(params["bn1"])
    s2, b2 = _fold_bn(params["bn2"])
    w1 = jnp.transpose(params["w1"], (2, 3, 1, 0)) * s1[None, None, None, :]
    w1f = w1.reshape(9, in_planes, planes).astype(jnp.bfloat16)
    w2 = jnp.transpose(params["w2"], (2, 3, 1, 0)) * s2[None, None, None, :]
    w2f = w2.reshape(9, planes, planes).astype(jnp.bfloat16)
    b1v = b1.reshape(1, planes).astype(jnp.float32)
    if has_proj:
        ss, bs = _fold_bn(params["bns"])
        wsf = (params["ws"][:, :, 0, 0] * ss[:, None]).T.astype(jnp.bfloat16)
        b2v = (b2 + bs).reshape(1, planes).astype(jnp.float32)  # shortcut bias folded in
    else:
        wsf = None
        b2v = b2.reshape(1, planes).astype(jnp.float32)
    return w1f, b1v, w2f, b2v, wsf


def init_params(key, in_planes, planes):
    ks = jax.random.split(key, 8)

    def bn_params(k, c):
        k1, k2, k3, k4 = jax.random.split(k, 4)
        gamma = 1.0 + 0.1 * jax.random.normal(k1, (c,), jnp.float32)
        beta = 0.1 * jax.random.normal(k2, (c,), jnp.float32)
        mean = 0.1 * jax.random.normal(k3, (c,), jnp.float32)
        var = 0.5 + jnp.abs(jax.random.normal(k4, (c,), jnp.float32))
        return (gamma, beta, mean, var)

    return {
        "w1": 0.2 * jax.random.normal(ks[0], (planes, in_planes, 3, 3), jnp.float32),
        "bn1": bn_params(ks[1], planes),
        "w2": 0.2 * jax.random.normal(ks[2], (planes, planes, 3, 3), jnp.float32),
        "bn2": bn_params(ks[3], planes),
        "ws": 0.2 * jax.random.normal(ks[4], (planes, in_planes, 1, 1), jnp.float32),
        "bns": bn_params(ks[5], planes),
    }


# ----------------------------------------------------------------------------
# BasicBlock forward (Pallas) and a precision-matched pure-JAX reference.
# ----------------------------------------------------------------------------
@functools.partial(jax.jit, static_argnames=("stride",))
def basic_block_forward(x_nchw, params, stride=1):
    N, in_planes, H, W = x_nchw.shape
    planes = params["w1"].shape[0]
    has_proj = (stride != 1) or (in_planes != planes)

    x = jnp.transpose(x_nchw, (0, 2, 3, 1)).astype(jnp.bfloat16)      # NHWC bf16
    xph, (Ho, Wo, Hq, Wq) = _polyphase(x, stride)
    M = Ho * Wo
    s2 = stride * stride
    w1f, b1v, w2f, b2v, wsf = _prepare(params, in_planes, planes, has_proj)

    in_specs = [pl.BlockSpec((None, s2 * Hq, Wq, in_planes), lambda n: (n, 0, 0, 0))]
    args = [xph]
    if has_proj:
        xsc = x[:, ::stride, ::stride, :].reshape(N, M, in_planes)     # (N, M, Cin) bf16
        in_specs.append(pl.BlockSpec((None, M, in_planes), lambda n: (n, 0, 0)))
        args.append(xsc)
    in_specs += [
        pl.BlockSpec((9, in_planes, planes), lambda n: (0, 0, 0)),
        pl.BlockSpec((1, planes), lambda n: (0, 0)),
        pl.BlockSpec((9, planes, planes), lambda n: (0, 0, 0)),
        pl.BlockSpec((1, planes), lambda n: (0, 0)),
    ]
    args += [w1f, b1v, w2f, b2v]
    if has_proj:
        in_specs.append(pl.BlockSpec((in_planes, planes), lambda n: (0, 0)))
        args.append(wsf)

    kernel = functools.partial(
        _basic_block_kernel, stride=stride, Hq=Hq, Ho=Ho, Wo=Wo, has_proj=has_proj)

    out = pl.pallas_call(
        kernel,
        out_shape=jax.ShapeDtypeStruct((N, M, planes), jnp.bfloat16),
        grid=(N,),
        in_specs=in_specs,
        out_specs=pl.BlockSpec((None, M, planes), lambda n: (n, 0, 0)),
        scratch_shapes=[pltpu.VMEM((Ho + 2, Wo + 2, planes), jnp.bfloat16)],
        compiler_params=pltpu.CompilerParams(
            dimension_semantics=("parallel",),
            vmem_limit_bytes=32 * 1024 * 1024),
    )(*args)

    out = out.reshape(N, Ho, Wo, planes)
    return jnp.transpose(out, (0, 3, 1, 2))                           # NCHW, bf16


def reference_forward(x_nchw, params, stride):
    """Pure-JAX reference (lax.conv) mirroring the kernel's bf16/f32 precision."""
    N, in_planes, H, W = x_nchw.shape
    planes = params["w1"].shape[0]
    has_proj = (stride != 1) or (in_planes != planes)
    w1f, b1v, w2f, b2v, wsf = _prepare(params, in_planes, planes, has_proj)

    x = jnp.transpose(x_nchw, (0, 2, 3, 1))
    xb = x.astype(jnp.bfloat16)
    dn = ("NHWC", "HWIO", "NHWC")
    out1 = lax.conv_general_dilated(
        xb, w1f.reshape(3, 3, in_planes, planes), (stride, stride),
        ((1, 1), (1, 1)), dimension_numbers=dn,
        preferred_element_type=jnp.float32)
    out1 = jnp.maximum(out1 + b1v.reshape(1, 1, 1, planes), 0.0)
    out2 = lax.conv_general_dilated(
        out1.astype(jnp.bfloat16), w2f.reshape(3, 3, planes, planes), (1, 1),
        ((1, 1), (1, 1)), dimension_numbers=dn,
        preferred_element_type=jnp.float32)
    if has_proj:
        res = jnp.einsum("nhwc,cd->nhwd", xb[:, ::stride, ::stride, :], wsf,
                         preferred_element_type=jnp.float32)
    else:
        res = xb.astype(jnp.float32)   # identity residual uses the bf16 input copy
    out = jnp.maximum(out2 + b2v.reshape(1, 1, 1, planes) + res, 0.0)
    return jnp.transpose(out, (0, 3, 1, 2))


if __name__ == "__main__":
    key = jax.random.PRNGKey(0)
    k1, k2, k3, k4 = jax.random.split(key, 4)

    # Case 1: projection shortcut (stride=2, channel change), as in the spec.
    N, in_planes, planes, H, W, stride = 2, 4, 8, 16, 16, 2
    x = jax.random.normal(k1, (N, in_planes, H, W), jnp.float32)
    params = init_params(k2, in_planes, planes)
    out = jax.block_until_ready(basic_block_forward(x, params, stride=stride))
    ref = jax.block_until_ready(reference_forward(x, params, stride))
    assert out.shape == (N, planes, H // stride, W // stride), out.shape
    np.testing.assert_allclose(np.asarray(out.astype(jnp.float32)),
                               np.asarray(ref), atol=3e-2, rtol=3e-2)

    # Case 2: identity shortcut (stride=1, same channel count).
    N2, planes2, H2, W2 = 2, 8, 16, 16
    x2 = jax.random.normal(k3, (N2, planes2, H2, W2), jnp.float32)
    params2 = init_params(k4, planes2, planes2)
    out2 = jax.block_until_ready(basic_block_forward(x2, params2, stride=1))
    ref2 = jax.block_until_ready(reference_forward(x2, params2, 1))
    assert out2.shape == (N2, planes2, H2, W2), out2.shape
    np.testing.assert_allclose(np.asarray(out2.astype(jnp.float32)),
                               np.asarray(ref2), atol=3e-2, rtol=3e-2)

    print("KERNEL_OK")
</pallas_src>

<mosaic_0001>
module attributes {stable_mosaic.version = 11 : i64} {
  func.func @_basic_block_kernel(%arg0: i32, %arg1: memref<1x36x9x4xbf16, #tpu.memory_space<vmem>>, %arg2: memref<1x64x4xbf16, #tpu.memory_space<vmem>>, %arg3: memref<9x4x8xbf16, #tpu.memory_space<vmem>>, %arg4: memref<1x8xf32, #tpu.memory_space<vmem>>, %arg5: memref<9x8x8xbf16, #tpu.memory_space<vmem>>, %arg6: memref<1x8xf32, #tpu.memory_space<vmem>>, %arg7: memref<4x8xbf16, #tpu.memory_space<vmem>>, %arg8: memref<1x64x8xbf16, #tpu.memory_space<vmem>>, %arg9: memref<10x10x8xbf16, #tpu.memory_space<vmem>>) attributes {dimension_semantics = [#tpu.dimension_semantics<parallel>], iteration_bounds = array<i64: 2>, scalar_prefetch = 0 : i64, scratch_operands = 1 : i64, tpu.core_type = #tpu.core_type<tc>, window_params = [{transform_indices = @transform_0, window_bounds = array<i64: 1, 36, 9, 4>}, {transform_indices = @transform_1, window_bounds = array<i64: 1, 64, 4>}, {pipeline_mode = #tpu.pipeline_mode<synchronous>, transform_indices = @transform_2, window_bounds = array<i64: 9, 4, 8>}, {pipeline_mode = #tpu.pipeline_mode<synchronous>, transform_indices = @transform_3, window_bounds = array<i64: 1, 8>}, {pipeline_mode = #tpu.pipeline_mode<synchronous>, transform_indices = @transform_4, window_bounds = array<i64: 9, 8, 8>}, {pipeline_mode = #tpu.pipeline_mode<synchronous>, transform_indices = @transform_5, window_bounds = array<i64: 1, 8>}, {pipeline_mode = #tpu.pipeline_mode<synchronous>, transform_indices = @transform_6, window_bounds = array<i64: 4, 8>}, {transform_indices = @transform_7, window_bounds = array<i64: 1, 64, 8>}]} {
    %cst = arith.constant 0.000000e+00 : bf16
    %0 = vector.broadcast %cst : bf16 to vector<10x8xbf16>
    %c0 = arith.constant 0 : index
    %c0_0 = arith.constant 0 : index
    %c0_1 = arith.constant 0 : index
    %1 = vector.load %arg9[%c0, %c0_0, %c0_1] : memref<10x10x8xbf16, #tpu.memory_space<vmem>>, vector<1x10x8xbf16>
    %2 = vector.shape_cast %1 : vector<1x10x8xbf16> to vector<10x8xbf16>
    %3 = vector.shape_cast %0 : vector<10x8xbf16> to vector<1x10x8xbf16>
    tpu.vector_store %arg9[%c0, %c0_0, %c0_1], %3 {strides = array<i32>} : memref<10x10x8xbf16, #tpu.memory_space<vmem>>, vector<1x10x8xbf16>,
    %c9 = arith.constant 9 : index
    %c0_2 = arith.constant 0 : index
    %c0_3 = arith.constant 0 : index
    %4 = vector.load %arg9[%c9, %c0_2, %c0_3] : memref<10x10x8xbf16, #tpu.memory_space<vmem>>, vector<1x10x8xbf16>
    %5 = vector.shape_cast %4 : vector<1x10x8xbf16> to vector<10x8xbf16>
    %6 = vector.shape_cast %0 : vector<10x8xbf16> to vector<1x10x8xbf16>
    tpu.vector_store %arg9[%c9, %c0_2, %c0_3], %6 {strides = array<i32>} : memref<10x10x8xbf16, #tpu.memory_space<vmem>>, vector<1x10x8xbf16>,
    %cst_4 = arith.constant 0.000000e+00 : bf16
    %7 = vector.broadcast %cst_4 : bf16 to vector<10x1x8xbf16>
    %c0_5 = arith.constant 0 : index
    %c0_6 = arith.constant 0 : index
    %c0_7 = arith.constant 0 : index
    %8 = vector.load %arg9[%c0_5, %c0_6, %c0_7] : memref<10x10x8xbf16, #tpu.memory_space<vmem>>, vector<10x1x8xbf16>
    tpu.vector_store %arg9[%c0_5, %c0_6, %c0_7], %7 {strides = array<i32>} : memref<10x10x8xbf16, #tpu.memory_space<vmem>>, vector<10x1x8xbf16>,
    %c0_8 = arith.constant 0 : index
    %c9_9 = arith.constant 9 : index
    %c0_10 = arith.constant 0 : index
    %9 = vector.load %arg9[%c0_8, %c9_9, %c0_10] : memref<10x10x8xbf16, #tpu.memory_space<vmem>>, vector<10x1x8xbf16>
    tpu.vector_store %arg9[%c0_8, %c9_9, %c0_10], %7 {strides = array<i32>} : memref<10x10x8xbf16, #tpu.memory_space<vmem>>, vector<10x1x8xbf16>,
    %cst_11 = arith.constant 0.000000e+00 : f32
    %10 = vector.broadcast %cst_11 : f32 to vector<64x8xf32>
    %c0_12 = arith.constant 0 : index
    %c0_13 = arith.constant 0 : index
    %c0_14 = arith.constant 0 : index
    %c0_15 = arith.constant 0 : index
    %11 = vector.load %arg1[%c0_12, %c0_13, %c0_14, %c0_15] : memref<1x36x9x4xbf16, #tpu.memory_space<vmem>>, vector<1x8x8x4xbf16>
    %12 = vector.shape_cast %11 : vector<1x8x8x4xbf16> to vector<8x8x4xbf16>
    %13 = vector.shape_cast %12 : vector<8x8x4xbf16> to vector<64x4xbf16>
    %c0_16 = arith.constant 0 : index
    %c0_17 = arith.constant 0 : index
    %c0_18 = arith.constant 0 : index
    %14 = vector.load %arg3[%c0_16, %c0_17, %c0_18] : memref<9x4x8xbf16, #tpu.memory_space<vmem>>, vector<1x4x8xbf16>
    %15 = vector.shape_cast %14 : vector<1x4x8xbf16> to vector<4x8xbf16>
    %cst_19 = arith.constant dense<0.000000e+00> : vector<64x8xf32>
    %16 = tpu.matmul %13, %15, %cst_19 {dimension_numbers = #tpu.dot_dimension_numbers<[1], [0], [0], [1], [0, 0, 1, 1], [], []>} : vector<64x4xbf16>, vector<4x8xbf16>, vector<64x8xf32> -> vector<64x8xf32>
    %17 = arith.addf %10, %16 : vector<64x8xf32>
    %c0_20 = arith.constant 0 : index
    %c9_21 = arith.constant 9 : index
    %c0_22 = arith.constant 0 : index
    %c0_23 = arith.constant 0 : index
    %18 = vector.load %arg1[%c0_20, %c9_21, %c0_22, %c0_23] : memref<1x36x9x4xbf16, #tpu.memory_space<vmem>>, vector<1x8x8x4xbf16>
    %19 = vector.shape_cast %18 : vector<1x8x8x4xbf16> to vector<8x8x4xbf16>
    %20 = vector.shape_cast %19 : vector<8x8x4xbf16> to vector<64x4xbf16>
    %c1 = arith.constant 1 : index
    %c0_24 = arith.constant 0 : index
    %c0_25 = arith.constant 0 : index
    %21 = vector.load %arg3[%c1, %c0_24, %c0_25] : memref<9x4x8xbf16, #tpu.memory_space<vmem>>, vector<1x4x8xbf16>
    %22 = vector.shape_cast %21 : vector<1x4x8xbf16> to vector<4x8xbf16>
    %cst_26 = arith.constant dense<0.000000e+00> : vector<64x8xf32>
    %23 = tpu.matmul %20, %22, %cst_26 {dimension_numbers = #tpu.dot_dimension_numbers<[1], [0], [0], [1], [0, 0, 1, 1], [], []>} : vector<64x4xbf16>, vector<4x8xbf16>, vector<64x8xf32> -> vector<64x8xf32>
    %24 = arith.addf %17, %23 : vector<64x8xf32>
    %c0_27 = arith.constant 0 : index
    %c0_28 = arith.constant 0 : index
    %c1_29 = arith.constant 1 : index
    %c0_30 = arith.constant 0 : index
    %25 = vector.load %arg1[%c0_27, %c0_28, %c1_29, %c0_30] : memref<1x36x9x4xbf16, #tpu.memory_space<vmem>>, vector<1x8x8x4xbf16>
    %26 = vector.shape_cast %25 : vector<1x8x8x4xbf16> to vector<8x8x4xbf16>
    %27 = vector.shape_cast %26 : vector<8x8x4xbf16> to vector<64x4xbf16>
    %c2 = arith.constant 2 : index
    %c0_31 = arith.constant 0 : index
    %c0_32 = arith.constant 0 : index
    %28 = vector.load %arg3[%c2, %c0_31, %c0_32] : memref<9x4x8xbf16, #tpu.memory_space<vmem>>, vector<1x4x8xbf16>
    %29 = vector.shape_cast %28 : vector<1x4x8xbf16> to vector<4x8xbf16>
    %cst_33 = arith.constant dense<0.000000e+00> : vector<64x8xf32>
    %30 = tpu.matmul %27, %29, %cst_33 {dimension_numbers = #tpu.dot_dimension_numbers<[1], [0], [0], [1], [0, 0, 1, 1], [], []>} : vector<64x4xbf16>, vector<4x8xbf16>, vector<64x8xf32> -> vector<64x8xf32>
    %31 = arith.addf %24, %30 : vector<64x8xf32>
    %c0_34 = arith.constant 0 : index
    %c18 = arith.constant 18 : index
    %c0_35 = arith.constant 0 : index
    %c0_36 = arith.constant 0 : index
    %32 = vector.load %arg1[%c0_34, %c18, %c0_35, %c0_36] : memref<1x36x9x4xbf16, #tpu.memory_space<vmem>>, vector<1x8x8x4xbf16>
    %33 = vector.shape_cast %32 : vector<1x8x8x4xbf16> to vector<8x8x4xbf16>
    %34 = vector.shape_cast %33 : vector<8x8x4xbf16> to vector<64x4xbf16>
    %c3 = arith.constant 3 : index
    %c0_37 = arith.constant 0 : index
    %c0_38 = arith.constant 0 : index
    %35 = vector.load %arg3[%c3, %c0_37, %c0_38] : memref<9x4x8xbf16, #tpu.memory_space<vmem>>, vector<1x4x8xbf16>
    %36 = vector.shape_cast %35 : vector<1x4x8xbf16> to vector<4x8xbf16>
    %cst_39 = arith.constant dense<0.000000e+00> : vector<64x8xf32>
    %37 = tpu.matmul %34, %36, %cst_39 {dimension_numbers = #tpu.dot_dimension_numbers<[1], [0], [0], [1], [0, 0, 1, 1], [], []>} : vector<64x4xbf16>, vector<4x8xbf16>, vector<64x8xf32> -> vector<64x8xf32>
    %38 = arith.addf %31, %37 : vector<64x8xf32>
    %c0_40 = arith.constant 0 : index
    %c27 = arith.constant 27 : index
    %c0_41 = arith.constant 0 : index
    %c0_42 = arith.constant 0 : index
    %39 = vector.load %arg1[%c0_40, %c27, %c0_41, %c0_42] : memref<1x36x9x4xbf16, #tpu.memory_space<vmem>>, vector<1x8x8x4xbf16>
    %40 = vector.shape_cast %39 : vector<1x8x8x4xbf16> to vector<8x8x4xbf16>
    %41 = vector.shape_cast %40 : vector<8x8x4xbf16> to vector<64x4xbf16>
    %c4 = arith.constant 4 : index
    %c0_43 = arith.constant 0 : index
    %c0_44 = arith.constant 0 : index
    %42 = vector.load %arg3[%c4, %c0_43, %c0_44] : memref<9x4x8xbf16, #tpu.memory_space<vmem>>, vector<1x4x8xbf16>
    %43 = vector.shape_cast %42 : vector<1x4x8xbf16> to vector<4x8xbf16>
    %cst_45 = arith.constant dense<0.000000e+00> : vector<64x8xf32>
    %44 = tpu.matmul %41, %43, %cst_45 {dimension_numbers = #tpu.dot_dimension_numbers<[1], [0], [0], [1], [0, 0, 1, 1], [], []>} : vector<64x4xbf16>, vector<4x8xbf16>, vector<64x8xf32> -> vector<64x8xf32>
    %45 = arith.addf %38, %44 : vector<64x8xf32>
    %c0_46 = arith.constant 0 : index
    %c18_47 = arith.constant 18 : index
    %c1_48 = arith.constant 1 : index
    %c0_49 = arith.constant 0 : index
    %46 = vector.load %arg1[%c0_46, %c18_47, %c1_48, %c0_49] : memref<1x36x9x4xbf16, #tpu.memory_space<vmem>>, vector<1x8x8x4xbf16>
    %47 = vector.shape_cast %46 : vector<1x8x8x4xbf16> to vector<8x8x4xbf16>
    %48 = vector.shape_cast %47 : vector<8x8x4xbf16> to vector<64x4xbf16>
    %c5 = arith.constant 5 : index
    %c0_50 = arith.constant 0 : index
    %c0_51 = arith.constant 0 : index
    %49 = vector.load %arg3[%c5, %c0_50, %c0_51] : memref<9x4x8xbf16, #tpu.memory_space<vmem>>, vector<1x4x8xbf16>
    %50 = vector.shape_cast %49 : vector<1x4x8xbf16> to vector<4x8xbf16>
    %cst_52 = arith.constant dense<0.000000e+00> : vector<64x8xf32>
    %51 = tpu.matmul %48, %50, %cst_52 {dimension_numbers = #tpu.dot_dimension_numbers<[1], [0], [0], [1], [0, 0, 1, 1], [], []>} : vector<64x4xbf16>, vector<4x8xbf16>, vector<64x8xf32> -> vector<64x8xf32>
    %52 = arith.addf %45, %51 : vector<64x8xf32>
    %c0_53 = arith.constant 0 : index
    %c1_54 = arith.constant 1 : index
    %c0_55 = arith.constant 0 : index
    %c0_56 = arith.constant 0 : index
    %53 = vector.load %arg1[%c0_53, %c1_54, %c0_55, %c0_56] : memref<1x36x9x4xbf16, #tpu.memory_space<vmem>>, vector<1x8x8x4xbf16>
    %54 = vector.shape_cast %53 : vector<1x8x8x4xbf16> to vector<8x8x4xbf16>
    %55 = vector.shape_cast %54 : vector<8x8x4xbf16> to vector<64x4xbf16>
    %c6 = arith.constant 6 : index
    %c0_57 = arith.constant 0 : index
    %c0_58 = arith.constant 0 : index
    %56 = vector.load %arg3[%c6, %c0_57, %c0_58] : memref<9x4x8xbf16, #tpu.memory_space<vmem>>, vector<1x4x8xbf16>
    %57 = vector.shape_cast %56 : vector<1x4x8xbf16> to vector<4x8xbf16>
    %cst_59 = arith.constant dense<0.000000e+00> : vector<64x8xf32>
    %58 = tpu.matmul %55, %57, %cst_59 {dimension_numbers = #tpu.dot_dimension_numbers<[1], [0], [0], [1], [0, 0, 1, 1], [], []>} : vector<64x4xbf16>, vector<4x8xbf16>, vector<64x8xf32> -> vector<64x8xf32>
    %59 = arith.addf %52, %58 : vector<64x8xf32>
    %c0_60 = arith.constant 0 : index
    %c10 = arith.constant 10 : index
    %c0_61 = arith.constant 0 : index
    %c0_62 = arith.constant 0 : index
    %60 = vector.load %arg1[%c0_60, %c10, %c0_61, %c0_62] : memref<1x36x9x4xbf16, #tpu.memory_space<vmem>>, vector<1x8x8x4xbf16>
    %61 = vector.shape_cast %60 : vector<1x8x8x4xbf16> to vector<8x8x4xbf16>
    %62 = vector.shape_cast %61 : vector<8x8x4xbf16> to vector<64x4xbf16>
    %c7 = arith.constant 7 : index
    %c0_63 = arith.constant 0 : index
    %c0_64 = arith.constant 0 : index
    %63 = vector.load %arg3[%c7, %c0_63, %c0_64] : memref<9x4x8xbf16, #tpu.memory_space<vmem>>, vector<1x4x8xbf16>
    %64 = vector.shape_cast %63 : vector<1x4x8xbf16> to vector<4x8xbf16>
    %cst_65 = arith.constant dense<0.000000e+00> : vector<64x8xf32>
    %65 = tpu.matmul %62, %64, %cst_65 {dimension_numbers = #tpu.dot_dimension_numbers<[1], [0], [0], [1], [0, 0, 1, 1], [], []>} : vector<64x4xbf16>, vector<4x8xbf16>, vector<64x8xf32> -> vector<64x8xf32>
    %66 = arith.addf %59, %65 : vector<64x8xf32>
    %c0_66 = arith.constant 0 : index
    %c1_67 = arith.constant 1 : index
    %c1_68 = arith.constant 1 : index
    %c0_69 = arith.constant 0 : index
    %67 = vector.load %arg1[%c0_66, %c1_67, %c1_68, %c0_69] : memref<1x36x9x4xbf16, #tpu.memory_space<vmem>>, vector<1x8x8x4xbf16>
    %68 = vector.shape_cast %67 : vector<1x8x8x4xbf16> to vector<8x8x4xbf16>
    %69 = vector.shape_cast %68 : vector<8x8x4xbf16> to vector<64x4xbf16>
    %c8 = arith.constant 8 : index
    %c0_70 = arith.constant 0 : index
    %c0_71 = arith.constant 0 : index
    %70 = vector.load %arg3[%c8, %c0_70, %c0_71] : memref<9x4x8xbf16, #tpu.memory_space<vmem>>, vector<1x4x8xbf16>
    %71 = vector.shape_cast %70 : vector<1x4x8xbf16> to vector<4x8xbf16>
    %cst_72 = arith.constant dense<0.000000e+00> : vector<64x8xf32>
    %72 = tpu.matmul %69, %71, %cst_72 {dimension_numbers = #tpu.dot_dimension_numbers<[1], [0], [0], [1], [0, 0, 1, 1], [], []>} : vector<64x4xbf16>, vector<4x8xbf16>, vector<64x8xf32> -> vector<64x8xf32>
    %73 = arith.addf %66, %72 : vector<64x8xf32>
    %c0_73 = arith.constant 0 : index
    %c0_74 = arith.constant 0 : index
    %74 = vector.load %arg4[%c0_73, %c0_74] : memref<1x8xf32, #tpu.memory_space<vmem>>, vector<1x8xf32>
    %75 = vector.broadcast %74 : vector<1x8xf32> to vector<64x8xf32>
    %76 = arith.addf %73, %75 : vector<64x8xf32>
    %cst_75 = arith.constant 0.000000e+00 : f32
    %77 = vector.broadcast %cst_75 : f32 to vector<64x8xf32>
    %78 = arith.maximumf %76, %77 : vector<64x8xf32>
    %79 = arith.truncf %78 : vector<64x8xf32> to vector<64x8xbf16>
    %80 = vector.shape_cast %79 : vector<64x8xbf16> to vector<8x8x8xbf16>
    %c1_76 = arith.constant 1 : index
    %c1_77 = arith.constant 1 : index
    %c0_78 = arith.constant 0 : index
    %81 = vector.load %arg9[%c1_76, %c1_77, %c0_78] : memref<10x10x8xbf16, #tpu.memory_space<vmem>>, vector<8x8x8xbf16>
    tpu.vector_store %arg9[%c1_76, %c1_77, %c0_78], %80 {strides = array<i32>} : memref<10x10x8xbf16, #tpu.memory_space<vmem>>, vector<8x8x8xbf16>,
    %cst_79 = arith.constant 0.000000e+00 : f32
    %82 = vector.broadcast %cst_79 : f32 to vector<64x8xf32>
    %c0_80 = arith.constant 0 : index
    %c0_81 = arith.constant 0 : index
    %c0_82 = arith.constant 0 : index
    %83 = vector.load %arg9[%c0_80, %c0_81, %c0_82] : memref<10x10x8xbf16, #tpu.memory_space<vmem>>, vector<8x8x8xbf16>
    %84 = vector.shape_cast %83 : vector<8x8x8xbf16> to vector<64x8xbf16>
    %c0_83 = arith.constant 0 : index
    %c0_84 = arith.constant 0 : index
    %c0_85 = arith.constant 0 : index
    %85 = vector.load %arg5[%c0_83, %c0_84, %c0_85] : memref<9x8x8xbf16, #tpu.memory_space<vmem>>, vector<1x8x8xbf16>
    %86 = vector.shape_cast %85 : vector<1x8x8xbf16> to vector<8x8xbf16>
    %cst_86 = arith.constant dense<0.000000e+00> : vector<64x8xf32>
    %87 = tpu.matmul %84, %86, %cst_86 {dimension_numbers = #tpu.dot_dimension_numbers<[1], [0], [0], [1], [0, 0, 1, 1], [], []>} : vector<64x8xbf16>, vector<8x8xbf16>, vector<64x8xf32> -> vector<64x8xf32>
    %88 = arith.addf %82, %87 : vector<64x8xf32>
    %c0_87 = arith.constant 0 : index
    %c1_88 = arith.constant 1 : index
    %c0_89 = arith.constant 0 : index
    %89 = vector.load %arg9[%c0_87, %c1_88, %c0_89] : memref<10x10x8xbf16, #tpu.memory_space<vmem>>, vector<8x8x8xbf16>
    %90 = vector.shape_cast %89 : vector<8x8x8xbf16> to vector<64x8xbf16>
    %c1_90 = arith.constant 1 : index
    %c0_91 = arith.constant 0 : index
    %c0_92 = arith.constant 0 : index
    %91 = vector.load %arg5[%c1_90, %c0_91, %c0_92] : memref<9x8x8xbf16, #tpu.memory_space<vmem>>, vector<1x8x8xbf16>
    %92 = vector.shape_cast %91 : vector<1x8x8xbf16> to vector<8x8xbf16>
    %cst_93 = arith.constant dense<0.000000e+00> : vector<64x8xf32>
    %93 = tpu.matmul %90, %92, %cst_93 {dimension_numbers = #tpu.dot_dimension_numbers<[1], [0], [0], [1], [0, 0, 1, 1], [], []>} : vector<64x8xbf16>, vector<8x8xbf16>, vector<64x8xf32> -> vector<64x8xf32>
    %94 = arith.addf %88, %93 : vector<64x8xf32>
    %c0_94 = arith.constant 0 : index
    %c2_95 = arith.constant 2 : index
    %c0_96 = arith.constant 0 : index
    %95 = vector.load %arg9[%c0_94, %c2_95, %c0_96] : memref<10x10x8xbf16, #tpu.memory_space<vmem>>, vector<8x8x8xbf16>
    %96 = vector.shape_cast %95 : vector<8x8x8xbf16> to vector<64x8xbf16>
    %c2_97 = arith.constant 2 : index
    %c0_98 = arith.constant 0 : index
    %c0_99 = arith.constant 0 : index
    %97 = vector.load %arg5[%c2_97, %c0_98, %c0_99] : memref<9x8x8xbf16, #tpu.memory_space<vmem>>, vector<1x8x8xbf16>
    %98 = vector.shape_cast %97 : vector<1x8x8xbf16> to vector<8x8xbf16>
    %cst_100 = arith.constant dense<0.000000e+00> : vector<64x8xf32>
    %99 = tpu.matmul %96, %98, %cst_100 {dimension_numbers = #tpu.dot_dimension_numbers<[1], [0], [0], [1], [0, 0, 1, 1], [], []>} : vector<64x8xbf16>, vector<8x8xbf16>, vector<64x8xf32> -> vector<64x8xf32>
    %100 = arith.addf %94, %99 : vector<64x8xf32>
    %c1_101 = arith.constant 1 : index
    %c0_102 = arith.constant 0 : index
    %c0_103 = arith.constant 0 : index
    %101 = vector.load %arg9[%c1_101, %c0_102, %c0_103] : memref<10x10x8xbf16, #tpu.memory_space<vmem>>, vector<8x8x8xbf16>
    %102 = vector.shape_cast %101 : vector<8x8x8xbf16> to vector<64x8xbf16>
    %c3_104 = arith.constant 3 : index
    %c0_105 = arith.constant 0 : index
    %c0_106 = arith.constant 0 : index
    %103 = vector.load %arg5[%c3_104, %c0_105, %c0_106] : memref<9x8x8xbf16, #tpu.memory_space<vmem>>, vector<1x8x8xbf16>
    %104 = vector.shape_cast %103 : vector<1x8x8xbf16> to vector<8x8xbf16>
    %cst_107 = arith.constant dense<0.000000e+00> : vector<64x8xf32>
    %105 = tpu.matmul %102, %104, %cst_107 {dimension_numbers = #tpu.dot_dimension_numbers<[1], [0], [0], [1], [0, 0, 1, 1], [], []>} : vector<64x8xbf16>, vector<8x8xbf16>, vector<64x8xf32> -> vector<64x8xf32>
    %106 = arith.addf %100, %105 : vector<64x8xf32>
    %c1_108 = arith.constant 1 : index
    %c1_109 = arith.constant 1 : index
    %c0_110 = arith.constant 0 : index
    %107 = vector.load %arg9[%c1_108, %c1_109, %c0_110] : memref<10x10x8xbf16, #tpu.memory_space<vmem>>, vector<8x8x8xbf16>
    %108 = vector.shape_cast %107 : vector<8x8x8xbf16> to vector<64x8xbf16>
    %c4_111 = arith.constant 4 : index
    %c0_112 = arith.constant 0 : index
    %c0_113 = arith.constant 0 : index
    %109 = vector.load %arg5[%c4_111, %c0_112, %c0_113] : memref<9x8x8xbf16, #tpu.memory_space<vmem>>, vector<1x8x8xbf16>
    %110 = vector.shape_cast %109 : vector<1x8x8xbf16> to vector<8x8xbf16>
    %cst_114 = arith.constant dense<0.000000e+00> : vector<64x8xf32>
    %111 = tpu.matmul %108, %110, %cst_114 {dimension_numbers = #tpu.dot_dimension_numbers<[1], [0], [0], [1], [0, 0, 1, 1], [], []>} : vector<64x8xbf16>, vector<8x8xbf16>, vector<64x8xf32> -> vector<64x8xf32>
    %112 = arith.addf %106, %111 : vector<64x8xf32>
    %c1_115 = arith.constant 1 : index
    %c2_116 = arith.constant 2 : index
    %c0_117 = arith.constant 0 : index
    %113 = vector.load %arg9[%c1_115, %c2_116, %c0_117] : memref<10x10x8xbf16, #tpu.memory_space<vmem>>, vector<8x8x8xbf16>
    %114 = vector.shape_cast %113 : vector<8x8x8xbf16> to vector<64x8xbf16>
    %c5_118 = arith.constant 5 : index
    %c0_119 = arith.constant 0 : index
    %c0_120 = arith.constant 0 : index
    %115 = vector.load %arg5[%c5_118, %c0_119, %c0_120] : memref<9x8x8xbf16, #tpu.memory_space<vmem>>, vector<1x8x8xbf16>
    %116 = vector.shape_cast %115 : vector<1x8x8xbf16> to vector<8x8xbf16>
    %cst_121 = arith.constant dense<0.000000e+00> : vector<64x8xf32>
    %117 = tpu.matmul %114, %116, %cst_121 {dimension_numbers = #tpu.dot_dimension_numbers<[1], [0], [0], [1], [0, 0, 1, 1], [], []>} : vector<64x8xbf16>, vector<8x8xbf16>, vector<64x8xf32> -> vector<64x8xf32>
    %118 = arith.addf %112, %117 : vector<64x8xf32>
    %c2_122 = arith.constant 2 : index
    %c0_123 = arith.constant 0 : index
    %c0_124 = arith.constant 0 : index
    %119 = vector.load %arg9[%c2_122, %c0_123, %c0_124] : memref<10x10x8xbf16, #tpu.memory_space<vmem>>, vector<8x8x8xbf16>
    %120 = vector.shape_cast %119 : vector<8x8x8xbf16> to vector<64x8xbf16>
    %c6_125 = arith.constant 6 : index
    %c0_126 = arith.constant 0 : index
    %c0_127 = arith.constant 0 : index
    %121 = vector.load %arg5[%c6_125, %c0_126, %c0_127] : memref<9x8x8xbf16, #tpu.memory_space<vmem>>, vector<1x8x8xbf16>
    %122 = vector.shape_cast %121 : vector<1x8x8xbf16> to vector<8x8xbf16>
    %cst_128 = arith.constant dense<0.000000e+00> : vector<64x8xf32>
    %123 = tpu.matmul %120, %122, %cst_128 {dimension_numbers = #tpu.dot_dimension_numbers<[1], [0], [0], [1], [0, 0, 1, 1], [], []>} : vector<64x8xbf16>, vector<8x8xbf16>, vector<64x8xf32> -> vector<64x8xf32>
    %124 = arith.addf %118, %123 : vector<64x8xf32>
    %c2_129 = arith.constant 2 : index
    %c1_130 = arith.constant 1 : index
    %c0_131 = arith.constant 0 : index
    %125 = vector.load %arg9[%c2_129, %c1_130, %c0_131] : memref<10x10x8xbf16, #tpu.memory_space<vmem>>, vector<8x8x8xbf16>
    %126 = vector.shape_cast %125 : vector<8x8x8xbf16> to vector<64x8xbf16>
    %c7_132 = arith.constant 7 : index
    %c0_133 = arith.constant 0 : index
    %c0_134 = arith.constant 0 : index
    %127 = vector.load %arg5[%c7_132, %c0_133, %c0_134] : memref<9x8x8xbf16, #tpu.memory_space<vmem>>, vector<1x8x8xbf16>
    %128 = vector.shape_cast %127 : vector<1x8x8xbf16> to vector<8x8xbf16>
    %cst_135 = arith.constant dense<0.000000e+00> : vector<64x8xf32>
    %129 = tpu.matmul %126, %128, %cst_135 {dimension_numbers = #tpu.dot_dimension_numbers<[1], [0], [0], [1], [0, 0, 1, 1], [], []>} : vector<64x8xbf16>, vector<8x8xbf16>, vector<64x8xf32> -> vector<64x8xf32>
    %130 = arith.addf %124, %129 : vector<64x8xf32>
    %c2_136 = arith.constant 2 : index
    %c2_137 = arith.constant 2 : index
    %c0_138 = arith.constant 0 : index
    %131 = vector.load %arg9[%c2_136, %c2_137, %c0_138] : memref<10x10x8xbf16, #tpu.memory_space<vmem>>, vector<8x8x8xbf16>
    %132 = vector.shape_cast %131 : vector<8x8x8xbf16> to vector<64x8xbf16>
    %c8_139 = arith.constant 8 : index
    %c0_140 = arith.constant 0 : index
    %c0_141 = arith.constant 0 : index
    %133 = vector.load %arg5[%c8_139, %c0_140, %c0_141] : memref<9x8x8xbf16, #tpu.memory_space<vmem>>, vector<1x8x8xbf16>
    %134 = vector.shape_cast %133 : vector<1x8x8xbf16> to vector<8x8xbf16>
    %cst_142 = arith.constant dense<0.000000e+00> : vector<64x8xf32>
    %135 = tpu.matmul %132, %134, %cst_142 {dimension_numbers = #tpu.dot_dimension_numbers<[1], [0], [0], [1], [0, 0, 1, 1], [], []>} : vector<64x8xbf16>, vector<8x8xbf16>, vector<64x8xf32> -> vector<64x8xf32>
    %136 = arith.addf %130, %135 : vector<64x8xf32>
    %c0_143 = arith.constant 0 : index
    %c0_144 = arith.constant 0 : index
    %c0_145 = arith.constant 0 : index
    %137 = vector.load %arg2[%c0_143, %c0_144, %c0_145] : memref<1x64x4xbf16, #tpu.memory_space<vmem>>, vector<1x64x4xbf16>
    %138 = vector.shape_cast %137 : vector<1x64x4xbf16> to vector<64x4xbf16>
    %c0_146 = arith.constant 0 : index
    %c0_147 = arith.constant 0 : index
    %139 = vector.load %arg7[%c0_146, %c0_147] : memref<4x8xbf16, #tpu.memory_space<vmem>>, vector<4x8xbf16>
    %cst_148 = arith.constant dense<0.000000e+00> : vector<64x8xf32>
    %140 = tpu.matmul %138, %139, %cst_148 {dimension_numbers = #tpu.dot_dimension_numbers<[1], [0], [0], [1], [0, 0, 1, 1], [], []>} : vector<64x4xbf16>, vector<4x8xbf16>, vector<64x8xf32> -> vector<64x8xf32>
    %141 = arith.addf %136, %140 : vector<64x8xf32>
    %c0_149 = arith.constant 0 : index
    %c0_150 = arith.constant 0 : index
    %142 = vector.load %arg6[%c0_149, %c0_150] : memref<1x8xf32, #tpu.memory_space<vmem>>, vector<1x8xf32>
    %143 = vector.broadcast %142 : vector<1x8xf32> to vector<64x8xf32>
    %144 = arith.addf %141, %143 : vector<64x8xf32>
    %cst_151 = arith.constant 0.000000e+00 : f32
    %145 = vector.broadcast %cst_151 : f32 to vector<64x8xf32>
    %146 = arith.maximumf %144, %145 : vector<64x8xf32>
    %147 = arith.truncf %146 : vector<64x8xf32> to vector<64x8xbf16>
    %c0_152 = arith.constant 0 : index
    %c0_153 = arith.constant 0 : index
    %c0_154 = arith.constant 0 : index
    %148 = vector.load %arg8[%c0_152, %c0_153, %c0_154] : memref<1x64x8xbf16, #tpu.memory_space<vmem>>, vector<1x64x8xbf16>
    %149 = vector.shape_cast %148 : vector<1x64x8xbf16> to vector<64x8xbf16>
    %150 = vector.shape_cast %147 : vector<64x8xbf16> to vector<1x64x8xbf16>
    tpu.vector_store %arg8[%c0_152, %c0_153, %c0_154], %150 {strides = array<i32>} : memref<1x64x8xbf16, #tpu.memory_space<vmem>>, vector<1x64x8xbf16>,
    return
  }
  func.func @transform_0(%arg0: i32) -> (i32, i32, i32, i32) {
    %c0_i32 = arith.constant 0 : i32
    %c0_i32_0 = arith.constant 0 : i32
    %c0_i32_1 = arith.constant 0 : i32
    %c0_i32_2 = arith.constant 0 : i32
    return %arg0, %c0_i32, %c0_i32_0, %c0_i32_1 : i32, i32, i32, i32
  }
  func.func @transform_1(%arg0: i32) -> (i32, i32, i32) {
    %c0_i32 = arith.constant 0 : i32
    %c0_i32_0 = arith.constant 0 : i32
    %c0_i32_1 = arith.constant 0 : i32
    return %arg0, %c0_i32, %c0_i32_0 : i32, i32, i32
  }
  func.func @transform_2(%arg0: i32) -> (i32, i32, i32) {
    %c0_i32 = arith.constant 0 : i32
    %c0_i32_0 = arith.constant 0 : i32
    %c0_i32_1 = arith.constant 0 : i32
    %c0_i32_2 = arith.constant 0 : i32
    return %c0_i32, %c0_i32_0, %c0_i32_1 : i32, i32, i32
  }
  func.func @transform_3(%arg0: i32) -> (i32, i32) {
    %c0_i32 = arith.constant 0 : i32
    %c0_i32_0 = arith.constant 0 : i32
    %c0_i32_1 = arith.constant 0 : i32
    return %c0_i32, %c0_i32_0 : i32, i32
  }
  func.func @transform_4(%arg0: i32) -> (i32, i32, i32) {
    %c0_i32 = arith.constant 0 : i32
    %c0_i32_0 = arith.constant 0 : i32
    %c0_i32_1 = arith.constant 0 : i32
    %c0_i32_2 = arith.constant 0 : i32
    return %c0_i32, %c0_i32_0, %c0_i32_1 : i32, i32, i32
  }
  func.func @transform_5(%arg0: i32) -> (i32, i32) {
    %c0_i32 = arith.constant 0 : i32
    %c0_i32_0 = arith.constant 0 : i32
    %c0_i32_1 = arith.constant 0 : i32
    return %c0_i32, %c0_i32_0 : i32, i32
  }
  func.func @transform_6(%arg0: i32) -> (i32, i32) {
    %c0_i32 = arith.constant 0 : i32
    %c0_i32_0 = arith.constant 0 : i32
    %c0_i32_1 = arith.constant 0 : i32
    return %c0_i32, %c0_i32_0 : i32, i32
  }
  func.func @transform_7(%arg0: i32) -> (i32, i32, i32) {
    %c0_i32 = arith.constant 0 : i32
    %c0_i32_0 = arith.constant 0 : i32
    %c0_i32_1 = arith.constant 0 : i32
    return %arg0, %c0_i32, %c0_i32_0 : i32, i32, i32
  }
}

</mosaic_0001>

<llo_original>
// kernel: basic_block_forward.1
$region0: #{basic_block_forward.1}
  #allocation0 [shape = 'u32[]', space=smem, size = 0x4, offset = 0x4, fixed_abs, tag = 'smem constant byte address 0x4 - core index']
  #allocation1 [shape = 'u32[144,128]{1,0:T(1,128)}', space=vmem, size = 0x12000, scoped, tag = 'internal scratch']
  #allocation2 [shape = 'bf16[10,10,8]{2,1,0:T(8,128)(2,1)}', space=vmem, size = 0xa000, scoped, tag = 'scratch operand']
  %s0 = inlined_call_operand.vmem [shape: bf16[2,36,9,4], index: 0, kind: input, shape index: {}]
  %s1 = inlined_call_operand.vmem [shape: bf16[2,64,4], index: 1, kind: input, shape index: {}]
  %s2 = inlined_call_operand.vmem [shape: bf16[9,4,8], index: 2, kind: input, shape index: {}]
  %s3 = inlined_call_operand.vmem [shape: f32[1,8], index: 3, kind: input, shape index: {}]
  %s4 = inlined_call_operand.vmem [shape: bf16[9,8,8], index: 4, kind: input, shape index: {}]
  %s5 = inlined_call_operand.vmem [shape: f32[1,8], index: 5, kind: input, shape index: {}]
  %s6 = inlined_call_operand.vmem [shape: bf16[4,8], index: 6, kind: input, shape index: {}]
  %s7 = inlined_call_operand.vmem [shape: bf16[2,64,8], index: 7, kind: output, shape index: {}]
  %s8 = sld [smem:[#allocation0]]
  $region61: #{basic_block_forward.1} parent=0
    _
  %s10 = ssub.s32 1, %s8
  %s11 = scalar_select 0, %s10, %s8
  loop: start=0, step=1, limit=4
  $region2: #{basic_block_forward.1} parent=0 // loop_pre_header
    _
  $region3: #{basic_block_forward.1} parent=0 // loop_header
    %s13 = sphi 0, %s17
    %p14 = scmp.ge.s32.totalorder %s13, 4
    %s23 = sphi 0, %s25
    %s26 = sphi 0, %s23
    %s27 = sphi 0, %s26
    %s43 = sphi 0, %s27
    %s49 = sphi 0, %s51
    %s52 = sphi 0, %s49
    %s53 = sphi 0, %s52
    %s69 = sphi 0, %s53
    %s73 = sphi 0, %s73
    %s75 = sphi 0, %s73
    %s76 = sphi 0, %s75
    %s90 = sphi 0, %s76
    %s94 = sphi 0, %s94
    %s96 = sphi 0, %s94
    %s97 = sphi 0, %s96
    %s111 = sphi 0, %s97
    %s115 = sphi 0, %s115
    %s117 = sphi 0, %s115
    %s118 = sphi 0, %s117
    %s132 = sphi 0, %s118
    %s136 = sphi 0, %s136
    %s138 = sphi 0, %s136
    %s139 = sphi 0, %s138
    %s153 = sphi 0, %s139
    %s157 = sphi 0, %s157
    %s159 = sphi 0, %s157
    %s160 = sphi 0, %s159
    %s174 = sphi 0, %s160
    %s180 = sphi 0, %s182
    %s183 = sphi 0, %s180
    %s184 = sphi 0, %s183
    %s200 = sphi 0, %s184
  $region4: #{basic_block_forward.1} parent=0 // loop_header_branch
    %16 = sbr.rel (%p14) target = $region8
  $region5: #{basic_block_forward.1} parent=0 // loop_body
    %s18 = ssub.s32 %s13, 1
    %s19 = ssub.s32 %s13, 2
    %s20 = sadd.s32 %s13, 1
    %s21 = ssub.s32 %s13, %s20
    %p22 = scmp.eq.s32.totalorder %s21, 0
    %s24 = sadd.s32 %s23, 1
    %s25 = scalar_select %p22, %s23, %s24
    %p28 = pneg %p22
    %p29 = scmp.eq.s32.totalorder %s13, 1
    %p30 = por %p28, %p29
    %p31 = scmp.ne.s32.totalorder %s23, %s26
    %p32 = scmp.eq.s32.totalorder %s13, 0
    %p33 = por %p31, %p32
    %p34 = scmp.ne.s32.totalorder %s23, %s26
    %p35 = scmp.eq.s32.totalorder %s18, 1
    %p36 = por %p34, %p35
    %p37 = scmp.ne.s32.totalorder %s26, %s27
    %p38 = scmp.eq.s32.totalorder %s18, 0
    %p39 = por %p37, %p38
    %p40 = scmp.ne.s32.totalorder %s26, %s27
    %p41 = scmp.eq.s32.totalorder %s19, 1
    %p42 = por %p40, %p41
    %p44 = scmp.ne.s32.totalorder %s27, %s43
    %p45 = scmp.eq.s32.totalorder %s19, 0
    %p46 = por %p44, %p45
    %s47 = ssub.s32 %s13, %s20
    %p48 = scmp.eq.s32.totalorder %s47, 0
    %s50 = sadd.s32 %s49, 1
    %s51 = scalar_select %p48, %s49, %s50
    %p54 = pneg %p48
    %p55 = scmp.eq.s32.totalorder %s13, 1
    %p56 = por %p54, %p55
    %p57 = scmp.ne.s32.totalorder %s49, %s52
    %p58 = scmp.eq.s32.totalorder %s13, 0
    %p59 = por %p57, %p58
    %p60 = scmp.ne.s32.totalorder %s49, %s52
    %p61 = scmp.eq.s32.totalorder %s18, 1
    %p62 = por %p60, %p61
    %p63 = scmp.ne.s32.totalorder %s52, %s53
    %p64 = scmp.eq.s32.totalorder %s18, 0
    %p65 = por %p63, %p64
    %p66 = scmp.ne.s32.totalorder %s52, %s53
    %p67 = scmp.eq.s32.totalorder %s19, 1
    %p68 = por %p66, %p67
    %p70 = scmp.ne.s32.totalorder %s53, %s69
    %p71 = scmp.eq.s32.totalorder %s19, 0
    %p72 = por %p70, %p71
    %s74 = sadd.s32 %s73, 1
    %p77 = scmp.eq.s32.totalorder %s13, 1
    %p78 = scmp.ne.s32.totalorder %s73, %s75
    %p79 = scmp.eq.s32.totalorder %s13, 0
    %p80 = por %p78, %p79
    %p81 = scmp.ne.s32.totalorder %s73, %s75
    %p82 = scmp.eq.s32.totalorder %s18, 1
    %p83 = por %p81, %p82
    %p84 = scmp.ne.s32.totalorder %s75, %s76
    %p85 = scmp.eq.s32.totalorder %s18, 0
    %p86 = por %p84, %p85
    %p87 = scmp.ne.s32.totalorder %s75, %s76
    %p88 = scmp.eq.s32.totalorder %s19, 1
    %p89 = por %p87, %p88
    %p91 = scmp.ne.s32.totalorder %s76, %s90
    %p92 = scmp.eq.s32.totalorder %s19, 0
    %p93 = por %p91, %p92
    %s95 = sadd.s32 %s94, 1
    %p98 = scmp.eq.s32.totalorder %s13, 1
    %p99 = scmp.ne.s32.totalorder %s94, %s96
    %p100 = scmp.eq.s32.totalorder %s13, 0
    %p101 = por %p99, %p100
    %p102 = scmp.ne.s32.totalorder %s94, %s96
    %p103 = scmp.eq.s32.totalorder %s18, 1
    %p104 = por %p102, %p103
    %p105 = scmp.ne.s32.totalorder %s96, %s97
    %p106 = scmp.eq.s32.totalorder %s18, 0
    %p107 = por %p105, %p106
    %p108 = scmp.ne.s32.totalorder %s96, %s97
    %p109 = scmp.eq.s32.totalorder %s19, 1
    %p110 = por %p108, %p109
    %p112 = scmp.ne.s32.totalorder %s97, %s111
    %p113 = scmp.eq.s32.totalorder %s19, 0
    %p114 = por %p112, %p113
    %s116 = sadd.s32 %s115, 1
    %p119 = scmp.eq.s32.totalorder %s13, 1
    %p120 = scmp.ne.s32.totalorder %s115, %s117
    %p121 = scmp.eq.s32.totalorder %s13, 0
    %p122 = por %p120, %p121
    %p123 = scmp.ne.s32.totalorder %s115, %s117
    %p124 = scmp.eq.s32.totalorder %s18, 1
    %p125 = por %p123, %p124
    %p126 = scmp.ne.s32.totalorder %s117, %s118
    %p127 = scmp.eq.s32.totalorder %s18, 0
    %p128 = por %p126, %p127
    %p129 = scmp.ne.s32.totalorder %s117, %s118
    %p130 = scmp.eq.s32.totalorder %s19, 1
    %p131 = por %p129, %p130
    %p133 = scmp.ne.s32.totalorder %s118, %s132
    %p134 = scmp.eq.s32.totalorder %s19, 0
    %p135 = por %p133, %p134
    %s137 = sadd.s32 %s136, 1
    %p140 = scmp.eq.s32.totalorder %s13, 1
    %p141 = scmp.ne.s32.totalorder %s136, %s138
    %p142 = scmp.eq.s32.totalorder %s13, 0
    %p143 = por %p141, %p142
    %p144 = scmp.ne.s32.totalorder %s136, %s138
    %p145 = scmp.eq.s32.totalorder %s18, 1
    %p146 = por %p144, %p145
    %p147 = scmp.ne.s32.totalorder %s138, %s139
    %p148 = scmp.eq.s32.totalorder %s18, 0
    %p149 = por %p147, %p148
    %p150 = scmp.ne.s32.totalorder %s138, %s139
    %p151 = scmp.eq.s32.totalorder %s19, 1
    %p152 = por %p150, %p151
    %p154 = scmp.ne.s32.totalorder %s139, %s153
    %p155 = scmp.eq.s32.totalorder %s19, 0
    %p156 = por %p154, %p155
    %s158 = sadd.s32 %s157, 1
    %p161 = scmp.eq.s32.totalorder %s13, 1
    %p162 = scmp.ne.s32.totalorder %s157, %s159
    %p163 = scmp.eq.s32.totalorder %s13, 0
    %p164 = por %p162, %p163
    %p165 = scmp.ne.s32.totalorder %s157, %s159
    %p166 = scmp.eq.s32.totalorder %s18, 1
    %p167 = por %p165, %p166
    %p168 = scmp.ne.s32.totalorder %s159, %s160
    %p169 = scmp.eq.s32.totalorder %s18, 0
    %p170 = por %p168, %p169
    %p171 = scmp.ne.s32.totalorder %s159, %s160
    %p172 = scmp.eq.s32.totalorder %s19, 1
    %p173 = por %p171, %p172
    %p175 = scmp.ne.s32.totalorder %s160, %s174
    %p176 = scmp.eq.s32.totalorder %s19, 0
    %p177 = por %p175, %p176
    %s178 = ssub.s32 %s13, %s20
    %p179 = scmp.eq.s32.totalorder %s178, 0
    %s181 = sadd.s32 %s180, 1
    %s182 = scalar_select %p179, %s180, %s181
    %p185 = pneg %p179
    %p186 = scmp.eq.s32.totalorder %s13, 1
    %p187 = por %p185, %p186
    %p188 = scmp.ne.s32.totalorder %s180, %s183
    %p189 = scmp.eq.s32.totalorder %s13, 0
    %p190 = por %p188, %p189
    %p191 = scmp.ne.s32.totalorder %s180, %s183
    %p192 = scmp.eq.s32.totalorder %s18, 1
    %p193 = por %p191, %p192
    %p194 = scmp.ne.s32.totalorder %s183, %s184
    %p195 = scmp.eq.s32.totalorder %s18, 0
    %p196 = por %p194, %p195
    %p197 = scmp.ne.s32.totalorder %s183, %s184
    %p198 = scmp.eq.s32.totalorder %s19, 1
    %p199 = por %p197, %p198
    %p201 = scmp.ne.s32.totalorder %s184, %s200
    %p202 = scmp.eq.s32.totalorder %s19, 0
    %p203 = por %p201, %p202
    %p204 = scmp.le.s32.totalorder 1, %s13
    %p205 = scmp.lt.s32.totalorder %s13, 3
    %p206 = pnand %p204, %p205
    %p207 = pneg %p206
    // Predicated region
    $region9: #{basic_block_forward.1} parent=5 // pred_check
      _
    $region10: #{basic_block_forward.1} parent=5 // pred_check_branch
      %209 = sbr.rel (%p206) target = $region12
    $region11: #{basic_block_forward.1} parent=5 // pred_region
      %s210 = ssub.s32 %s13, 1
      // Predicated region
      $region13: #{basic_block_forward.1} parent=11 // pred_check
        %p211 = pneg %p86
      $region14: #{basic_block_forward.1} parent=11 // pred_check_branch
        %213 = sbr.rel (%p211) target = $region16
      $region15: #{basic_block_forward.1} parent=11 // pred_region
        _
      $region16: #{basic_block_forward.1} parent=11 // pred_fallthru
        _
      // Predicated region
      $region17: #{basic_block_forward.1} parent=11 // pred_check
        %p214 = pneg %p107
      $region18: #{basic_block_forward.1} parent=11 // pred_check_branch
        %216 = sbr.rel (%p214) target = $region20
      $region19: #{basic_block_forward.1} parent=11 // pred_region
        _
      $region20: #{basic_block_forward.1} parent=11 // pred_fallthru
        _
      // Predicated region
      $region21: #{basic_block_forward.1} parent=11 // pred_check
        %p217 = pneg %p128
      $region22: #{basic_block_forward.1} parent=11 // pred_check_branch
        %219 = sbr.rel (%p217) target = $region24
      $region23: #{basic_block_forward.1} parent=11 // pred_region
        _
      $region24: #{basic_block_forward.1} parent=11 // pred_fallthru
        _
      // Predicated region
      $region25: #{basic_block_forward.1} parent=11 // pred_check
        %p220 = pneg %p149
      $region26: #{basic_block_forward.1} parent=11 // pred_check_branch
        %222 = sbr.rel (%p220) target = $region28
      $region27: #{basic_block_forward.1} parent=11 // pred_region
        _
      $region28: #{basic_block_forward.1} parent=11 // pred_fallthru
        _
      // Predicated region
      $region29: #{basic_block_forward.1} parent=11 // pred_check
        %p223 = pneg %p170
      $region30: #{basic_block_forward.1} parent=11 // pred_check_branch
        %225 = sbr.rel (%p223) target = $region32
      $region31: #{basic_block_forward.1} parent=11 // pred_region
        _
      $region32: #{basic_block_forward.1} parent=11 // pred_fallthru
        _
    $region12: #{basic_block_forward.1} parent=5 // pred_fallthru
      _
    %p226 = scmp.lt.s32.totalorder %s13, 2
    // Predicated region
    $region33: #{basic_block_forward.1} parent=5 // pred_check
      %p227 = pneg %p226
    $region34: #{basic_block_forward.1} parent=5 // pred_check_branch
      %229 = sbr.rel (%p227) target = $region36
    $region35: #{basic_block_forward.1} parent=5 // pred_region
      // Predicated region
      $region37: #{basic_block_forward.1} parent=35 // pred_check
        %p230 = pneg %p33
      $region38: #{basic_block_forward.1} parent=35 // pred_check_branch
        %232 = sbr.rel (%p230) target = $region40
      $region39: #{basic_block_forward.1} parent=35 // pred_region
        %p233 = scmp.lt.s32.totalorder %s13, 1
        %s234 = scalar_select %p233, %s13, 1
        %s235 = smul.addr %s234, 72
        %s236 = smul.addr %s235, 4
        %s237 = scalar_lea.vmem %s0, %s236
      $region40: #{basic_block_forward.1} parent=35 // pred_fallthru
        _
      // Predicated region
      $region41: #{basic_block_forward.1} parent=35 // pred_check
        %p238 = pneg %p59
      $region42: #{basic_block_forward.1} parent=35 // pred_check_branch
        %240 = sbr.rel (%p238) target = $region44
      $region43: #{basic_block_forward.1} parent=35 // pred_region
        %p241 = scmp.lt.s32.totalorder %s13, 1
        %s242 = scalar_select %p241, %s13, 1
        %s243 = smul.addr %s242, 8
        %s244 = smul.addr %s243, 4
        %s245 = scalar_lea.vmem %s1, %s244
      $region44: #{basic_block_forward.1} parent=35 // pred_fallthru
        _
    $region36: #{basic_block_forward.1} parent=5 // pred_fallthru
      _
    %p246 = scmp.le.s32.totalorder 1, %s13
    %p247 = scmp.lt.s32.totalorder %s13, 3
    %p248 = pnand %p246, %p247
    %p249 = pneg %p248
    // Predicated region
    $region45: #{basic_block_forward.1} parent=5 // pred_check
      _
    $region46: #{basic_block_forward.1} parent=5 // pred_check_branch
      %251 = sbr.rel (%p248) target = $region48
    $region47: #{basic_block_forward.1} parent=5 // pred_region
      %s252 = ssub.s32 %s13, 1
      %p253 = scmp.lt.s32.totalorder %s18, 1
      %s254 = scalar_select %p253, %s18, 1
      %s255 = smul.addr %s254, 72
      %s256 = smul.addr %s255, 4
      %s257 = scalar_lea.vmem %s0, %s256
      %p258 = pneg %p39
      %p259 = pneg %p36
      %p260 = scmp.lt.s32.totalorder %s18, 1
      %s261 = scalar_select %p260, %s18, 1
      %s262 = smul.addr %s261, 8
      %s263 = smul.addr %s262, 4
      %s264 = scalar_lea.vmem %s1, %s263
      %p265 = pneg %p65
      %p266 = pneg %p62
      %p267 = pneg %p86
      %p268 = pneg %p83
      %p269 = pneg %p107
      %p270 = pneg %p104
      %p271 = pneg %p128
      %p272 = pneg %p125
      %p273 = pneg %p149
      %p274 = pneg %p146
      %p275 = pneg %p170
      %p276 = pneg %p167
      %p277 = pneg %p196
      %p278 = pneg %p193
      %p279 = scmp.lt.s32.totalorder %s18, 1
      %s280 = scalar_select %p279, %s18, 1
      %s281 = smul.addr %s280, 8
      %s282 = smul.addr %s281, 4
      %s283 = scalar_lea.vmem %s7, %s282
      %p284 = scmp.lt.s32.totalorder %s18, 1
      %s285 = scalar_select %p284, %s18, 1
      %s286 = smul.addr %s285, 72
      %s287 = smul.addr %s286, 4
      %s288 = scalar_lea.vmem %s0, %s287
      %p289 = scmp.lt.s32.totalorder %s18, 1
      %s290 = scalar_select %p289, %s18, 1
      %s291 = smul.addr %s290, 8
      %s292 = smul.addr %s291, 4
      %s293 = scalar_lea.vmem %s1, %s292
      %p294 = scmp.lt.s32.totalorder %s18, 1
      %s295 = scalar_select %p294, %s18, 1
      %s296 = smul.addr %s295, 8
      %s297 = smul.addr %s296, 4
      %s298 = scalar_lea.vmem %s7, %s297
      %vm300 = vcmask 60416
      %301 = vst.msk [vmem:[#allocation2] sm:$0xf] %vm300, 0
      %vm302 = vcmask 57344
      %303 = vst.msk [vmem:[#allocation2 + $0x4] sm:$0x1] %vm302, 0
      %s304 = scalar_lea.vmem [#allocation2], 72
      %305 = vst.msk [vmem:[%s304] sm:$0xf] %vm300, 0
      %306 = vst.msk [vmem:[%s304 + $0x4] sm:$0x1] %vm302, 0
      %vm307 = vcmask 57344
      %vm308 = vsmask.f32 256
      %vm309 = vmand %vm307, %vm308
      %v310 = vld [vmem:[#allocation2] sm:$0x1]
      %v311 = vsel %vm309, 0, %v310
      %312 = vst [vmem:[#allocation2] sm:$0x1] %v311
      %v313 = vld [vmem:[#allocation2 + $0x8] sm:$0x1]
      %v314 = vsel %vm309, 0, %v313
      %315 = vst [vmem:[#allocation2 + $0x8] sm:$0x1] %v314
      %v316 = vld [vmem:[#allocation2 + $0x10] sm:$0x1]
      %v317 = vsel %vm309, 0, %v316
      %318 = vst [vmem:[#allocation2 + $0x10] sm:$0x1] %v317
      %v319 = vld [vmem:[#allocation2 + $0x18] sm:$0x1]
      %v320 = vsel %vm309, 0, %v319
      %321 = vst [vmem:[#allocation2 + $0x18] sm:$0x1] %v320
      %v322 = vld [vmem:[#allocation2 + $0x20] sm:$0x1]
      %v323 = vsel %vm309, 0, %v322
      %324 = vst [vmem:[#allocation2 + $0x20] sm:$0x1] %v323
      %v325 = vld [vmem:[#allocation2 + $0x28] sm:$0x1]
      %v326 = vsel %vm309, 0, %v325
      %327 = vst [vmem:[#allocation2 + $0x28] sm:$0x1] %v326
      %v328 = vld [vmem:[#allocation2 + $0x30] sm:$0x1]
      %v329 = vsel %vm309, 0, %v328
      %330 = vst [vmem:[#allocation2 + $0x30] sm:$0x1] %v329
      %v331 = vld [vmem:[#allocation2 + $0x38] sm:$0x1]
      %v332 = vsel %vm309, 0, %v331
      %333 = vst [vmem:[#allocation2 + $0x38] sm:$0x1] %v332
      %v334 = vld [vmem:[#allocation2 + $0x40] sm:$0x1]
      %v335 = vsel %vm309, 0, %v334
      %336 = vst [vmem:[#allocation2 + $0x40] sm:$0x1] %v335
      %v337 = vld [vmem:[#allocation2 + $0x48] sm:$0x1]
      %v338 = vsel %vm309, 0, %v337
      %339 = vst [vmem:[#allocation2 + $0x48] sm:$0x1] %v338
      %vm340 = vsmask.f32 7938
      %vm341 = vmand %vm307, %vm340
      %v342 = vld [vmem:[#allocation2 + $0x4] sm:$0x1]
      %v343 = vsel %vm341, 0, %v342
      %344 = vst [vmem:[#allocation2 + $0x4] sm:$0x1] %v343
      %v345 = vld [vmem:[#allocation2 + $0xc] sm:$0x1]
      %v346 = vsel %vm341, 0, %v345
      %347 = vst [vmem:[#allocation2 + $0xc] sm:$0x1] %v346
      %v348 = vld [vmem:[#allocation2 + $0x14] sm:$0x1]
      %v349 = vsel %vm341, 0, %v348
      %350 = vst [vmem:[#allocation2 + $0x14] sm:$0x1] %v349
      %v351 = vld [vmem:[#allocation2 + $0x1c] sm:$0x1]
      %v352 = vsel %vm341, 0, %v351
      %353 = vst [vmem:[#allocation2 + $0x1c] sm:$0x1] %v352
      %v354 = vld [vmem:[#allocation2 + $0x24] sm:$0x1]
      %v355 = vsel %vm341, 0, %v354
      %356 = vst [vmem:[#allocation2 + $0x24] sm:$0x1] %v355
      %v357 = vld [vmem:[#allocation2 + $0x2c] sm:$0x1]
      %v358 = vsel %vm341, 0, %v357
      %359 = vst [vmem:[#allocation2 + $0x2c] sm:$0x1] %v358
      %v360 = vld [vmem:[#allocation2 + $0x34] sm:$0x1]
      %v361 = vsel %vm341, 0, %v360
      %362 = vst [vmem:[#allocation2 + $0x34] sm:$0x1] %v361
      %v363 = vld [vmem:[#allocation2 + $0x3c] sm:$0x1]
      %v364 = vsel %vm341, 0, %v363
      %365 = vst [vmem:[#allocation2 + $0x3c] sm:$0x1] %v364
      %v366 = vld [vmem:[#allocation2 + $0x44] sm:$0x1]
      %v367 = vsel %vm341, 0, %v366
      %368 = vst [vmem:[#allocation2 + $0x44] sm:$0x1] %v367
      %v369 = vld [vmem:[#allocation2 + $0x4c] sm:$0x1]
      %v370 = vsel %vm341, 0, %v369
      %371 = vst [vmem:[#allocation2 + $0x4c] sm:$0x1] %v370
      %v372 = vld [vmem:[%s288] sm:$0xf]
      %v373 = vld [vmem:[%s288 + $0x8] sm:$0xf]
      %v374 = vld [vmem:[%s288 + $0x10] sm:$0xf]
      %v375 = vld [vmem:[%s288 + $0x18] sm:$0xf]
      %v376 = vld [vmem:[%s288 + $0x20] sm:$0xf]
      %v377 = vld [vmem:[%s288 + $0x28] sm:$0xf]
      %v378 = vld [vmem:[%s288 + $0x30] sm:$0xf]
      %v379 = vld [vmem:[%s288 + $0x38] sm:$0xf]
      %v380 = vld [vmem:[%s2] sm:$0x3]
      %s381 = scalar_lea.vmem %s288, 72
      %v382 = vld [vmem:[%s381] sm:$0xf]
      %v383 = vld [vmem:[%s381 + $0x8] sm:$0xf]
      %v384 = vld [vmem:[%s381 + $0x10] sm:$0xf]
      %v385 = vld [vmem:[%s381 + $0x18] sm:$0xf]
      %v386 = vld [vmem:[%s381 + $0x20] sm:$0xf]
      %v387 = vld [vmem:[%s381 + $0x28] sm:$0xf]
      %v388 = vld [vmem:[%s381 + $0x30] sm:$0xf]
      %v389 = vld [vmem:[%s381 + $0x38] sm:$0xf]
      %s390 = scalar_lea.vmem %s2, 2
      %v391 = vld [vmem:[%s390] sm:$0x3]
      %v400 = vunpack.c.l.b16 %v382
      %v401 = vunpack.c.l.b16 %v383
      %v402 = vunpack.c.l.b16 %v384
      %v403 = vunpack.c.l.b16 %v385
      %v404 = vunpack.c.l.b16 %v386
      %v405 = vunpack.c.l.b16 %v387
      %v406 = vunpack.c.l.b16 %v388
      %v407 = vunpack.c.l.b16 %v389
      %v408 = vpack.c.b16 %v401, %v400
      %v409 = vpack.c.b16 %v403, %v402
      %v410 = vpack.c.b16 %v405, %v404
      %v411 = vpack.c.b16 %v407, %v406
      %vm412 = vcmask 31744
      %v414 = vsel %vm412, %v408, 0
      %v417 = vsel %vm412, %v409, 0
      %v420 = vsel %vm412, %v410, 0
      %v423 = vsel %vm412, %v411, 0
      %vm425 = vcmask 1041408
      %v427 = vsel %vm425, %v391, 0
      %429 = vmatprep.subr.bf16.mxu0 0
      %430 = vmatpush1.bf16.msra.mxu0 %v427
      %431 = vmatprep.subr.bf16.mxu0 0
      %432 = vmatpush1.bf16.msra.mxu0 0
      %433 = vmatprep.subr.bf16.mxu0 0
      %434 = vmatpush1.bf16.msra.mxu0 0
      %435 = vmatprep.subr.bf16.mxu0 0
      %436 = vmatpush1.bf16.msra.mxu0 0
      %437 = vmatprep.subr.bf16.mxu0 0
      %438 = vmatpush1.bf16.msra.mxu0 0
      %439 = vmatprep.subr.bf16.mxu0 0
      %440 = vmatpush1.bf16.msra.mxu0 0
      %441 = vmatprep.subr.bf16.mxu0 0
      %442 = vmatpush1.bf16.msra.mxu0 0
      %443 = vmatprep.subr.bf16.mxu0 0
      %444 = vmatpush1.bf16.msra.mxu0 0
      %445 = vmatprep.subr.bf16.mxu0 0
      %446 = vmatpush1.bf16.msra.mxu0 0
      %447 = vmatprep.subr.bf16.mxu0 0
      %448 = vmatpush1.bf16.msra.mxu0 0
      %449 = vmatprep.subr.bf16.mxu0 0
      %450 = vmatpush1.bf16.msra.mxu0 0
      %451 = vmatprep.subr.bf16.mxu0 0
      %452 = vmatpush1.bf16.msra.mxu0 0
      %453 = vmatprep.subr.bf16.mxu0 0
      %454 = vmatpush1.bf16.msra.mxu0 0
      %455 = vmatprep.subr.bf16.mxu0 0
      %456 = vmatpush1.bf16.msra.mxu0 0
      %457 = vmatprep.subr.bf16.mxu0 0
      %458 = vmatpush1.bf16.msra.mxu0 0
      %459 = vmatprep.subr.bf16.mxu0 0
      %460 = vmatpush1.bf16.msra.mxu0 0
      %461 = vmatprep.mubr.bf16.mxu0 0
      %462 = vmatmul.mubr.bf16.gmra.mrb[0].mxu0 %v414
      %v463 = vpop.f32.mrb[0].mxu0
      %v464 = vadd.f32 0.0, %v463
      %v465 = vpop.f32.mrb[0].mxu0
      %v466 = vpop.f32.mrb[0].mxu0
      %v467 = vadd.f32 0.0, %v466
      %v468 = vpop.f32.mrb[0].mxu0
      %469 = vmatprep.mubr.bf16.mxu0 0
      %470 = vmatmul.mubr.bf16.gmra.mrb[0].mxu0 %v417
      %v471 = vpop.f32.mrb[0].mxu0
      %v472 = vadd.f32 0.0, %v471
      %v473 = vpop.f32.mrb[0].mxu0
      %v474 = vpop.f32.mrb[0].mxu0
      %v475 = vadd.f32 0.0, %v474
      %v476 = vpop.f32.mrb[0].mxu0
      %477 = vmatprep.mubr.bf16.mxu0 0
      %478 = vmatmul.mubr.bf16.gmra.mrb[0].mxu0 %v420
      %v479 = vpop.f32.mrb[0].mxu0
      %v480 = vadd.f32 0.0, %v479
      %v481 = vpop.f32.mrb[0].mxu0
      %v482 = vpop.f32.mrb[0].mxu0
      %v483 = vadd.f32 0.0, %v482
      %v484 = vpop.f32.mrb[0].mxu0
      %485 = vmatprep.mubr.bf16.mxu0 0
      %486 = vmatmul.mubr.bf16.gmra.mrb[0].mxu0 %v423
      %v487 = vpop.f32.mrb[0].mxu0
      %v488 = vadd.f32 0.0, %v487
      %v489 = vpop.f32.mrb[0].mxu0
      %v490 = vpop.f32.mrb[0].mxu0
      %v491 = vadd.f32 0.0, %v490
      %v492 = vpop.f32.mrb[0].mxu0
      %493 = vdwg.mxu0
      %v502 = vunpack.c.l.b16 %v372
      %v503 = vunpack.c.l.b16 %v373
      %v504 = vunpack.c.l.b16 %v374
      %v505 = vunpack.c.l.b16 %v375
      %v506 = vunpack.c.l.b16 %v376
      %v507 = vunpack.c.l.b16 %v377
      %v508 = vunpack.c.l.b16 %v378
      %v509 = vunpack.c.l.b16 %v379
      %v510 = vpack.c.b16 %v503, %v502
      %v511 = vpack.c.b16 %v505, %v504
      %v512 = vpack.c.b16 %v507, %v506
      %v513 = vpack.c.b16 %v509, %v508
      %v515 = vsel %vm412, %v510, 0
      %v518 = vsel %vm412, %v511, 0
      %v521 = vsel %vm412, %v512, 0
      %v524 = vsel %vm412, %v513, 0
      %v527 = vsel %vm425, %v380, 0
      %529 = vmatprep.subr.bf16.mxu0 0
      %530 = vmatpush1.bf16.msra.mxu0 %v527
      %531 = vmatprep.subr.bf16.mxu0 0
      %532 = vmatpush1.bf16.msra.mxu0 0
      %533 = vmatprep.subr.bf16.mxu0 0
      %534 = vmatpush1.bf16.msra.mxu0 0
      %535 = vmatprep.subr.bf16.mxu0 0
      %536 = vmatpush1.bf16.msra.mxu0 0
      %537 = vmatprep.subr.bf16.mxu0 0
      %538 = vmatpush1.bf16.msra.mxu0 0
      %539 = vmatprep.subr.bf16.mxu0 0
      %540 = vmatpush1.bf16.msra.mxu0 0
      %541 = vmatprep.subr.bf16.mxu0 0
      %542 = vmatpush1.bf16.msra.mxu0 0
      %543 = vmatprep.subr.bf16.mxu0 0
      %544 = vmatpush1.bf16.msra.mxu0 0
      %545 = vmatprep.subr.bf16.mxu0 0
      %546 = vmatpush1.bf16.msra.mxu0 0
      %547 = vmatprep.subr.bf16.mxu0 0
      %548 = vmatpush1.bf16.msra.mxu0 0
      %549 = vmatprep.subr.bf16.mxu0 0
      %550 = vmatpush1.bf16.msra.mxu0 0
      %551 = vmatprep.subr.bf16.mxu0 0
      %552 = vmatpush1.bf16.msra.mxu0 0
      %553 = vmatprep.subr.bf16.mxu0 0
      %554 = vmatpush1.bf16.msra.mxu0 0
      %555 = vmatprep.subr.bf16.mxu0 0
      %556 = vmatpush1.bf16.msra.mxu0 0
      %557 = vmatprep.subr.bf16.mxu0 0
      %558 = vmatpush1.bf16.msra.mxu0 0
      %559 = vmatprep.subr.bf16.mxu0 0
      %560 = vmatpush1.bf16.msra.mxu0 0
      %561 = vmatprep.mubr.bf16.mxu0 0
      %562 = vmatmul.mubr.bf16.gmra.mrb[0].mxu0 %v515
      %v563 = vpop.f32.mrb[0].mxu0
      %v564 = vadd.f32 %v464, %v563
      %v565 = vpop.f32.mrb[0].mxu0
      %v566 = vpop.f32.mrb[0].mxu0
      %v567 = vadd.f32 %v467, %v566
      %v568 = vpop.f32.mrb[0].mxu0
      %569 = vmatprep.mubr.bf16.mxu0 0
      %570 = vmatmul.mubr.bf16.gmra.mrb[0].mxu0 %v518
      %v571 = vpop.f32.mrb[0].mxu0
      %v572 = vadd.f32 %v472, %v571
      %v573 = vpop.f32.mrb[0].mxu0
      %v574 = vpop.f32.mrb[0].mxu0
      %v575 = vadd.f32 %v475, %v574
      %v576 = vpop.f32.mrb[0].mxu0
      %577 = vmatprep.mubr.bf16.mxu0 0
      %578 = vmatmul.mubr.bf16.gmra.mrb[0].mxu0 %v521
      %v579 = vpop.f32.mrb[0].mxu0
      %v580 = vadd.f32 %v480, %v579
      %v581 = vpop.f32.mrb[0].mxu0
      %v582 = vpop.f32.mrb[0].mxu0
      %v583 = vadd.f32 %v483, %v582
      %v584 = vpop.f32.mrb[0].mxu0
      %585 = vmatprep.mubr.bf16.mxu0 0
      %586 = vmatmul.mubr.bf16.gmra.mrb[0].mxu0 %v524
      %v587 = vpop.f32.mrb[0].mxu0
      %v588 = vadd.f32 %v488, %v587
      %v589 = vpop.f32.mrb[0].mxu0
      %v590 = vpop.f32.mrb[0].mxu0
      %v591 = vadd.f32 %v491, %v590
      %v592 = vpop.f32.mrb[0].mxu0
      %593 = vdwg.mxu0
      %v594 = vld [vmem:[%s288] sm:$0xf]
      %v595 = vld [vmem:[%s288 + $0x4] sm:$0x1]
      %v596 = vld [vmem:[%s288 + $0x8] sm:$0xf]
      %v597 = vld [vmem:[%s288 + $0xc] sm:$0x1]
      %v598 = vld [vmem:[%s288 + $0x10] sm:$0xf]
      %v599 = vld [vmem:[%s288 + $0x14] sm:$0x1]
      %v600 = vld [vmem:[%s288 + $0x18] sm:$0xf]
      %v601 = vld [vmem:[%s288 + $0x1c] sm:$0x1]
      %v602 = vld [vmem:[%s288 + $0x20] sm:$0xf]
      %v603 = vld [vmem:[%s288 + $0x24] sm:$0x1]
      %v604 = vld [vmem:[%s288 + $0x28] sm:$0xf]
      %v605 = vld [vmem:[%s288 + $0x2c] sm:$0x1]
      %v606 = vld [vmem:[%s288 + $0x30] sm:$0xf]
      %v607 = vld [vmem:[%s288 + $0x34] sm:$0x1]
      %v608 = vld [vmem:[%s288 + $0x38] sm:$0xf]
      %v609 = vld [vmem:[%s288 + $0x3c] sm:$0x1]
      %vm610 = vsmask.f32 3328
      %vm611 = vsmask.f32 7440
      %vm612 = vmor %vm610, %vm611
      %v614 = vshrl.u32 %v594, 16
      %v616 = vrot.slane %v614, 4
      %v617 = vshll.u32 %v594, 16
      %v619 = vrot.slane %v617, 5
      %v620 = vor.u32 %v616, %v619
      %v621 = vrot.slane %v620, 4
      %v623 = vshll.u32 %v595, 16
      %v625 = vrot.slane %v623, 5
      %v626 = vsel %vm612, %v621, %v625
      %v628 = vshrl.u32 %v596, 16
      %v630 = vrot.slane %v628, 4
      %v631 = vshll.u32 %v596, 16
      %v633 = vrot.slane %v631, 5
      %v634 = vor.u32 %v630, %v633
      %v635 = vrot.slane %v634, 4
      %v637 = vshll.u32 %v597, 16
      %v639 = vrot.slane %v637, 5
      %v640 = vsel %vm612, %v635, %v639
      %v642 = vshrl.u32 %v598, 16
      %v644 = vrot.slane %v642, 4
      %v645 = vshll.u32 %v598, 16
      %v647 = vrot.slane %v645, 5
      %v648 = vor.u32 %v644, %v647
      %v649 = vrot.slane %v648, 4
      %v651 = vshll.u32 %v599, 16
      %v653 = vrot.slane %v651, 5
      %v654 = vsel %vm612, %v649, %v653
      %v656 = vshrl.u32 %v600, 16
      %v658 = vrot.slane %v656, 4
      %v659 = vshll.u32 %v600, 16
      %v661 = vrot.slane %v659, 5
      %v662 = vor.u32 %v658, %v661
      %v663 = vrot.slane %v662, 4
      %v665 = vshll.u32 %v601, 16
      %v667 = vrot.slane %v665, 5
      %v668 = vsel %vm612, %v663, %v667
      %v670 = vshrl.u32 %v602, 16
      %v672 = vrot.slane %v670, 4
      %v673 = vshll.u32 %v602, 16
      %v675 = vrot.slane %v673, 5
      %v676 = vor.u32 %v672, %v675
      %v677 = vrot.slane %v676, 4
      %v679 = vshll.u32 %v603, 16
      %v681 = vrot.slane %v679, 5
      %v682 = vsel %vm612, %v677, %v681
      %v684 = vshrl.u32 %v604, 16
      %v686 = vrot.slane %v684, 4
      %v687 = vshll.u32 %v604, 16
      %v689 = vrot.slane %v687, 5
      %v690 = vor.u32 %v686, %v689
      %v691 = vrot.slane %v690, 4
      %v693 = vshll.u32 %v605, 16
      %v695 = vrot.slane %v693, 5
      %v696 = vsel %vm612, %v691, %v695
      %v698 = vshrl.u32 %v606, 16
      %v700 = vrot.slane %v698, 4
      %v701 = vshll.u32 %v606, 16
      %v703 = vrot.slane %v701, 5
      %v704 = vor.u32 %v700, %v703
      %v705 = vrot.slane %v704, 4
      %v707 = vshll.u32 %v607, 16
      %v709 = vrot.slane %v707, 5
      %v710 = vsel %vm612, %v705, %v709
      %v712 = vshrl.u32 %v608, 16
      %v714 = vrot.slane %v712, 4
      %v715 = vshll.u32 %v608, 16
      %v717 = vrot.slane %v715, 5
      %v718 = vor.u32 %v714, %v717
      %v719 = vrot.slane %v718, 4
      %v721 = vshll.u32 %v609, 16
      %v723 = vrot.slane %v721, 5
      %v724 = vsel %vm612, %v719, %v723
      %s725 = scalar_lea.vmem %s2, 4
      %v726 = vld [vmem:[%s725] sm:$0x3]
      %v727 = vunpack.c.l.b16 %v626
      %v728 = vunpack.c.l.b16 %v640
      %v729 = vunpack.c.l.b16 %v654
      %v730 = vunpack.c.l.b16 %v668
      %v731 = vunpack.c.l.b16 %v682
      %v732 = vunpack.c.l.b16 %v696
      %v733 = vunpack.c.l.b16 %v710
      %v734 = vunpack.c.l.b16 %v724
      %v735 = vpack.c.b16 %v728, %v727
      %v736 = vpack.c.b16 %v730, %v729
      %v737 = vpack.c.b16 %v732, %v731
      %v738 = vpack.c.b16 %v734, %v733
      %v740 = vsel %vm412, %v735, 0
      %v743 = vsel %vm412, %v736, 0
      %v746 = vsel %vm412, %v737, 0
      %v749 = vsel %vm412, %v738, 0
      %v752 = vsel %vm425, %v726, 0
      %754 = vmatprep.subr.bf16.mxu0 0
      %755 = vmatpush1.bf16.msra.mxu0 %v752
      %756 = vmatprep.subr.bf16.mxu0 0
      %757 = vmatpush1.bf16.msra.mxu0 0
      %758 = vmatprep.subr.bf16.mxu0 0
      %759 = vmatpush1.bf16.msra.mxu0 0
      %760 = vmatprep.subr.bf16.mxu0 0
      %761 = vmatpush1.bf16.msra.mxu0 0
      %762 = vmatprep.subr.bf16.mxu0 0
      %763 = vmatpush1.bf16.msra.mxu0 0
      %764 = vmatprep.subr.bf16.mxu0 0
      %765 = vmatpush1.bf16.msra.mxu0 0
      %766 = vmatprep.subr.bf16.mxu0 0
      %767 = vmatpush1.bf16.msra.mxu0 0
      %768 = vmatprep.subr.bf16.mxu0 0
      %769 = vmatpush1.bf16.msra.mxu0 0
      %770 = vmatprep.subr.bf16.mxu0 0
      %771 = vmatpush1.bf16.msra.mxu0 0
      %772 = vmatprep.subr.bf16.mxu0 0
      %773 = vmatpush1.bf16.msra.mxu0 0
      %774 = vmatprep.subr.bf16.mxu0 0
      %775 = vmatpush1.bf16.msra.mxu0 0
      %776 = vmatprep.subr.bf16.mxu0 0
      %777 = vmatpush1.bf16.msra.mxu0 0
      %778 = vmatprep.subr.bf16.mxu0 0
      %779 = vmatpush1.bf16.msra.mxu0 0
      %780 = vmatprep.subr.bf16.mxu0 0
      %781 = vmatpush1.bf16.msra.mxu0 0
      %782 = vmatprep.subr.bf16.mxu0 0
      %783 = vmatpush1.bf16.msra.mxu0 0
      %784 = vmatprep.subr.bf16.mxu0 0
      %785 = vmatpush1.bf16.msra.mxu0 0
      %786 = vmatprep.mubr.bf16.mxu0 0
      %787 = vmatmul.mubr.bf16.gmra.mrb[0].mxu0 %v740
      %v788 = vpop.f32.mrb[0].mxu0
      %v789 = vadd.f32 0.0, %v788
      %v790 = vpop.f32.mrb[0].mxu0
      %v791 = vpop.f32.mrb[0].mxu0
      %v792 = vadd.f32 0.0, %v791
      %v793 = vpop.f32.mrb[0].mxu0
      %794 = vmatprep.mubr.bf16.mxu0 0
      %795 = vmatmul.mubr.bf16.gmra.mrb[0].mxu0 %v743
      %v796 = vpop.f32.mrb[0].mxu0
      %v797 = vadd.f32 0.0, %v796
      %v798 = vpop.f32.mrb[0].mxu0
      %v799 = vpop.f32.mrb[0].mxu0
      %v800 = vadd.f32 0.0, %v799
      %v801 = vpop.f32.mrb[0].mxu0
      %802 = vmatprep.mubr.bf16.mxu0 0
      %803 = vmatmul.mubr.bf16.gmra.mrb[0].mxu0 %v746
      %v804 = vpop.f32.mrb[0].mxu0
      %v805 = vadd.f32 0.0, %v804
      %v806 = vpop.f32.mrb[0].mxu0
      %v807 = vpop.f32.mrb[0].mxu0
      %v808 = vadd.f32 0.0, %v807
      %v809 = vpop.f32.mrb[0].mxu0
      %810 = vmatprep.mubr.bf16.mxu0 0
      %811 = vmatmul.mubr.bf16.gmra.mrb[0].mxu0 %v749
      %v812 = vpop.f32.mrb[0].mxu0
      %v813 = vadd.f32 0.0, %v812
      %v814 = vpop.f32.mrb[0].mxu0
      %v815 = vpop.f32.mrb[0].mxu0
      %v816 = vadd.f32 0.0, %v815
      %v817 = vpop.f32.mrb[0].mxu0
      %818 = vdwg.mxu0
      %v819 = vadd.f32 %v564, %v789
      %v820 = vadd.f32 %v567, %v792
      %v821 = vadd.f32 %v572, %v797
      %v822 = vadd.f32 %v575, %v800
      %v823 = vadd.f32 %v580, %v805
      %v824 = vadd.f32 %v583, %v808
      %v825 = vadd.f32 %v588, %v813
      %v826 = vadd.f32 %v591, %v816
      %s827 = scalar_lea.vmem %s288, 144
      %v828 = vld [vmem:[%s827] sm:$0xf]
      %v829 = vld [vmem:[%s827 + $0x8] sm:$0xf]
      %v830 = vld [vmem:[%s827 + $0x10] sm:$0xf]
      %v831 = vld [vmem:[%s827 + $0x18] sm:$0xf]
      %v832 = vld [vmem:[%s827 + $0x20] sm:$0xf]
      %v833 = vld [vmem:[%s827 + $0x28] sm:$0xf]
      %v834 = vld [vmem:[%s827 + $0x30] sm:$0xf]
      %v835 = vld [vmem:[%s827 + $0x38] sm:$0xf]
      %s836 = scalar_lea.vmem %s2, 6
      %v837 = vld [vmem:[%s836] sm:$0x3]
      %v846 = vunpack.c.l.b16 %v828
      %v847 = vunpack.c.l.b16 %v829
      %v848 = vunpack.c.l.b16 %v830
      %v849 = vunpack.c.l.b16 %v831
      %v850 = vunpack.c.l.b16 %v832
      %v851 = vunpack.c.l.b16 %v833
      %v852 = vunpack.c.l.b16 %v834
      %v853 = vunpack.c.l.b16 %v835
      %v854 = vpack.c.b16 %v847, %v846
      %v855 = vpack.c.b16 %v849, %v848
      %v856 = vpack.c.b16 %v851, %v850
      %v857 = vpack.c.b16 %v853, %v852
      %v859 = vsel %vm412, %v854, 0
      %v862 = vsel %vm412, %v855, 0
      %v865 = vsel %vm412, %v856, 0
      %v868 = vsel %vm412, %v857, 0
      %v871 = vsel %vm425, %v837, 0
      %873 = vmatprep.subr.bf16.mxu0 0
      %874 = vmatpush1.bf16.msra.mxu0 %v871
      %875 = vmatprep.subr.bf16.mxu0 0
      %876 = vmatpush1.bf16.msra.mxu0 0
      %877 = vmatprep.subr.bf16.mxu0 0
      %878 = vmatpush1.bf16.msra.mxu0 0
      %879 = vmatprep.subr.bf16.mxu0 0
      %880 = vmatpush1.bf16.msra.mxu0 0
      %881 = vmatprep.subr.bf16.mxu0 0
      %882 = vmatpush1.bf16.msra.mxu0 0
      %883 = vmatprep.subr.bf16.mxu0 0
      %884 = vmatpush1.bf16.msra.mxu0 0
      %885 = vmatprep.subr.bf16.mxu0 0
      %886 = vmatpush1.bf16.msra.mxu0 0
      %887 = vmatprep.subr.bf16.mxu0 0
      %888 = vmatpush1.bf16.msra.mxu0 0
      %889 = vmatprep.subr.bf16.mxu0 0
      %890 = vmatpush1.bf16.msra.mxu0 0
      %891 = vmatprep.subr.bf16.mxu0 0
      %892 = vmatpush1.bf16.msra.mxu0 0
      %893 = vmatprep.subr.bf16.mxu0 0
      %894 = vmatpush1.bf16.msra.mxu0 0
      %895 = vmatprep.subr.bf16.mxu0 0
      %896 = vmatpush1.bf16.msra.mxu0 0
      %897 = vmatprep.subr.bf16.mxu0 0
      %898 = vmatpush1.bf16.msra.mxu0 0
      %899 = vmatprep.subr.bf16.mxu0 0
      %900 = vmatpush1.bf16.msra.mxu0 0
      %901 = vmatprep.subr.bf16.mxu0 0
      %902 = vmatpush1.bf16.msra.mxu0 0
      %903 = vmatprep.subr.bf16.mxu0 0
      %904 = vmatpush1.bf16.msra.mxu0 0
      %905 = vmatprep.mubr.bf16.mxu0 0
      %906 = vmatmul.mubr.bf16.gmra.mrb[0].mxu0 %v859
      %v907 = vpop.f32.mrb[0].mxu0
      %v908 = vadd.f32 0.0, %v907
      %v909 = vpop.f32.mrb[0].mxu0
      %v910 = vpop.f32.mrb[0].mxu0
      %v911 = vadd.f32 0.0, %v910
      %v912 = vpop.f32.mrb[0].mxu0
      %913 = vmatprep.mubr.bf16.mxu0 0
      %914 = vmatmul.mubr.bf16.gmra.mrb[0].mxu0 %v862
      %v915 = vpop.f32.mrb[0].mxu0
      %v916 = vadd.f32 0.0, %v915
      %v917 = vpop.f32.mrb[0].mxu0
      %v918 = vpop.f32.mrb[0].mxu0
      %v919 = vadd.f32 0.0, %v918
      %v920 = vpop.f32.mrb[0].mxu0
      %921 = vmatprep.mubr.bf16.mxu0 0
      %922 = vmatmul.mubr.bf16.gmra.mrb[0].mxu0 %v865
      %v923 = vpop.f32.mrb[0].mxu0
      %v924 = vadd.f32 0.0, %v923
      %v925 = vpop.f32.mrb[0].mxu0
      %v926 = vpop.f32.mrb[0].mxu0
      %v927 = vadd.f32 0.0, %v926
      %v928 = vpop.f32.mrb[0].mxu0
      %929 = vmatprep.mubr.bf16.mxu0 0
      %930 = vmatmul.mubr.bf16.gmra.mrb[0].mxu0 %v868
      %v931 = vpop.f32.mrb[0].mxu0
      %v932 = vadd.f32 0.0, %v931
      %v933 = vpop.f32.mrb[0].mxu0
      %v934 = vpop.f32.mrb[0].mxu0
      %v935 = vadd.f32 0.0, %v934
      %v936 = vpop.f32.mrb[0].mxu0
      %937 = vdwg.mxu0
      %v938 = vadd.f32 %v819, %v908
      %v939 = vadd.f32 %v820, %v911
      %v940 = vadd.f32 %v821, %v916
      %v941 = vadd.f32 %v822, %v919
      %v942 = vadd.f32 %v823, %v924
      %v943 = vadd.f32 %v824, %v927
      %v944 = vadd.f32 %v825, %v932
      %v945 = vadd.f32 %v826, %v935
      %s946 = scalar_lea.vmem %s288, 216
      %v947 = vld [vmem:[%s946] sm:$0xf]
      %v948 = vld [vmem:[%s946 + $0x8] sm:$0xf]
      %v949 = vld [vmem:[%s946 + $0x10] sm:$0xf]
      %v950 = vld [vmem:[%s946 + $0x18] sm:$0xf]
      %v951 = vld [vmem:[%s946 + $0x20] sm:$0xf]
      %v952 = vld [vmem:[%s946 + $0x28] sm:$0xf]
      %v953 = vld [vmem:[%s946 + $0x30] sm:$0xf]
      %v954 = vld [vmem:[%s946 + $0x38] sm:$0xf]
      %s955 = scalar_lea.vmem %s2, 8
      %v956 = vld [vmem:[%s955] sm:$0x3]
      %v965 = vunpack.c.l.b16 %v947
      %v966 = vunpack.c.l.b16 %v948
      %v967 = vunpack.c.l.b16 %v949
      %v968 = vunpack.c.l.b16 %v950
      %v969 = vunpack.c.l.b16 %v951
      %v970 = vunpack.c.l.b16 %v952
      %v971 = vunpack.c.l.b16 %v953
      %v972 = vunpack.c.l.b16 %v954
      %v973 = vpack.c.b16 %v966, %v965
      %v974 = vpack.c.b16 %v968, %v967
      %v975 = vpack.c.b16 %v970, %v969
      %v976 = vpack.c.b16 %v972, %v971
      %v978 = vsel %vm412, %v973, 0
      %v981 = vsel %vm412, %v974, 0
      %v984 = vsel %vm412, %v975, 0
      %v987 = vsel %vm412, %v976, 0
      %v990 = vsel %vm425, %v956, 0
      %992 = vmatprep.subr.bf16.mxu0 0
      %993 = vmatpush1.bf16.msra.mxu0 %v990
      %994 = vmatprep.subr.bf16.mxu0 0
      %995 = vmatpush1.bf16.msra.mxu0 0
      %996 = vmatprep.subr.bf16.mxu0 0
      %997 = vmatpush1.bf16.msra.mxu0 0
      %998 = vmatprep.subr.bf16.mxu0 0
      %999 = vmatpush1.bf16.msra.mxu0 0
      %1000 = vmatprep.subr.bf16.mxu0 0
      %1001 = vmatpush1.bf16.msra.mxu0 0
      %1002 = vmatprep.subr.bf16.mxu0 0
      %1003 = vmatpush1.bf16.msra.mxu0 0
      %1004 = vmatprep.subr.bf16.mxu0 0
      %1005 = vmatpush1.bf16.msra.mxu0 0
      %1006 = vmatprep.subr.bf16.mxu0 0
      %1007 = vmatpush1.bf16.msra.mxu0 0
      %1008 = vmatprep.subr.bf16.mxu0 0
      %1009 = vmatpush1.bf16.msra.mxu0 0
      %1010 = vmatprep.subr.bf16.mxu0 0
      %1011 = vmatpush1.bf16.msra.mxu0 0
      %1012 = vmatprep.subr.bf16.mxu0 0
      %1013 = vmatpush1.bf16.msra.mxu0 0
      %1014 = vmatprep.subr.bf16.mxu0 0
      %1015 = vmatpush1.bf16.msra.mxu0 0
      %1016 = vmatprep.subr.bf16.mxu0 0
      %1017 = vmatpush1.bf16.msra.mxu0 0
      %1018 = vmatprep.subr.bf16.mxu0 0
      %1019 = vmatpush1.bf16.msra.mxu0 0
      %1020 = vmatprep.subr.bf16.mxu0 0
      %1021 = vmatpush1.bf16.msra.mxu0 0
      %1022 = vmatprep.subr.bf16.mxu0 0
      %1023 = vmatpush1.bf16.msra.mxu0 0
      %1024 = vmatprep.mubr.bf16.mxu0 0
      %1025 = vmatmul.mubr.bf16.gmra.mrb[0].mxu0 %v978
      %v1026 = vpop.f32.mrb[0].mxu0
      %v1027 = vadd.f32 0.0, %v1026
      %v1028 = vpop.f32.mrb[0].mxu0
      %v1029 = vpop.f32.mrb[0].mxu0
      %v1030 = vadd.f32 0.0, %v1029
      %v1031 = vpop.f32.mrb[0].mxu0
      %1032 = vmatprep.mubr.bf16.mxu0 0
      %1033 = vmatmul.mubr.bf16.gmra.mrb[0].mxu0 %v981
      %v1034 = vpop.f32.mrb[0].mxu0
      %v1035 = vadd.f32 0.0, %v1034
      %v1036 = vpop.f32.mrb[0].mxu0
      %v1037 = vpop.f32.mrb[0].mxu0
      %v1038 = vadd.f32 0.0, %v1037
      %v1039 = vpop.f32.mrb[0].mxu0
      %1040 = vmatprep.mubr.bf16.mxu0 0
      %1041 = vmatmul.mubr.bf16.gmra.mrb[0].mxu0 %v984
      %v1042 = vpop.f32.mrb[0].mxu0
      %v1043 = vadd.f32 0.0, %v1042
      %v1044 = vpop.f32.mrb[0].mxu0
      %v1045 = vpop.f32.mrb[0].mxu0
      %v1046 = vadd.f32 0.0, %v1045
      %v1047 = vpop.f32.mrb[0].mxu0
      %1048 = vmatprep.mubr.bf16.mxu0 0
      %1049 = vmatmul.mubr.bf16.gmra.mrb[0].mxu0 %v987
      %v1050 = vpop.f32.mrb[0].mxu0
      %v1051 = vadd.f32 0.0, %v1050
      %v1052 = vpop.f32.mrb[0].mxu0
      %v1053 = vpop.f32.mrb[0].mxu0
      %v1054 = vadd.f32 0.0, %v1053
      %v1055 = vpop.f32.mrb[0].mxu0
      %1056 = vdwg.mxu0
      %v1057 = vadd.f32 %v938, %v1027
      %v1058 = vadd.f32 %v939, %v1030
      %v1059 = vadd.f32 %v940, %v1035
      %v1060 = vadd.f32 %v941, %v1038
      %v1061 = vadd.f32 %v942, %v1043
      %v1062 = vadd.f32 %v943, %v1046
      %v1063 = vadd.f32 %v944, %v1051
      %v1064 = vadd.f32 %v945, %v1054
      %v1065 = vld [vmem:[%s827] sm:$0xf]
      %v1066 = vld [vmem:[%s827 + $0x4] sm:$0x1]
      %v1067 = vld [vmem:[%s827 + $0x8] sm:$0xf]
      %v1068 = vld [vmem:[%s827 + $0xc] sm:$0x1]
      %v1069 = vld [vmem:[%s827 + $0x10] sm:$0xf]
      %v1070 = vld [vmem:[%s827 + $0x14] sm:$0x1]
      %v1071 = vld [vmem:[%s827 + $0x18] sm:$0xf]
      %v1072 = vld [vmem:[%s827 + $0x1c] sm:$0x1]
      %v1073 = vld [vmem:[%s827 + $0x20] sm:$0xf]
      %v1074 = vld [vmem:[%s827 + $0x24] sm:$0x1]
      %v1075 = vld [vmem:[%s827 + $0x28] sm:$0xf]
      %v1076 = vld [vmem:[%s827 + $0x2c] sm:$0x1]
      %v1077 = vld [vmem:[%s827 + $0x30] sm:$0xf]
      %v1078 = vld [vmem:[%s827 + $0x34] sm:$0x1]
      %v1079 = vld [vmem:[%s827 + $0x38] sm:$0xf]
      %v1080 = vld [vmem:[%s827 + $0x3c] sm:$0x1]
      %v1082 = vshrl.u32 %v1065, 16
      %v1084 = vrot.slane %v1082, 4
      %v1085 = vshll.u32 %v1065, 16
      %v1087 = vrot.slane %v1085, 5
      %v1088 = vor.u32 %v1084, %v1087
      %v1089 = vrot.slane %v1088, 4
      %v1091 = vshll.u32 %v1066, 16
      %v1093 = vrot.slane %v1091, 5
      %v1094 = vsel %vm612, %v1089, %v1093
      %v1096 = vshrl.u32 %v1067, 16
      %v1098 = vrot.slane %v1096, 4
      %v1099 = vshll.u32 %v1067, 16
      %v1101 = vrot.slane %v1099, 5
      %v1102 = vor.u32 %v1098, %v1101
      %v1103 = vrot.slane %v1102, 4
      %v1105 = vshll.u32 %v1068, 16
      %v1107 = vrot.slane %v1105, 5
      %v1108 = vsel %vm612, %v1103, %v1107
      %v1110 = vshrl.u32 %v1069, 16
      %v1112 = vrot.slane %v1110, 4
      %v1113 = vshll.u32 %v1069, 16
      %v1115 = vrot.slane %v1113, 5
      %v1116 = vor.u32 %v1112, %v1115
      %v1117 = vrot.slane %v1116, 4
      %v1119 = vshll.u32 %v1070, 16
      %v1121 = vrot.slane %v1119, 5
      %v1122 = vsel %vm612, %v1117, %v1121
      %v1124 = vshrl.u32 %v1071, 16
      %v1126 = vrot.slane %v1124, 4
      %v1127 = vshll.u32 %v1071, 16
      %v1129 = vrot.slane %v1127, 5
      %v1130 = vor.u32 %v1126, %v1129
      %v1131 = vrot.slane %v1130, 4
      %v1133 = vshll.u32 %v1072, 16
      %v1135 = vrot.slane %v1133, 5
      %v1136 = vsel %vm612, %v1131, %v1135
      %v1138 = vshrl.u32 %v1073, 16
      %v1140 = vrot.slane %v1138, 4
      %v1141 = vshll.u32 %v1073, 16
      %v1143 = vrot.slane %v1141, 5
      %v1144 = vor.u32 %v1140, %v1143
      %v1145 = vrot.slane %v1144, 4
      %v1147 = vshll.u32 %v1074, 16
      %v1149 = vrot.slane %v1147, 5
      %v1150 = vsel %vm612, %v1145, %v1149
      %v1152 = vshrl.u32 %v1075, 16
      %v1154 = vrot.slane %v1152, 4
      %v1155 = vshll.u32 %v1075, 16
      %v1157 = vrot.slane %v1155, 5
      %v1158 = vor.u32 %v1154, %v1157
      %v1159 = vrot.slane %v1158, 4
      %v1161 = vshll.u32 %v1076, 16
      %v1163 = vrot.slane %v1161, 5
      %v1164 = vsel %vm612, %v1159, %v1163
      %v1166 = vshrl.u32 %v1077, 16
      %v1168 = vrot.slane %v1166, 4
      %v1169 = vshll.u32 %v1077, 16
      %v1171 = vrot.slane %v1169, 5
      %v1172 = vor.u32 %v1168, %v1171
      %v1173 = vrot.slane %v1172, 4
      %v1175 = vshll.u32 %v1078, 16
      %v1177 = vrot.slane %v1175, 5
      %v1178 = vsel %vm612, %v1173, %v1177
      %v1180 = vshrl.u32 %v1079, 16
      %v1182 = vrot.slane %v1180, 4
      %v1183 = vshll.u32 %v1079, 16
      %v1185 = vrot.slane %v1183, 5
      %v1186 = vor.u32 %v1182, %v1185
      %v1187 = vrot.slane %v1186, 4
      %v1189 = vshll.u32 %v1080, 16
      %v1191 = vrot.slane %v1189, 5
      %v1192 = vsel %vm612, %v1187, %v1191
      %s1193 = scalar_lea.vmem %s2, 10
      %v1194 = vld [vmem:[%s1193] sm:$0x3]
      %v1195 = vunpack.c.l.b16 %v1094
      %v1196 = vunpack.c.l.b16 %v1108
      %v1197 = vunpack.c.l.b16 %v1122
      %v1198 = vunpack.c.l.b16 %v1136
      %v1199 = vunpack.c.l.b16 %v1150
      %v1200 = vunpack.c.l.b16 %v1164
      %v1201 = vunpack.c.l.b16 %v1178
      %v1202 = vunpack.c.l.b16 %v1192
      %v1203 = vpack.c.b16 %v1196, %v1195
      %v1204 = vpack.c.b16 %v1198, %v1197
      %v1205 = vpack.c.b16 %v1200, %v1199
      %v1206 = vpack.c.b16 %v1202, %v1201
      %v1208 = vsel %vm412, %v1203, 0
      %v1211 = vsel %vm412, %v1204, 0
      %v1214 = vsel %vm412, %v1205, 0
      %v1217 = vsel %vm412, %v1206, 0
      %v1220 = vsel %vm425, %v1194, 0
      %1222 = vmatprep.subr.bf16.mxu0 0
      %1223 = vmatpush1.bf16.msra.mxu0 %v1220
      %1224 = vmatprep.subr.bf16.mxu0 0
      %1225 = vmatpush1.bf16.msra.mxu0 0
      %1226 = vmatprep.subr.bf16.mxu0 0
      %1227 = vmatpush1.bf16.msra.mxu0 0
      %1228 = vmatprep.subr.bf16.mxu0 0
      %1229 = vmatpush1.bf16.msra.mxu0 0
      %1230 = vmatprep.subr.bf16.mxu0 0
      %1231 = vmatpush1.bf16.msra.mxu0 0
      %1232 = vmatprep.subr.bf16.mxu0 0
      %1233 = vmatpush1.bf16.msra.mxu0 0
      %1234 = vmatprep.subr.bf16.mxu0 0
      %1235 = vmatpush1.bf16.msra.mxu0 0
      %1236 = vmatprep.subr.bf16.mxu0 0
      %1237 = vmatpush1.bf16.msra.mxu0 0
      %1238 = vmatprep.subr.bf16.mxu0 0
      %1239 = vmatpush1.bf16.msra.mxu0 0
      %1240 = vmatprep.subr.bf16.mxu0 0
      %1241 = vmatpush1.bf16.msra.mxu0 0
      %1242 = vmatprep.subr.bf16.mxu0 0
      %1243 = vmatpush1.bf16.msra.mxu0 0
      %1244 = vmatprep.subr.bf16.mxu0 0
      %1245 = vmatpush1.bf16.msra.mxu0 0
      %1246 = vmatprep.subr.bf16.mxu0 0
      %1247 = vmatpush1.bf16.msra.mxu0 0
      %1248 = vmatprep.subr.bf16.mxu0 0
      %1249 = vmatpush1.bf16.msra.mxu0 0
      %1250 = vmatprep.subr.bf16.mxu0 0
      %1251 = vmatpush1.bf16.msra.mxu0 0
      %1252 = vmatprep.subr.bf16.mxu0 0
      %1253 = vmatpush1.bf16.msra.mxu0 0
      %1254 = vmatprep.mubr.bf16.mxu0 0
      %1255 = vmatmul.mubr.bf16.gmra.mrb[0].mxu0 %v1208
      %v1256 = vpop.f32.mrb[0].mxu0
      %v1257 = vadd.f32 0.0, %v1256
      %v1258 = vpop.f32.mrb[0].mxu0
      %v1259 = vpop.f32.mrb[0].mxu0
      %v1260 = vadd.f32 0.0, %v1259
      %v1261 = vpop.f32.mrb[0].mxu0
      %1262 = vmatprep.mubr.bf16.mxu0 0
      %1263 = vmatmul.mubr.bf16.gmra.mrb[0].mxu0 %v1211
      %v1264 = vpop.f32.mrb[0].mxu0
      %v1265 = vadd.f32 0.0, %v1264
      %v1266 = vpop.f32.mrb[0].mxu0
      %v1267 = vpop.f32.mrb[0].mxu0
      %v1268 = vadd.f32 0.0, %v1267
      %v1269 = vpop.f32.mrb[0].mxu0
      %1270 = vmatprep.mubr.bf16.mxu0 0
      %1271 = vmatmul.mubr.bf16.gmra.mrb[0].mxu0 %v1214
      %v1272 = vpop.f32.mrb[0].mxu0
      %v1273 = vadd.f32 0.0, %v1272
      %v1274 = vpop.f32.mrb[0].mxu0
      %v1275 = vpop.f32.mrb[0].mxu0
      %v1276 = vadd.f32 0.0, %v1275
      %v1277 = vpop.f32.mrb[0].mxu0
      %1278 = vmatprep.mubr.bf16.mxu0 0
      %1279 = vmatmul.mubr.bf16.gmra.mrb[0].mxu0 %v1217
      %v1280 = vpop.f32.mrb[0].mxu0
      %v1281 = vadd.f32 0.0, %v1280
      %v1282 = vpop.f32.mrb[0].mxu0
      %v1283 = vpop.f32.mrb[0].mxu0
      %v1284 = vadd.f32 0.0, %v1283
      %v1285 = vpop.f32.mrb[0].mxu0
      %1286 = vdwg.mxu0
      %v1287 = vadd.f32 %v1057, %v1257
      %v1288 = vadd.f32 %v1058, %v1260
      %v1289 = vadd.f32 %v1059, %v1265
      %v1290 = vadd.f32 %v1060, %v1268
      %v1291 = vadd.f32 %v1061, %v1273
      %v1292 = vadd.f32 %v1062, %v1276
      %v1293 = vadd.f32 %v1063, %v1281
      %v1294 = vadd.f32 %v1064, %v1284
      %s1295 = scalar_lea.vmem %s288, 8
      %v1296 = vld [vmem:[%s1295] sm:$0xf]
      %v1297 = vld [vmem:[%s1295 + $0x8] sm:$0xf]
      %v1298 = vld [vmem:[%s1295 + $0x10] sm:$0xf]
      %v1299 = vld [vmem:[%s1295 + $0x18] sm:$0xf]
      %v1300 = vld [vmem:[%s1295 + $0x20] sm:$0xf]
      %v1301 = vld [vmem:[%s1295 + $0x28] sm:$0xf]
      %v1302 = vld [vmem:[%s1295 + $0x30] sm:$0xf]
      %v1303 = vld [vmem:[%s1295 + $0x38] sm:$0xf]
      %s1304 = scalar_lea.vmem %s2, 12
      %v1305 = vld [vmem:[%s1304] sm:$0x3]
      %v1314 = vunpack.c.l.b16 %v1296
      %v1315 = vunpack.c.l.b16 %v1297
      %v1316 = vunpack.c.l.b16 %v1298
      %v1317 = vunpack.c.l.b16 %v1299
      %v1318 = vunpack.c.l.b16 %v1300
      %v1319 = vunpack.c.l.b16 %v1301
      %v1320 = vunpack.c.l.b16 %v1302
      %v1321 = vunpack.c.l.b16 %v1303
      %v1322 = vpack.c.b16 %v1315, %v1314
      %v1323 = vpack.c.b16 %v1317, %v1316
      %v1324 = vpack.c.b16 %v1319, %v1318
      %v1325 = vpack.c.b16 %v1321, %v1320
      %v1327 = vsel %vm412, %v1322, 0
      %v1330 = vsel %vm412, %v1323, 0
      %v1333 = vsel %vm412, %v1324, 0
      %v1336 = vsel %vm412, %v1325, 0
      %v1339 = vsel %vm425, %v1305, 0
      %1341 = vmatprep.subr.bf16.mxu0 0
      %1342 = vmatpush1.bf16.msra.mxu0 %v1339
      %1343 = vmatprep.subr.bf16.mxu0 0
      %1344 = vmatpush1.bf16.msra.mxu0 0
      %1345 = vmatprep.subr.bf16.mxu0 0
      %1346 = vmatpush1.bf16.msra.mxu0 0
      %1347 = vmatprep.subr.bf16.mxu0 0
      %1348 = vmatpush1.bf16.msra.mxu0 0
      %1349 = vmatprep.subr.bf16.mxu0 0
      %1350 = vmatpush1.bf16.msra.mxu0 0
      %1351 = vmatprep.subr.bf16.mxu0 0
      %1352 = vmatpush1.bf16.msra.mxu0 0
      %1353 = vmatprep.subr.bf16.mxu0 0
      %1354 = vmatpush1.bf16.msra.mxu0 0
      %1355 = vmatprep.subr.bf16.mxu0 0
      %1356 = vmatpush1.bf16.msra.mxu0 0
      %1357 = vmatprep.subr.bf16.mxu0 0
      %1358 = vmatpush1.bf16.msra.mxu0 0
      %1359 = vmatprep.subr.bf16.mxu0 0
      %1360 = vmatpush1.bf16.msra.mxu0 0
      %1361 = vmatprep.subr.bf16.mxu0 0
      %1362 = vmatpush1.bf16.msra.mxu0 0
      %1363 = vmatprep.subr.bf16.mxu0 0
      %1364 = vmatpush1.bf16.msra.mxu0 0
      %1365 = vmatprep.subr.bf16.mxu0 0
      %1366 = vmatpush1.bf16.msra.mxu0 0
      %1367 = vmatprep.subr.bf16.mxu0 0
      %1368 = vmatpush1.bf16.msra.mxu0 0
      %1369 = vmatprep.subr.bf16.mxu0 0
      %1370 = vmatpush1.bf16.msra.mxu0 0
      %1371 = vmatprep.subr.bf16.mxu0 0
      %1372 = vmatpush1.bf16.msra.mxu0 0
      %1373 = vmatprep.mubr.bf16.mxu0 0
      %1374 = vmatmul.mubr.bf16.gmra.mrb[0].mxu0 %v1327
      %v1375 = vpop.f32.mrb[0].mxu0
      %v1376 = vadd.f32 0.0, %v1375
      %v1377 = vpop.f32.mrb[0].mxu0
      %v1378 = vpop.f32.mrb[0].mxu0
      %v1379 = vadd.f32 0.0, %v1378
      %v1380 = vpop.f32.mrb[0].mxu0
      %1381 = vmatprep.mubr.bf16.mxu0 0
      %1382 = vmatmul.mubr.bf16.gmra.mrb[0].mxu0 %v1330
      %v1383 = vpop.f32.mrb[0].mxu0
      %v1384 = vadd.f32 0.0, %v1383
      %v1385 = vpop.f32.mrb[0].mxu0
      %v1386 = vpop.f32.mrb[0].mxu0
      %v1387 = vadd.f32 0.0, %v1386
      %v1388 = vpop.f32.mrb[0].mxu0
      %1389 = vmatprep.mubr.bf16.mxu0 0
      %1390 = vmatmul.mubr.bf16.gmra.mrb[0].mxu0 %v1333
      %v1391 = vpop.f32.mrb[0].mxu0
      %v1392 = vadd.f32 0.0, %v1391
      %v1393 = vpop.f32.mrb[0].mxu0
      %v1394 = vpop.f32.mrb[0].mxu0
      %v1395 = vadd.f32 0.0, %v1394
      %v1396 = vpop.f32.mrb[0].mxu0
      %1397 = vmatprep.mubr.bf16.mxu0 0
      %1398 = vmatmul.mubr.bf16.gmra.mrb[0].mxu0 %v1336
      %v1399 = vpop.f32.mrb[0].mxu0
      %v1400 = vadd.f32 0.0, %v1399
      %v1401 = vpop.f32.mrb[0].mxu0
      %v1402 = vpop.f32.mrb[0].mxu0
      %v1403 = vadd.f32 0.0, %v1402
      %v1404 = vpop.f32.mrb[0].mxu0
      %1405 = vdwg.mxu0
      %v1406 = vadd.f32 %v1287, %v1376
      %v1407 = vadd.f32 %v1288, %v1379
      %v1408 = vadd.f32 %v1289, %v1384
      %v1409 = vadd.f32 %v1290, %v1387
      %v1410 = vadd.f32 %v1291, %v1392
      %v1411 = vadd.f32 %v1292, %v1395
      %v1412 = vadd.f32 %v1293, %v1400
      %v1413 = vadd.f32 %v1294, %v1403
      %s1414 = scalar_lea.vmem %s288, 80
      %v1415 = vld [vmem:[%s1414] sm:$0xf]
      %v1416 = vld [vmem:[%s1414 + $0x8] sm:$0xf]
      %v1417 = vld [vmem:[%s1414 + $0x10] sm:$0xf]
      %v1418 = vld [vmem:[%s1414 + $0x18] sm:$0xf]
      %v1419 = vld [vmem:[%s1414 + $0x20] sm:$0xf]
      %v1420 = vld [vmem:[%s1414 + $0x28] sm:$0xf]
      %v1421 = vld [vmem:[%s1414 + $0x30] sm:$0xf]
      %v1422 = vld [vmem:[%s1414 + $0x38] sm:$0xf]
      %s1423 = scalar_lea.vmem %s2, 14
      %v1424 = vld [vmem:[%s1423] sm:$0x3]
      %v1433 = vunpack.c.l.b16 %v1415
      %v1434 = vunpack.c.l.b16 %v1416
      %v1435 = vunpack.c.l.b16 %v1417
      %v1436 = vunpack.c.l.b16 %v1418
      %v1437 = vunpack.c.l.b16 %v1419
      %v1438 = vunpack.c.l.b16 %v1420
      %v1439 = vunpack.c.l.b16 %v1421
      %v1440 = vunpack.c.l.b16 %v1422
      %v1441 = vpack.c.b16 %v1434, %v1433
      %v1442 = vpack.c.b16 %v1436, %v1435
      %v1443 = vpack.c.b16 %v1438, %v1437
      %v1444 = vpack.c.b16 %v1440, %v1439
      %v1446 = vsel %vm412, %v1441, 0
      %v1449 = vsel %vm412, %v1442, 0
      %v1452 = vsel %vm412, %v1443, 0
      %v1455 = vsel %vm412, %v1444, 0
      %v1458 = vsel %vm425, %v1424, 0
      %1460 = vmatprep.subr.bf16.mxu0 0
      %1461 = vmatpush1.bf16.msra.mxu0 %v1458
      %1462 = vmatprep.subr.bf16.mxu0 0
      %1463 = vmatpush1.bf16.msra.mxu0 0
      %1464 = vmatprep.subr.bf16.mxu0 0
      %1465 = vmatpush1.bf16.msra.mxu0 0
      %1466 = vmatprep.subr.bf16.mxu0 0
      %1467 = vmatpush1.bf16.msra.mxu0 0
      %1468 = vmatprep.subr.bf16.mxu0 0
      %1469 = vmatpush1.bf16.msra.mxu0 0
      %1470 = vmatprep.subr.bf16.mxu0 0
      %1471 = vmatpush1.bf16.msra.mxu0 0
      %1472 = vmatprep.subr.bf16.mxu0 0
      %1473 = vmatpush1.bf16.msra.mxu0 0
      %1474 = vmatprep.subr.bf16.mxu0 0
      %1475 = vmatpush1.bf16.msra.mxu0 0
      %1476 = vmatprep.subr.bf16.mxu0 0
      %1477 = vmatpush1.bf16.msra.mxu0 0
      %1478 = vmatprep.subr.bf16.mxu0 0
      %1479 = vmatpush1.bf16.msra.mxu0 0
      %1480 = vmatprep.subr.bf16.mxu0 0
      %1481 = vmatpush1.bf16.msra.mxu0 0
      %1482 = vmatprep.subr.bf16.mxu0 0
      %1483 = vmatpush1.bf16.msra.mxu0 0
      %1484 = vmatprep.subr.bf16.mxu0 0
      %1485 = vmatpush1.bf16.msra.mxu0 0
      %1486 = vmatprep.subr.bf16.mxu0 0
      %1487 = vmatpush1.bf16.msra.mxu0 0
      %1488 = vmatprep.subr.bf16.mxu0 0
      %1489 = vmatpush1.bf16.msra.mxu0 0
      %1490 = vmatprep.subr.bf16.mxu0 0
      %1491 = vmatpush1.bf16.msra.mxu0 0
      %1492 = vmatprep.mubr.bf16.mxu0 0
      %1493 = vmatmul.mubr.bf16.gmra.mrb[0].mxu0 %v1446
      %v1494 = vpop.f32.mrb[0].mxu0
      %v1495 = vadd.f32 0.0, %v1494
      %v1496 = vpop.f32.mrb[0].mxu0
      %v1497 = vpop.f32.mrb[0].mxu0
      %v1498 = vadd.f32 0.0, %v1497
      %v1499 = vpop.f32.mrb[0].mxu0
      %1500 = vmatprep.mubr.bf16.mxu0 0
      %1501 = vmatmul.mubr.bf16.gmra.mrb[0].mxu0 %v1449
      %v1502 = vpop.f32.mrb[0].mxu0
      %v1503 = vadd.f32 0.0, %v1502
      %v1504 = vpop.f32.mrb[0].mxu0
      %v1505 = vpop.f32.mrb[0].mxu0
      %v1506 = vadd.f32 0.0, %v1505
      %v1507 = vpop.f32.mrb[0].mxu0
      %1508 = vmatprep.mubr.bf16.mxu0 0
      %1509 = vmatmul.mubr.bf16.gmra.mrb[0].mxu0 %v1452
      %v1510 = vpop.f32.mrb[0].mxu0
      %v1511 = vadd.f32 0.0, %v1510
      %v1512 = vpop.f32.mrb[0].mxu0
      %v1513 = vpop.f32.mrb[0].mxu0
      %v1514 = vadd.f32 0.0, %v1513
      %v1515 = vpop.f32.mrb[0].mxu0
      %1516 = vmatprep.mubr.bf16.mxu0 0
      %1517 = vmatmul.mubr.bf16.gmra.mrb[0].mxu0 %v1455
      %v1518 = vpop.f32.mrb[0].mxu0
      %v1519 = vadd.f32 0.0, %v1518
      %v1520 = vpop.f32.mrb[0].mxu0
      %v1521 = vpop.f32.mrb[0].mxu0
      %v1522 = vadd.f32 0.0, %v1521
      %v1523 = vpop.f32.mrb[0].mxu0
      %1524 = vdwg.mxu0
      %v1525 = vadd.f32 %v1406, %v1495
      %v1526 = vadd.f32 %v1407, %v1498
      %v1527 = vadd.f32 %v1408, %v1503
      %v1528 = vadd.f32 %v1409, %v1506
      %v1529 = vadd.f32 %v1410, %v1511
      %v1530 = vadd.f32 %v1411, %v1514
      %v1531 = vadd.f32 %v1412, %v1519
      %v1532 = vadd.f32 %v1413, %v1522
      %v1533 = vld [vmem:[%s1295] sm:$0xf]
      %v1534 = vld [vmem:[%s1295 + $0x4] sm:$0x1]
      %v1535 = vld [vmem:[%s1295 + $0x8] sm:$0xf]
      %v1536 = vld [vmem:[%s1295 + $0xc] sm:$0x1]
      %v1537 = vld [vmem:[%s1295 + $0x10] sm:$0xf]
      %v1538 = vld [vmem:[%s1295 + $0x14] sm:$0x1]
      %v1539 = vld [vmem:[%s1295 + $0x18] sm:$0xf]
      %v1540 = vld [vmem:[%s1295 + $0x1c] sm:$0x1]
      %v1541 = vld [vmem:[%s1295 + $0x20] sm:$0xf]
      %v1542 = vld [vmem:[%s1295 + $0x24] sm:$0x1]
      %v1543 = vld [vmem:[%s1295 + $0x28] sm:$0xf]
      %v1544 = vld [vmem:[%s1295 + $0x2c] sm:$0x1]
      %v1545 = vld [vmem:[%s1295 + $0x30] sm:$0xf]
      %v1546 = vld [vmem:[%s1295 + $0x34] sm:$0x1]
      %v1547 = vld [vmem:[%s1295 + $0x38] sm:$0xf]
      %v1548 = vld [vmem:[%s1295 + $0x3c] sm:$0x1]
      %v1550 = vshrl.u32 %v1533, 16
      %v1552 = vrot.slane %v1550, 4
      %v1553 = vshll.u32 %v1533, 16
      %v1555 = vrot.slane %v1553, 5
      %v1556 = vor.u32 %v1552, %v1555
      %v1557 = vrot.slane %v1556, 4
      %v1559 = vshll.u32 %v1534, 16
      %v1561 = vrot.slane %v1559, 5
      %v1562 = vsel %vm612, %v1557, %v1561
      %v1564 = vshrl.u32 %v1535, 16
      %v1566 = vrot.slane %v1564, 4
      %v1567 = vshll.u32 %v1535, 16
      %v1569 = vrot.slane %v1567, 5
      %v1570 = vor.u32 %v1566, %v1569
      %v1571 = vrot.slane %v1570, 4
      %v1573 = vshll.u32 %v1536, 16
      %v1575 = vrot.slane %v1573, 5
      %v1576 = vsel %vm612, %v1571, %v1575
      %v1578 = vshrl.u32 %v1537, 16
      %v1580 = vrot.slane %v1578, 4
      %v1581 = vshll.u32 %v1537, 16
      %v1583 = vrot.slane %v1581, 5
      %v1584 = vor.u32 %v1580, %v1583
      %v1585 = vrot.slane %v1584, 4
      %v1587 = vshll.u32 %v1538, 16
      %v1589 = vrot.slane %v1587, 5
      %v1590 = vsel %vm612, %v1585, %v1589
      %v1592 = vshrl.u32 %v1539, 16
      %v1594 = vrot.slane %v1592, 4
      %v1595 = vshll.u32 %v1539, 16
      %v1597 = vrot.slane %v1595, 5
      %v1598 = vor.u32 %v1594, %v1597
      %v1599 = vrot.slane %v1598, 4
      %v1601 = vshll.u32 %v1540, 16
      %v1603 = vrot.slane %v1601, 5
      %v1604 = vsel %vm612, %v1599, %v1603
      %v1606 = vshrl.u32 %v1541, 16
      %v1608 = vrot.slane %v1606, 4
      %v1609 = vshll.u32 %v1541, 16
      %v1611 = vrot.slane %v1609, 5
      %v1612 = vor.u32 %v1608, %v1611
      %v1613 = vrot.slane %v1612, 4
      %v1615 = vshll.u32 %v1542, 16
      %v1617 = vrot.slane %v1615, 5
      %v1618 = vsel %vm612, %v1613, %v1617
      %v1620 = vshrl.u32 %v1543, 16
      %v1622 = vrot.slane %v1620, 4
      %v1623 = vshll.u32 %v1543, 16
      %v1625 = vrot.slane %v1623, 5
      %v1626 = vor.u32 %v1622, %v1625
      %v1627 = vrot.slane %v1626, 4
      %v1629 = vshll.u32 %v1544, 16
      %v1631 = vrot.slane %v1629, 5
      %v1632 = vsel %vm612, %v1627, %v1631
      %v1634 = vshrl.u32 %v1545, 16
      %v1636 = vrot.slane %v1634, 4
      %v1637 = vshll.u32 %v1545, 16
      %v1639 = vrot.slane %v1637, 5
      %v1640 = vor.u32 %v1636, %v1639
      %v1641 = vrot.slane %v1640, 4
      %v1643 = vshll.u32 %v1546, 16
      %v1645 = vrot.slane %v1643, 5
      %v1646 = vsel %vm612, %v1641, %v1645
      %v1648 = vshrl.u32 %v1547, 16
      %v1650 = vrot.slane %v1648, 4
      %v1651 = vshll.u32 %v1547, 16
      %v1653 = vrot.slane %v1651, 5
      %v1654 = vor.u32 %v1650, %v1653
      %v1655 = vrot.slane %v1654, 4
      %v1657 = vshll.u32 %v1548, 16
      %v1659 = vrot.slane %v1657, 5
      %v1660 = vsel %vm612, %v1655, %v1659
      %s1661 = scalar_lea.vmem %s2, 16
      %v1662 = vld [vmem:[%s1661] sm:$0x3]
      %v1663 = vunpack.c.l.b16 %v1562
      %v1664 = vunpack.c.l.b16 %v1576
      %v1665 = vunpack.c.l.b16 %v1590
      %v1666 = vunpack.c.l.b16 %v1604
      %v1667 = vunpack.c.l.b16 %v1618
      %v1668 = vunpack.c.l.b16 %v1632
      %v1669 = vunpack.c.l.b16 %v1646
      %v1670 = vunpack.c.l.b16 %v1660
      %v1671 = vpack.c.b16 %v1664, %v1663
      %v1672 = vpack.c.b16 %v1666, %v1665
      %v1673 = vpack.c.b16 %v1668, %v1667
      %v1674 = vpack.c.b16 %v1670, %v1669
      %v1676 = vsel %vm412, %v1671, 0
      %v1679 = vsel %vm412, %v1672, 0
      %v1682 = vsel %vm412, %v1673, 0
      %v1685 = vsel %vm412, %v1674, 0
      %v1688 = vsel %vm425, %v1662, 0
      %1690 = vmatprep.subr.bf16.mxu0 0
      %1691 = vmatpush1.bf16.msra.mxu0 %v1688
      %1692 = vmatprep.subr.bf16.mxu0 0
      %1693 = vmatpush1.bf16.msra.mxu0 0
      %1694 = vmatprep.subr.bf16.mxu0 0
      %1695 = vmatpush1.bf16.msra.mxu0 0
      %1696 = vmatprep.subr.bf16.mxu0 0
      %1697 = vmatpush1.bf16.msra.mxu0 0
      %1698 = vmatprep.subr.bf16.mxu0 0
      %1699 = vmatpush1.bf16.msra.mxu0 0
      %1700 = vmatprep.subr.bf16.mxu0 0
      %1701 = vmatpush1.bf16.msra.mxu0 0
      %1702 = vmatprep.subr.bf16.mxu0 0
      %1703 = vmatpush1.bf16.msra.mxu0 0
      %1704 = vmatprep.subr.bf16.mxu0 0
      %1705 = vmatpush1.bf16.msra.mxu0 0
      %1706 = vmatprep.subr.bf16.mxu0 0
      %1707 = vmatpush1.bf16.msra.mxu0 0
      %1708 = vmatprep.subr.bf16.mxu0 0
      %1709 = vmatpush1.bf16.msra.mxu0 0
      %1710 = vmatprep.subr.bf16.mxu0 0
      %1711 = vmatpush1.bf16.msra.mxu0 0
      %1712 = vmatprep.subr.bf16.mxu0 0
      %1713 = vmatpush1.bf16.msra.mxu0 0
      %1714 = vmatprep.subr.bf16.mxu0 0
      %1715 = vmatpush1.bf16.msra.mxu0 0
      %1716 = vmatprep.subr.bf16.mxu0 0
      %1717 = vmatpush1.bf16.msra.mxu0 0
      %1718 = vmatprep.subr.bf16.mxu0 0
      %1719 = vmatpush1.bf16.msra.mxu0 0
      %1720 = vmatprep.subr.bf16.mxu0 0
      %1721 = vmatpush1.bf16.msra.mxu0 0
      %1722 = vmatprep.mubr.bf16.mxu0 0
      %1723 = vmatmul.mubr.bf16.gmra.mrb[0].mxu0 %v1676
      %v1724 = vpop.f32.mrb[0].mxu0
      %v1725 = vadd.f32 0.0, %v1724
      %v1726 = vpop.f32.mrb[0].mxu0
      %v1727 = vpop.f32.mrb[0].mxu0
      %v1728 = vadd.f32 0.0, %v1727
      %v1729 = vpop.f32.mrb[0].mxu0
      %1730 = vmatprep.mubr.bf16.mxu0 0
      %1731 = vmatmul.mubr.bf16.gmra.mrb[0].mxu0 %v1679
      %v1732 = vpop.f32.mrb[0].mxu0
      %v1733 = vadd.f32 0.0, %v1732
      %v1734 = vpop.f32.mrb[0].mxu0
      %v1735 = vpop.f32.mrb[0].mxu0
      %v1736 = vadd.f32 0.0, %v1735
      %v1737 = vpop.f32.mrb[0].mxu0
      %1738 = vmatprep.mubr.bf16.mxu0 0
      %1739 = vmatmul.mubr.bf16.gmra.mrb[0].mxu0 %v1682
      %v1740 = vpop.f32.mrb[0].mxu0
      %v1741 = vadd.f32 0.0, %v1740
      %v1742 = vpop.f32.mrb[0].mxu0
      %v1743 = vpop.f32.mrb[0].mxu0
      %v1744 = vadd.f32 0.0, %v1743
      %v1745 = vpop.f32.mrb[0].mxu0
      %1746 = vmatprep.mubr.bf16.mxu0 0
      %1747 = vmatmul.mubr.bf16.gmra.mrb[0].mxu0 %v1685
      %v1748 = vpop.f32.mrb[0].mxu0
      %v1749 = vadd.f32 0.0, %v1748
      %v1750 = vpop.f32.mrb[0].mxu0
      %v1751 = vpop.f32.mrb[0].mxu0
      %v1752 = vadd.f32 0.0, %v1751
      %v1753 = vpop.f32.mrb[0].mxu0
      %1754 = vdwg.mxu0
      %v1755 = vadd.f32 %v1525, %v1725
      %v1756 = vadd.f32 %v1526, %v1728
      %v1757 = vadd.f32 %v1527, %v1733
      %v1758 = vadd.f32 %v1528, %v1736
      %v1759 = vadd.f32 %v1529, %v1741
      %v1760 = vadd.f32 %v1530, %v1744
      %v1761 = vadd.f32 %v1531, %v1749
      %v1762 = vadd.f32 %v1532, %v1752
      %v1763 = vld [vmem:[%s3] sm:$0x1]
      %v1765 = vlaneseq
      %v1766 = vshrl.u32 %v1765, 7
      %v1767 = vsub.s32 0, %v1766
      %v1768 = vrot.slane %v1763, %v1767
      %v1770 = vadd.f32 %v1755, %v1768
      %v1771 = vadd.f32 %v1756, %v1768
      %v1772 = vadd.f32 %v1757, %v1768
      %v1773 = vadd.f32 %v1758, %v1768
      %v1774 = vadd.f32 %v1759, %v1768
      %v1775 = vadd.f32 %v1760, %v1768
      %v1776 = vadd.f32 %v1761, %v1768
      %v1777 = vadd.f32 %v1762, %v1768
      %v1778 = vmax.f32 %v1770, 0.0
      %v1779 = vmax.f32 %v1771, 0.0
      %v1780 = vmax.f32 %v1772, 0.0
      %v1781 = vmax.f32 %v1773, 0.0
      %v1782 = vmax.f32 %v1774, 0.0
      %v1783 = vmax.f32 %v1775, 0.0
      %v1784 = vmax.f32 %v1776, 0.0
      %v1785 = vmax.f32 %v1777, 0.0
      %v1786 = vpack.c.bf16 %v1779, %v1778
      %v1787 = vpack.c.bf16 %v1781, %v1780
      %v1788 = vpack.c.bf16 %v1783, %v1782
      %v1789 = vpack.c.bf16 %v1785, %v1784
      %v1794 = vunpack.c.l.b16 %v1786
      %v1795 = vunpack.c.h.b16 %v1786
      %v1796 = vunpack.c.l.b16 %v1787
      %v1797 = vunpack.c.h.b16 %v1787
      %v1798 = vunpack.c.l.b16 %v1788
      %v1799 = vunpack.c.h.b16 %v1788
      %v1800 = vunpack.c.l.b16 %v1789
      %v1801 = vunpack.c.h.b16 %v1789
      %v1802 = vpack.c.b16 %v1794, %v1794
      %v1803 = vpack.c.b16 %v1795, %v1795
      %v1804 = vpack.c.b16 %v1796, %v1796
      %v1805 = vpack.c.b16 %v1797, %v1797
      %v1806 = vpack.c.b16 %v1798, %v1798
      %v1807 = vpack.c.b16 %v1799, %v1799
      %v1808 = vpack.c.b16 %v1800, %v1800
      %v1809 = vpack.c.b16 %v1801, %v1801
      %v1811 = vshrl.u32 %v1802, 16
      %v1813 = vrot.slane %v1811, 7
      %v1814 = vshll.u32 %v1802, 16
      %v1816 = vor.u32 %v1813, %v1814
      %v1817 = vrot.slane %v1813, 4
      %v1819 = vshrl.u32 %v1803, 16
      %v1821 = vrot.slane %v1819, 7
      %v1822 = vshll.u32 %v1803, 16
      %v1824 = vor.u32 %v1821, %v1822
      %v1825 = vrot.slane %v1821, 4
      %v1827 = vshrl.u32 %v1804, 16
      %v1829 = vrot.slane %v1827, 7
      %v1830 = vshll.u32 %v1804, 16
      %v1832 = vor.u32 %v1829, %v1830
      %v1833 = vrot.slane %v1829, 4
      %v1835 = vshrl.u32 %v1805, 16
      %v1837 = vrot.slane %v1835, 7
      %v1838 = vshll.u32 %v1805, 16
      %v1840 = vor.u32 %v1837, %v1838
      %v1841 = vrot.slane %v1837, 4
      %v1843 = vshrl.u32 %v1806, 16
      %v1845 = vrot.slane %v1843, 7
      %v1846 = vshll.u32 %v1806, 16
      %v1848 = vor.u32 %v1845, %v1846
      %v1849 = vrot.slane %v1845, 4
      %v1851 = vshrl.u32 %v1807, 16
      %v1853 = vrot.slane %v1851, 7
      %v1854 = vshll.u32 %v1807, 16
      %v1856 = vor.u32 %v1853, %v1854
      %v1857 = vrot.slane %v1853, 4
      %v1859 = vshrl.u32 %v1808, 16
      %v1861 = vrot.slane %v1859, 7
      %v1862 = vshll.u32 %v1808, 16
      %v1864 = vor.u32 %v1861, %v1862
      %v1865 = vrot.slane %v1861, 4
      %v1867 = vshrl.u32 %v1809, 16
      %v1869 = vrot.slane %v1867, 7
      %v1870 = vshll.u32 %v1809, 16
      %v1872 = vor.u32 %v1869, %v1870
      %v1873 = vrot.slane %v1869, 4
      %s1890 = scalar_lea.vmem [#allocation2], 8
      %vm1891 = vcmask 60416
      %vm1892 = vmand %vm1891, %vm340
      %v1893 = vld [vmem:[%s1890] sm:$0xf]
      %v1894 = vsel %vm1892, %v1816, %v1893
      %1895 = vst [vmem:[%s1890] sm:$0xf] %v1894
      %v1896 = vld [vmem:[%s1890 + $0x4] sm:$0x1]
      %v1897 = vsel %vm309, %v1817, %v1896
      %1898 = vst [vmem:[%s1890 + $0x4] sm:$0x1] %v1897
      %v1899 = vld [vmem:[%s1890 + $0x8] sm:$0xf]
      %v1900 = vsel %vm1892, %v1824, %v1899
      %1901 = vst [vmem:[%s1890 + $0x8] sm:$0xf] %v1900
      %v1902 = vld [vmem:[%s1890 + $0xc] sm:$0x1]
      %v1903 = vsel %vm309, %v1825, %v1902
      %1904 = vst [vmem:[%s1890 + $0xc] sm:$0x1] %v1903
      %v1905 = vld [vmem:[%s1890 + $0x10] sm:$0xf]
      %v1906 = vsel %vm1892, %v1832, %v1905
      %1907 = vst [vmem:[%s1890 + $0x10] sm:$0xf] %v1906
      %v1908 = vld [vmem:[%s1890 + $0x14] sm:$0x1]
      %v1909 = vsel %vm309, %v1833, %v1908
      %1910 = vst [vmem:[%s1890 + $0x14] sm:$0x1] %v1909
      %v1911 = vld [vmem:[%s1890 + $0x18] sm:$0xf]
      %v1912 = vsel %vm1892, %v1840, %v1911
      %1913 = vst [vmem:[%s1890 + $0x18] sm:$0xf] %v1912
      %v1914 = vld [vmem:[%s1890 + $0x1c] sm:$0x1]
      %v1915 = vsel %vm309, %v1841, %v1914
      %1916 = vst [vmem:[%s1890 + $0x1c] sm:$0x1] %v1915
      %v1917 = vld [vmem:[%s1890 + $0x20] sm:$0xf]
      %v1918 = vsel %vm1892, %v1848, %v1917
      %1919 = vst [vmem:[%s1890 + $0x20] sm:$0xf] %v1918
      %v1920 = vld [vmem:[%s1890 + $0x24] sm:$0x1]
      %v1921 = vsel %vm309, %v1849, %v1920
      %1922 = vst [vmem:[%s1890 + $0x24] sm:$0x1] %v1921
      %v1923 = vld [vmem:[%s1890 + $0x28] sm:$0xf]
      %v1924 = vsel %vm1892, %v1856, %v1923
      %1925 = vst [vmem:[%s1890 + $0x28] sm:$0xf] %v1924
      %v1926 = vld [vmem:[%s1890 + $0x2c] sm:$0x1]
      %v1927 = vsel %vm309, %v1857, %v1926
      %1928 = vst [vmem:[%s1890 + $0x2c] sm:$0x1] %v1927
      %v1929 = vld [vmem:[%s1890 + $0x30] sm:$0xf]
      %v1930 = vsel %vm1892, %v1864, %v1929
      %1931 = vst [vmem:[%s1890 + $0x30] sm:$0xf] %v1930
      %v1932 = vld [vmem:[%s1890 + $0x34] sm:$0x1]
      %v1933 = vsel %vm309, %v1865, %v1932
      %1934 = vst [vmem:[%s1890 + $0x34] sm:$0x1] %v1933
      %v1935 = vld [vmem:[%s1890 + $0x38] sm:$0xf]
      %v1936 = vsel %vm1892, %v1872, %v1935
      %1937 = vst [vmem:[%s1890 + $0x38] sm:$0xf] %v1936
      %v1938 = vld [vmem:[%s1890 + $0x3c] sm:$0x1]
      %v1939 = vsel %vm309, %v1873, %v1938
      %1940 = vst [vmem:[%s1890 + $0x3c] sm:$0x1] %v1939
      %v1941 = vld [vmem:[#allocation2] sm:$0xf]
      %v1942 = vld [vmem:[#allocation2 + $0x8] sm:$0xf]
      %v1943 = vld [vmem:[#allocation2 + $0x10] sm:$0xf]
      %v1944 = vld [vmem:[#allocation2 + $0x18] sm:$0xf]
      %v1945 = vld [vmem:[#allocation2 + $0x20] sm:$0xf]
      %v1946 = vld [vmem:[#allocation2 + $0x28] sm:$0xf]
      %v1947 = vld [vmem:[#allocation2 + $0x30] sm:$0xf]
      %v1948 = vld [vmem:[#allocation2 + $0x38] sm:$0xf]
      %v1949 = vld [vmem:[%s4] sm:$0xf]
      %v1950 = vld [vmem:[#allocation2 + $0x4] sm:$0x1]
      %v1951 = vld [vmem:[#allocation2 + $0xc] sm:$0x1]
      %v1952 = vld [vmem:[#allocation2 + $0x14] sm:$0x1]
      %v1953 = vld [vmem:[#allocation2 + $0x1c] sm:$0x1]
      %v1954 = vld [vmem:[#allocation2 + $0x24] sm:$0x1]
      %v1955 = vld [vmem:[#allocation2 + $0x2c] sm:$0x1]
      %v1956 = vld [vmem:[#allocation2 + $0x34] sm:$0x1]
      %v1957 = vld [vmem:[#allocation2 + $0x3c] sm:$0x1]
      %v1959 = vshrl.u32 %v1941, 16
      %v1961 = vrot.slane %v1959, 4
      %v1962 = vshll.u32 %v1941, 16
      %v1964 = vrot.slane %v1962, 5
      %v1965 = vor.u32 %v1961, %v1964
      %v1966 = vrot.slane %v1965, 4
      %v1968 = vshll.u32 %v1950, 16
      %v1970 = vrot.slane %v1968, 5
      %v1971 = vsel %vm612, %v1966, %v1970
      %v1973 = vshrl.u32 %v1942, 16
      %v1975 = vrot.slane %v1973, 4
      %v1976 = vshll.u32 %v1942, 16
      %v1978 = vrot.slane %v1976, 5
      %v1979 = vor.u32 %v1975, %v1978
      %v1980 = vrot.slane %v1979, 4
      %v1982 = vshll.u32 %v1951, 16
      %v1984 = vrot.slane %v1982, 5
      %v1985 = vsel %vm612, %v1980, %v1984
      %v1987 = vshrl.u32 %v1943, 16
      %v1989 = vrot.slane %v1987, 4
      %v1990 = vshll.u32 %v1943, 16
      %v1992 = vrot.slane %v1990, 5
      %v1993 = vor.u32 %v1989, %v1992
      %v1994 = vrot.slane %v1993, 4
      %v1996 = vshll.u32 %v1952, 16
      %v1998 = vrot.slane %v1996, 5
      %v1999 = vsel %vm612, %v1994, %v1998
      %v2001 = vshrl.u32 %v1944, 16
      %v2003 = vrot.slane %v2001, 4
      %v2004 = vshll.u32 %v1944, 16
      %v2006 = vrot.slane %v2004, 5
      %v2007 = vor.u32 %v2003, %v2006
      %v2008 = vrot.slane %v2007, 4
      %v2010 = vshll.u32 %v1953, 16
      %v2012 = vrot.slane %v2010, 5
      %v2013 = vsel %vm612, %v2008, %v2012
      %v2015 = vshrl.u32 %v1945, 16
      %v2017 = vrot.slane %v2015, 4
      %v2018 = vshll.u32 %v1945, 16
      %v2020 = vrot.slane %v2018, 5
      %v2021 = vor.u32 %v2017, %v2020
      %v2022 = vrot.slane %v2021, 4
      %v2024 = vshll.u32 %v1954, 16
      %v2026 = vrot.slane %v2024, 5
      %v2027 = vsel %vm612, %v2022, %v2026
      %v2029 = vshrl.u32 %v1946, 16
      %v2031 = vrot.slane %v2029, 4
      %v2032 = vshll.u32 %v1946, 16
      %v2034 = vrot.slane %v2032, 5
      %v2035 = vor.u32 %v2031, %v2034
      %v2036 = vrot.slane %v2035, 4
      %v2038 = vshll.u32 %v1955, 16
      %v2040 = vrot.slane %v2038, 5
      %v2041 = vsel %vm612, %v2036, %v2040
      %v2043 = vshrl.u32 %v1947, 16
      %v2045 = vrot.slane %v2043, 4
      %v2046 = vshll.u32 %v1947, 16
      %v2048 = vrot.slane %v2046, 5
      %v2049 = vor.u32 %v2045, %v2048
      %v2050 = vrot.slane %v2049, 4
      %v2052 = vshll.u32 %v1956, 16
      %v2054 = vrot.slane %v2052, 5
      %v2055 = vsel %vm612, %v2050, %v2054
      %v2057 = vshrl.u32 %v1948, 16
      %v2059 = vrot.slane %v2057, 4
      %v2060 = vshll.u32 %v1948, 16
      %v2062 = vrot.slane %v2060, 5
      %v2063 = vor.u32 %v2059, %v2062
      %v2064 = vrot.slane %v2063, 4
      %v2066 = vshll.u32 %v1957, 16
      %v2068 = vrot.slane %v2066, 5
      %v2069 = vsel %vm612, %v2064, %v2068
      %s2070 = scalar_lea.vmem %s4, 4
      %v2071 = vld [vmem:[%s2070] sm:$0xf]
      %v2072 = vunpack.c.l.b16 %v1971
      %v2073 = vunpack.c.l.b16 %v1985
      %v2074 = vunpack.c.l.b16 %v1999
      %v2075 = vunpack.c.l.b16 %v2013
      %v2076 = vunpack.c.l.b16 %v2027
      %v2077 = vunpack.c.l.b16 %v2041
      %v2078 = vunpack.c.l.b16 %v2055
      %v2079 = vunpack.c.l.b16 %v2069
      %v2080 = vpack.c.b16 %v2073, %v2072
      %v2081 = vpack.c.b16 %v2075, %v2074
      %v2082 = vpack.c.b16 %v2077, %v2076
      %v2083 = vpack.c.b16 %v2079, %v2078
      %vm2084 = vcmask 64512
      %v2086 = vsel %vm2084, %v2080, 0
      %v2089 = vsel %vm2084, %v2081, 0
      %v2092 = vsel %vm2084, %v2082, 0
      %v2095 = vsel %vm2084, %v2083, 0
      %vm2097 = vcmask 1043456
      %v2099 = vsel %vm2097, %v2071, 0
      %2101 = vmatprep.subr.bf16.mxu0 0
      %2102 = vmatpush1.bf16.msra.mxu0 %v2099
      %2103 = vmatprep.subr.bf16.mxu0 0
      %2104 = vmatpush1.bf16.msra.mxu0 0
      %2105 = vmatprep.subr.bf16.mxu0 0
      %2106 = vmatpush1.bf16.msra.mxu0 0
      %2107 = vmatprep.subr.bf16.mxu0 0
      %2108 = vmatpush1.bf16.msra.mxu0 0
      %2109 = vmatprep.subr.bf16.mxu0 0
      %2110 = vmatpush1.bf16.msra.mxu0 0
      %2111 = vmatprep.subr.bf16.mxu0 0
      %2112 = vmatpush1.bf16.msra.mxu0 0
      %2113 = vmatprep.subr.bf16.mxu0 0
      %2114 = vmatpush1.bf16.msra.mxu0 0
      %2115 = vmatprep.subr.bf16.mxu0 0
      %2116 = vmatpush1.bf16.msra.mxu0 0
      %2117 = vmatprep.subr.bf16.mxu0 0
      %2118 = vmatpush1.bf16.msra.mxu0 0
      %2119 = vmatprep.subr.bf16.mxu0 0
      %2120 = vmatpush1.bf16.msra.mxu0 0
      %2121 = vmatprep.subr.bf16.mxu0 0
      %2122 = vmatpush1.bf16.msra.mxu0 0
      %2123 = vmatprep.subr.bf16.mxu0 0
      %2124 = vmatpush1.bf16.msra.mxu0 0
      %2125 = vmatprep.subr.bf16.mxu0 0
      %2126 = vmatpush1.bf16.msra.mxu0 0
      %2127 = vmatprep.subr.bf16.mxu0 0
      %2128 = vmatpush1.bf16.msra.mxu0 0
      %2129 = vmatprep.subr.bf16.mxu0 0
      %2130 = vmatpush1.bf16.msra.mxu0 0
      %2131 = vmatprep.subr.bf16.mxu0 0
      %2132 = vmatpush1.bf16.msra.mxu0 0
      %2133 = vmatprep.mubr.bf16.mxu0 0
      %2134 = vmatmul.mubr.bf16.gmra.mrb[0].mxu0 %v2086
      %v2135 = vpop.f32.mrb[0].mxu0
      %v2136 = vadd.f32 0.0, %v2135
      %v2137 = vpop.f32.mrb[0].mxu0
      %v2138 = vpop.f32.mrb[0].mxu0
      %v2139 = vadd.f32 0.0, %v2138
      %v2140 = vpop.f32.mrb[0].mxu0
      %2141 = vmatprep.mubr.bf16.mxu0 0
      %2142 = vmatmul.mubr.bf16.gmra.mrb[0].mxu0 %v2089
      %v2143 = vpop.f32.mrb[0].mxu0
      %v2144 = vadd.f32 0.0, %v2143
      %v2145 = vpop.f32.mrb[0].mxu0
      %v2146 = vpop.f32.mrb[0].mxu0
      %v2147 = vadd.f32 0.0, %v2146
      %v2148 = vpop.f32.mrb[0].mxu0
      %2149 = vmatprep.mubr.bf16.mxu0 0
      %2150 = vmatmul.mubr.bf16.gmra.mrb[0].mxu0 %v2092
      %v2151 = vpop.f32.mrb[0].mxu0
      %v2152 = vadd.f32 0.0, %v2151
      %v2153 = vpop.f32.mrb[0].mxu0
      %v2154 = vpop.f32.mrb[0].mxu0
      %v2155 = vadd.f32 0.0, %v2154
      %v2156 = vpop.f32.mrb[0].mxu0
      %2157 = vmatprep.mubr.bf16.mxu0 0
      %2158 = vmatmul.mubr.bf16.gmra.mrb[0].mxu0 %v2095
      %v2159 = vpop.f32.mrb[0].mxu0
      %v2160 = vadd.f32 0.0, %v2159
      %v2161 = vpop.f32.mrb[0].mxu0
      %v2162 = vpop.f32.mrb[0].mxu0
      %v2163 = vadd.f32 0.0, %v2162
      %v2164 = vpop.f32.mrb[0].mxu0
      %2165 = vdwg.mxu0
      %v2174 = vunpack.c.l.b16 %v1941
      %v2175 = vunpack.c.l.b16 %v1942
      %v2176 = vunpack.c.l.b16 %v1943
      %v2177 = vunpack.c.l.b16 %v1944
      %v2178 = vunpack.c.l.b16 %v1945
      %v2179 = vunpack.c.l.b16 %v1946
      %v2180 = vunpack.c.l.b16 %v1947
      %v2181 = vunpack.c.l.b16 %v1948
      %v2182 = vpack.c.b16 %v2175, %v2174
      %v2183 = vpack.c.b16 %v2177, %v2176
      %v2184 = vpack.c.b16 %v2179, %v2178
      %v2185 = vpack.c.b16 %v2181, %v2180
      %v2187 = vsel %vm2084, %v2182, 0
      %v2190 = vsel %vm2084, %v2183, 0
      %v2193 = vsel %vm2084, %v2184, 0
      %v2196 = vsel %vm2084, %v2185, 0
      %v2199 = vsel %vm2097, %v1949, 0
      %2201 = vmatprep.subr.bf16.mxu0 0
      %2202 = vmatpush1.bf16.msra.mxu0 %v2199
      %2203 = vmatprep.subr.bf16.mxu0 0
      %2204 = vmatpush1.bf16.msra.mxu0 0
      %2205 = vmatprep.subr.bf16.mxu0 0
      %2206 = vmatpush1.bf16.msra.mxu0 0
      %2207 = vmatprep.subr.bf16.mxu0 0
      %2208 = vmatpush1.bf16.msra.mxu0 0
      %2209 = vmatprep.subr.bf16.mxu0 0
      %2210 = vmatpush1.bf16.msra.mxu0 0
      %2211 = vmatprep.subr.bf16.mxu0 0
      %2212 = vmatpush1.bf16.msra.mxu0 0
      %2213 = vmatprep.subr.bf16.mxu0 0
      %2214 = vmatpush1.bf16.msra.mxu0 0
      %2215 = vmatprep.subr.bf16.mxu0 0
      %2216 = vmatpush1.bf16.msra.mxu0 0
      %2217 = vmatprep.subr.bf16.mxu0 0
      %2218 = vmatpush1.bf16.msra.mxu0 0
      %2219 = vmatprep.subr.bf16.mxu0 0
      %2220 = vmatpush1.bf16.msra.mxu0 0
      %2221 = vmatprep.subr.bf16.mxu0 0
      %2222 = vmatpush1.bf16.msra.mxu0 0
      %2223 = vmatprep.subr.bf16.mxu0 0
      %2224 = vmatpush1.bf16.msra.mxu0 0
      %2225 = vmatprep.subr.bf16.mxu0 0
      %2226 = vmatpush1.bf16.msra.mxu0 0
      %2227 = vmatprep.subr.bf16.mxu0 0
      %2228 = vmatpush1.bf16.msra.mxu0 0
      %2229 = vmatprep.subr.bf16.mxu0 0
      %2230 = vmatpush1.bf16.msra.mxu0 0
      %2231 = vmatprep.subr.bf16.mxu0 0
      %2232 = vmatpush1.bf16.msra.mxu0 0
      %2233 = vmatprep.mubr.bf16.mxu0 0
      %2234 = vmatmul.mubr.bf16.gmra.mrb[0].mxu0 %v2187
      %v2235 = vpop.f32.mrb[0].mxu0
      %v2236 = vadd.f32 %v2136, %v2235
      %v2237 = vpop.f32.mrb[0].mxu0
      %v2238 = vpop.f32.mrb[0].mxu0
      %v2239 = vadd.f32 %v2139, %v2238
      %v2240 = vpop.f32.mrb[0].mxu0
      %2241 = vmatprep.mubr.bf16.mxu0 0
      %2242 = vmatmul.mubr.bf16.gmra.mrb[0].mxu0 %v2190
      %v2243 = vpop.f32.mrb[0].mxu0
      %v2244 = vadd.f32 %v2144, %v2243
      %v2245 = vpop.f32.mrb[0].mxu0
      %v2246 = vpop.f32.mrb[0].mxu0
      %v2247 = vadd.f32 %v2147, %v2246
      %v2248 = vpop.f32.mrb[0].mxu0
      %2249 = vmatprep.mubr.bf16.mxu0 0
      %2250 = vmatmul.mubr.bf16.gmra.mrb[0].mxu0 %v2193
      %v2251 = vpop.f32.mrb[0].mxu0
      %v2252 = vadd.f32 %v2152, %v2251
      %v2253 = vpop.f32.mrb[0].mxu0
      %v2254 = vpop.f32.mrb[0].mxu0
      %v2255 = vadd.f32 %v2155, %v2254
      %v2256 = vpop.f32.mrb[0].mxu0
      %2257 = vmatprep.mubr.bf16.mxu0 0
      %2258 = vmatmul.mubr.bf16.gmra.mrb[0].mxu0 %v2196
      %v2259 = vpop.f32.mrb[0].mxu0
      %v2260 = vadd.f32 %v2160, %v2259
      %v2261 = vpop.f32.mrb[0].mxu0
      %v2262 = vpop.f32.mrb[0].mxu0
      %v2263 = vadd.f32 %v2163, %v2262
      %v2264 = vpop.f32.mrb[0].mxu0
      %2265 = vdwg.mxu0
      %v2266 = vld [vmem:[#allocation2] sm:$0xe]
      %v2267 = vld [vmem:[#allocation2 + $0x8] sm:$0xe]
      %v2268 = vld [vmem:[#allocation2 + $0x10] sm:$0xe]
      %v2269 = vld [vmem:[#allocation2 + $0x18] sm:$0xe]
      %v2270 = vld [vmem:[#allocation2 + $0x20] sm:$0xe]
      %v2271 = vld [vmem:[#allocation2 + $0x28] sm:$0xe]
      %v2272 = vld [vmem:[#allocation2 + $0x30] sm:$0xe]
      %v2273 = vld [vmem:[#allocation2 + $0x38] sm:$0xe]
      %vm2290 = vcmask 1042432
      %vm2291 = vcmask 1046532
      %vm2292 = vmor %vm2290, %vm2291
      %v2293 = vrot.slane %v2266, 5
      %v2294 = vrot.slane %v2293, 4
      %v2295 = vrot.slane %v1950, 5
      %v2296 = vsel %vm2292, %v2294, %v2295
      %v2297 = vrot.slane %v2267, 5
      %v2298 = vrot.slane %v2297, 4
      %v2299 = vrot.slane %v1951, 5
      %v2300 = vsel %vm2292, %v2298, %v2299
      %v2301 = vrot.slane %v2268, 5
      %v2302 = vrot.slane %v2301, 4
      %v2303 = vrot.slane %v1952, 5
      %v2304 = vsel %vm2292, %v2302, %v2303
      %v2305 = vrot.slane %v2269, 5
      %v2306 = vrot.slane %v2305, 4
      %v2307 = vrot.slane %v1953, 5
      %v2308 = vsel %vm2292, %v2306, %v2307
      %v2309 = vrot.slane %v2270, 5
      %v2310 = vrot.slane %v2309, 4
      %v2311 = vrot.slane %v1954, 5
      %v2312 = vsel %vm2292, %v2310, %v2311
      %v2313 = vrot.slane %v2271, 5
      %v2314 = vrot.slane %v2313, 4
      %v2315 = vrot.slane %v1955, 5
      %v2316 = vsel %vm2292, %v2314, %v2315
      %v2317 = vrot.slane %v2272, 5
      %v2318 = vrot.slane %v2317, 4
      %v2319 = vrot.slane %v1956, 5
      %v2320 = vsel %vm2292, %v2318, %v2319
      %v2321 = vrot.slane %v2273, 5
      %v2322 = vrot.slane %v2321, 4
      %v2323 = vrot.slane %v1957, 5
      %v2324 = vsel %vm2292, %v2322, %v2323
      %s2325 = scalar_lea.vmem %s4, 8
      %v2326 = vld [vmem:[%s2325] sm:$0xf]
      %v2327 = vunpack.c.l.b16 %v2296
      %v2328 = vunpack.c.l.b16 %v2300
      %v2329 = vunpack.c.l.b16 %v2304
      %v2330 = vunpack.c.l.b16 %v2308
      %v2331 = vunpack.c.l.b16 %v2312
      %v2332 = vunpack.c.l.b16 %v2316
      %v2333 = vunpack.c.l.b16 %v2320
      %v2334 = vunpack.c.l.b16 %v2324
      %v2335 = vpack.c.b16 %v2328, %v2327
      %v2336 = vpack.c.b16 %v2330, %v2329
      %v2337 = vpack.c.b16 %v2332, %v2331
      %v2338 = vpack.c.b16 %v2334, %v2333
      %v2340 = vsel %vm2084, %v2335, 0
      %v2343 = vsel %vm2084, %v2336, 0
      %v2346 = vsel %vm2084, %v2337, 0
      %v2349 = vsel %vm2084, %v2338, 0
      %v2352 = vsel %vm2097, %v2326, 0
      %2354 = vmatprep.subr.bf16.mxu0 0
      %2355 = vmatpush1.bf16.msra.mxu0 %v2352
      %2356 = vmatprep.subr.bf16.mxu0 0
      %2357 = vmatpush1.bf16.msra.mxu0 0
      %2358 = vmatprep.subr.bf16.mxu0 0
      %2359 = vmatpush1.bf16.msra.mxu0 0
      %2360 = vmatprep.subr.bf16.mxu0 0
      %2361 = vmatpush1.bf16.msra.mxu0 0
      %2362 = vmatprep.subr.bf16.mxu0 0
      %2363 = vmatpush1.bf16.msra.mxu0 0
      %2364 = vmatprep.subr.bf16.mxu0 0
      %2365 = vmatpush1.bf16.msra.mxu0 0
      %2366 = vmatprep.subr.bf16.mxu0 0
      %2367 = vmatpush1.bf16.msra.mxu0 0
      %2368 = vmatprep.subr.bf16.mxu0 0
      %2369 = vmatpush1.bf16.msra.mxu0 0
      %2370 = vmatprep.subr.bf16.mxu0 0
      %2371 = vmatpush1.bf16.msra.mxu0 0
      %2372 = vmatprep.subr.bf16.mxu0 0
      %2373 = vmatpush1.bf16.msra.mxu0 0
      %2374 = vmatprep.subr.bf16.mxu0 0
      %2375 = vmatpush1.bf16.msra.mxu0 0
      %2376 = vmatprep.subr.bf16.mxu0 0
      %2377 = vmatpush1.bf16.msra.mxu0 0
      %2378 = vmatprep.subr.bf16.mxu0 0
      %2379 = vmatpush1.bf16.msra.mxu0 0
      %2380 = vmatprep.subr.bf16.mxu0 0
      %2381 = vmatpush1.bf16.msra.mxu0 0
      %2382 = vmatprep.subr.bf16.mxu0 0
      %2383 = vmatpush1.bf16.msra.mxu0 0
      %2384 = vmatprep.subr.bf16.mxu0 0
      %2385 = vmatpush1.bf16.msra.mxu0 0
      %2386 = vmatprep.mubr.bf16.mxu0 0
      %2387 = vmatmul.mubr.bf16.gmra.mrb[0].mxu0 %v2340
      %v2388 = vpop.f32.mrb[0].mxu0
      %v2389 = vadd.f32 0.0, %v2388
      %v2390 = vpop.f32.mrb[0].mxu0
      %v2391 = vpop.f32.mrb[0].mxu0
      %v2392 = vadd.f32 0.0, %v2391
      %v2393 = vpop.f32.mrb[0].mxu0
      %2394 = vmatprep.mubr.bf16.mxu0 0
      %2395 = vmatmul.mubr.bf16.gmra.mrb[0].mxu0 %v2343
      %v2396 = vpop.f32.mrb[0].mxu0
      %v2397 = vadd.f32 0.0, %v2396
      %v2398 = vpop.f32.mrb[0].mxu0
      %v2399 = vpop.f32.mrb[0].mxu0
      %v2400 = vadd.f32 0.0, %v2399
      %v2401 = vpop.f32.mrb[0].mxu0
      %2402 = vmatprep.mubr.bf16.mxu0 0
      %2403 = vmatmul.mubr.bf16.gmra.mrb[0].mxu0 %v2346
      %v2404 = vpop.f32.mrb[0].mxu0
      %v2405 = vadd.f32 0.0, %v2404
      %v2406 = vpop.f32.mrb[0].mxu0
      %v2407 = vpop.f32.mrb[0].mxu0
      %v2408 = vadd.f32 0.0, %v2407
      %v2409 = vpop.f32.mrb[0].mxu0
      %2410 = vmatprep.mubr.bf16.mxu0 0
      %2411 = vmatmul.mubr.bf16.gmra.mrb[0].mxu0 %v2349
      %v2412 = vpop.f32.mrb[0].mxu0
      %v2413 = vadd.f32 0.0, %v2412
      %v2414 = vpop.f32.mrb[0].mxu0
      %v2415 = vpop.f32.mrb[0].mxu0
      %v2416 = vadd.f32 0.0, %v2415
      %v2417 = vpop.f32.mrb[0].mxu0
      %2418 = vdwg.mxu0
      %v2419 = vadd.f32 %v2236, %v2389
      %v2420 = vadd.f32 %v2239, %v2392
      %v2421 = vadd.f32 %v2244, %v2397
      %v2422 = vadd.f32 %v2247, %v2400
      %v2423 = vadd.f32 %v2252, %v2405
      %v2424 = vadd.f32 %v2255, %v2408
      %v2425 = vadd.f32 %v2260, %v2413
      %v2426 = vadd.f32 %v2263, %v2416
      %v2427 = vld [vmem:[%s1890] sm:$0xf]
      %v2428 = vld [vmem:[%s1890 + $0x8] sm:$0xf]
      %v2429 = vld [vmem:[%s1890 + $0x10] sm:$0xf]
      %v2430 = vld [vmem:[%s1890 + $0x18] sm:$0xf]
      %v2431 = vld [vmem:[%s1890 + $0x20] sm:$0xf]
      %v2432 = vld [vmem:[%s1890 + $0x28] sm:$0xf]
      %v2433 = vld [vmem:[%s1890 + $0x30] sm:$0xf]
      %v2434 = vld [vmem:[%s1890 + $0x38] sm:$0xf]
      %s2435 = scalar_lea.vmem %s4, 12
      %v2436 = vld [vmem:[%s2435] sm:$0xf]
      %v2445 = vunpack.c.l.b16 %v2427
      %v2446 = vunpack.c.l.b16 %v2428
      %v2447 = vunpack.c.l.b16 %v2429
      %v2448 = vunpack.c.l.b16 %v2430
      %v2449 = vunpack.c.l.b16 %v2431
      %v2450 = vunpack.c.l.b16 %v2432
      %v2451 = vunpack.c.l.b16 %v2433
      %v2452 = vunpack.c.l.b16 %v2434
      %v2453 = vpack.c.b16 %v2446, %v2445
      %v2454 = vpack.c.b16 %v2448, %v2447
      %v2455 = vpack.c.b16 %v2450, %v2449
      %v2456 = vpack.c.b16 %v2452, %v2451
      %v2458 = vsel %vm2084, %v2453, 0
      %v2461 = vsel %vm2084, %v2454, 0
      %v2464 = vsel %vm2084, %v2455, 0
      %v2467 = vsel %vm2084, %v2456, 0
      %v2470 = vsel %vm2097, %v2436, 0
      %2472 = vmatprep.subr.bf16.mxu0 0
      %2473 = vmatpush1.bf16.msra.mxu0 %v2470
      %2474 = vmatprep.subr.bf16.mxu0 0
      %2475 = vmatpush1.bf16.msra.mxu0 0
      %2476 = vmatprep.subr.bf16.mxu0 0
      %2477 = vmatpush1.bf16.msra.mxu0 0
      %2478 = vmatprep.subr.bf16.mxu0 0
      %2479 = vmatpush1.bf16.msra.mxu0 0
      %2480 = vmatprep.subr.bf16.mxu0 0
      %2481 = vmatpush1.bf16.msra.mxu0 0
      %2482 = vmatprep.subr.bf16.mxu0 0
      %2483 = vmatpush1.bf16.msra.mxu0 0
      %2484 = vmatprep.subr.bf16.mxu0 0
      %2485 = vmatpush1.bf16.msra.mxu0 0
      %2486 = vmatprep.subr.bf16.mxu0 0
      %2487 = vmatpush1.bf16.msra.mxu0 0
      %2488 = vmatprep.subr.bf16.mxu0 0
      %2489 = vmatpush1.bf16.msra.mxu0 0
      %2490 = vmatprep.subr.bf16.mxu0 0
      %2491 = vmatpush1.bf16.msra.mxu0 0
      %2492 = vmatprep.subr.bf16.mxu0 0
      %2493 = vmatpush1.bf16.msra.mxu0 0
      %2494 = vmatprep.subr.bf16.mxu0 0
      %2495 = vmatpush1.bf16.msra.mxu0 0
      %2496 = vmatprep.subr.bf16.mxu0 0
      %2497 = vmatpush1.bf16.msra.mxu0 0
      %2498 = vmatprep.subr.bf16.mxu0 0
      %2499 = vmatpush1.bf16.msra.mxu0 0
      %2500 = vmatprep.subr.bf16.mxu0 0
      %2501 = vmatpush1.bf16.msra.mxu0 0
      %2502 = vmatprep.subr.bf16.mxu0 0
      %2503 = vmatpush1.bf16.msra.mxu0 0
      %2504 = vmatprep.mubr.bf16.mxu0 0
      %2505 = vmatmul.mubr.bf16.gmra.mrb[0].mxu0 %v2458
      %v2506 = vpop.f32.mrb[0].mxu0
      %v2507 = vadd.f32 0.0, %v2506
      %v2508 = vpop.f32.mrb[0].mxu0
      %v2509 = vpop.f32.mrb[0].mxu0
      %v2510 = vadd.f32 0.0, %v2509
      %v2511 = vpop.f32.mrb[0].mxu0
      %2512 = vmatprep.mubr.bf16.mxu0 0
      %2513 = vmatmul.mubr.bf16.gmra.mrb[0].mxu0 %v2461
      %v2514 = vpop.f32.mrb[0].mxu0
      %v2515 = vadd.f32 0.0, %v2514
      %v2516 = vpop.f32.mrb[0].mxu0
      %v2517 = vpop.f32.mrb[0].mxu0
      %v2518 = vadd.f32 0.0, %v2517
      %v2519 = vpop.f32.mrb[0].mxu0
      %2520 = vmatprep.mubr.bf16.mxu0 0
      %2521 = vmatmul.mubr.bf16.gmra.mrb[0].mxu0 %v2464
      %v2522 = vpop.f32.mrb[0].mxu0
      %v2523 = vadd.f32 0.0, %v2522
      %v2524 = vpop.f32.mrb[0].mxu0
      %v2525 = vpop.f32.mrb[0].mxu0
      %v2526 = vadd.f32 0.0, %v2525
      %v2527 = vpop.f32.mrb[0].mxu0
      %2528 = vmatprep.mubr.bf16.mxu0 0
      %2529 = vmatmul.mubr.bf16.gmra.mrb[0].mxu0 %v2467
      %v2530 = vpop.f32.mrb[0].mxu0
      %v2531 = vadd.f32 0.0, %v2530
      %v2532 = vpop.f32.mrb[0].mxu0
      %v2533 = vpop.f32.mrb[0].mxu0
      %v2534 = vadd.f32 0.0, %v2533
      %v2535 = vpop.f32.mrb[0].mxu0
      %2536 = vdwg.mxu0
      %v2537 = vadd.f32 %v2419, %v2507
      %v2538 = vadd.f32 %v2420, %v2510
      %v2539 = vadd.f32 %v2421, %v2515
      %v2540 = vadd.f32 %v2422, %v2518
      %v2541 = vadd.f32 %v2423, %v2523
      %v2542 = vadd.f32 %v2424, %v2526
      %v2543 = vadd.f32 %v2425, %v2531
      %v2544 = vadd.f32 %v2426, %v2534
      %v2545 = vld [vmem:[%s1890] sm:$0xf]
      %v2546 = vld [vmem:[%s1890 + $0x4] sm:$0x1]
      %v2547 = vld [vmem:[%s1890 + $0x8] sm:$0xf]
      %v2548 = vld [vmem:[%s1890 + $0xc] sm:$0x1]
      %v2549 = vld [vmem:[%s1890 + $0x10] sm:$0xf]
      %v2550 = vld [vmem:[%s1890 + $0x14] sm:$0x1]
      %v2551 = vld [vmem:[%s1890 + $0x18] sm:$0xf]
      %v2552 = vld [vmem:[%s1890 + $0x1c] sm:$0x1]
      %v2553 = vld [vmem:[%s1890 + $0x20] sm:$0xf]
      %v2554 = vld [vmem:[%s1890 + $0x24] sm:$0x1]
      %v2555 = vld [vmem:[%s1890 + $0x28] sm:$0xf]
      %v2556 = vld [vmem:[%s1890 + $0x2c] sm:$0x1]
      %v2557 = vld [vmem:[%s1890 + $0x30] sm:$0xf]
      %v2558 = vld [vmem:[%s1890 + $0x34] sm:$0x1]
      %v2559 = vld [vmem:[%s1890 + $0x38] sm:$0xf]
      %v2560 = vld [vmem:[%s1890 + $0x3c] sm:$0x1]
      %v2562 = vshrl.u32 %v2545, 16
      %v2564 = vrot.slane %v2562, 4
      %v2565 = vshll.u32 %v2545, 16
      %v2567 = vrot.slane %v2565, 5
      %v2568 = vor.u32 %v2564, %v2567
      %v2569 = vrot.slane %v2568, 4
      %v2571 = vshll.u32 %v2546, 16
      %v2573 = vrot.slane %v2571, 5
      %v2574 = vsel %vm612, %v2569, %v2573
      %v2576 = vshrl.u32 %v2547, 16
      %v2578 = vrot.slane %v2576, 4
      %v2579 = vshll.u32 %v2547, 16
      %v2581 = vrot.slane %v2579, 5
      %v2582 = vor.u32 %v2578, %v2581
      %v2583 = vrot.slane %v2582, 4
      %v2585 = vshll.u32 %v2548, 16
      %v2587 = vrot.slane %v2585, 5
      %v2588 = vsel %vm612, %v2583, %v2587
      %v2590 = vshrl.u32 %v2549, 16
      %v2592 = vrot.slane %v2590, 4
      %v2593 = vshll.u32 %v2549, 16
      %v2595 = vrot.slane %v2593, 5
      %v2596 = vor.u32 %v2592, %v2595
      %v2597 = vrot.slane %v2596, 4
      %v2599 = vshll.u32 %v2550, 16
      %v2601 = vrot.slane %v2599, 5
      %v2602 = vsel %vm612, %v2597, %v2601
      %v2604 = vshrl.u32 %v2551, 16
      %v2606 = vrot.slane %v2604, 4
      %v2607 = vshll.u32 %v2551, 16
      %v2609 = vrot.slane %v2607, 5
      %v2610 = vor.u32 %v2606, %v2609
      %v2611 = vrot.slane %v2610, 4
      %v2613 = vshll.u32 %v2552, 16
      %v2615 = vrot.slane %v2613, 5
      %v2616 = vsel %vm612, %v2611, %v2615
      %v2618 = vshrl.u32 %v2553, 16
      %v2620 = vrot.slane %v2618, 4
      %v2621 = vshll.u32 %v2553, 16
      %v2623 = vrot.slane %v2621, 5
      %v2624 = vor.u32 %v2620, %v2623
      %v2625 = vrot.slane %v2624, 4
      %v2627 = vshll.u32 %v2554, 16
      %v2629 = vrot.slane %v2627, 5
      %v2630 = vsel %vm612, %v2625, %v2629
      %v2632 = vshrl.u32 %v2555, 16
      %v2634 = vrot.slane %v2632, 4
      %v2635 = vshll.u32 %v2555, 16
      %v2637 = vrot.slane %v2635, 5
      %v2638 = vor.u32 %v2634, %v2637
      %v2639 = vrot.slane %v2638, 4
      %v2641 = vshll.u32 %v2556, 16
      %v2643 = vrot.slane %v2641, 5
      %v2644 = vsel %vm612, %v2639, %v2643
      %v2646 = vshrl.u32 %v2557, 16
      %v2648 = vrot.slane %v2646, 4
      %v2649 = vshll.u32 %v2557, 16
      %v2651 = vrot.slane %v2649, 5
      %v2652 = vor.u32 %v2648, %v2651
      %v2653 = vrot.slane %v2652, 4
      %v2655 = vshll.u32 %v2558, 16
      %v2657 = vrot.slane %v2655, 5
      %v2658 = vsel %vm612, %v2653, %v2657
      %v2660 = vshrl.u32 %v2559, 16
      %v2662 = vrot.slane %v2660, 4
      %v2663 = vshll.u32 %v2559, 16
      %v2665 = vrot.slane %v2663, 5
      %v2666 = vor.u32 %v2662, %v2665
      %v2667 = vrot.slane %v2666, 4
      %v2669 = vshll.u32 %v2560, 16
      %v2671 = vrot.slane %v2669, 5
      %v2672 = vsel %vm612, %v2667, %v2671
      %s2673 = scalar_lea.vmem %s4, 16
      %v2674 = vld [vmem:[%s2673] sm:$0xf]
      %v2675 = vunpack.c.l.b16 %v2574
      %v2676 = vunpack.c.l.b16 %v2588
      %v2677 = vunpack.c.l.b16 %v2602
      %v2678 = vunpack.c.l.b16 %v2616
      %v2679 = vunpack.c.l.b16 %v2630
      %v2680 = vunpack.c.l.b16 %v2644
      %v2681 = vunpack.c.l.b16 %v2658
      %v2682 = vunpack.c.l.b16 %v2672
      %v2683 = vpack.c.b16 %v2676, %v2675
      %v2684 = vpack.c.b16 %v2678, %v2677
      %v2685 = vpack.c.b16 %v2680, %v2679
      %v2686 = vpack.c.b16 %v2682, %v2681
      %v2688 = vsel %vm2084, %v2683, 0
      %v2691 = vsel %vm2084, %v2684, 0
      %v2694 = vsel %vm2084, %v2685, 0
      %v2697 = vsel %vm2084, %v2686, 0
      %v2700 = vsel %vm2097, %v2674, 0
      %2702 = vmatprep.subr.bf16.mxu0 0
      %2703 = vmatpush1.bf16.msra.mxu0 %v2700
      %2704 = vmatprep.subr.bf16.mxu0 0
      %2705 = vmatpush1.bf16.msra.mxu0 0
      %2706 = vmatprep.subr.bf16.mxu0 0
      %2707 = vmatpush1.bf16.msra.mxu0 0
      %2708 = vmatprep.subr.bf16.mxu0 0
      %2709 = vmatpush1.bf16.msra.mxu0 0
      %2710 = vmatprep.subr.bf16.mxu0 0
      %2711 = vmatpush1.bf16.msra.mxu0 0
      %2712 = vmatprep.subr.bf16.mxu0 0
      %2713 = vmatpush1.bf16.msra.mxu0 0
      %2714 = vmatprep.subr.bf16.mxu0 0
      %2715 = vmatpush1.bf16.msra.mxu0 0
      %2716 = vmatprep.subr.bf16.mxu0 0
      %2717 = vmatpush1.bf16.msra.mxu0 0
      %2718 = vmatprep.subr.bf16.mxu0 0
      %2719 = vmatpush1.bf16.msra.mxu0 0
      %2720 = vmatprep.subr.bf16.mxu0 0
      %2721 = vmatpush1.bf16.msra.mxu0 0
      %2722 = vmatprep.subr.bf16.mxu0 0
      %2723 = vmatpush1.bf16.msra.mxu0 0
      %2724 = vmatprep.subr.bf16.mxu0 0
      %2725 = vmatpush1.bf16.msra.mxu0 0
      %2726 = vmatprep.subr.bf16.mxu0 0
      %2727 = vmatpush1.bf16.msra.mxu0 0
      %2728 = vmatprep.subr.bf16.mxu0 0
      %2729 = vmatpush1.bf16.msra.mxu0 0
      %2730 = vmatprep.subr.bf16.mxu0 0
      %2731 = vmatpush1.bf16.msra.mxu0 0
      %2732 = vmatprep.subr.bf16.mxu0 0
      %2733 = vmatpush1.bf16.msra.mxu0 0
      %2734 = vmatprep.mubr.bf16.mxu0 0
      %2735 = vmatmul.mubr.bf16.gmra.mrb[0].mxu0 %v2688
      %v2736 = vpop.f32.mrb[0].mxu0
      %v2737 = vadd.f32 0.0, %v2736
      %v2738 = vpop.f32.mrb[0].mxu0
      %v2739 = vpop.f32.mrb[0].mxu0
      %v2740 = vadd.f32 0.0, %v2739
      %v2741 = vpop.f32.mrb[0].mxu0
      %2742 = vmatprep.mubr.bf16.mxu0 0
      %2743 = vmatmul.mubr.bf16.gmra.mrb[0].mxu0 %v2691
      %v2744 = vpop.f32.mrb[0].mxu0
      %v2745 = vadd.f32 0.0, %v2744
      %v2746 = vpop.f32.mrb[0].mxu0
      %v2747 = vpop.f32.mrb[0].mxu0
      %v2748 = vadd.f32 0.0, %v2747
      %v2749 = vpop.f32.mrb[0].mxu0
      %2750 = vmatprep.mubr.bf16.mxu0 0
      %2751 = vmatmul.mubr.bf16.gmra.mrb[0].mxu0 %v2694
      %v2752 = vpop.f32.mrb[0].mxu0
      %v2753 = vadd.f32 0.0, %v2752
      %v2754 = vpop.f32.mrb[0].mxu0
      %v2755 = vpop.f32.mrb[0].mxu0
      %v2756 = vadd.f32 0.0, %v2755
      %v2757 = vpop.f32.mrb[0].mxu0
      %2758 = vmatprep.mubr.bf16.mxu0 0
      %2759 = vmatmul.mubr.bf16.gmra.mrb[0].mxu0 %v2697
      %v2760 = vpop.f32.mrb[0].mxu0
      %v2761 = vadd.f32 0.0, %v2760
      %v2762 = vpop.f32.mrb[0].mxu0
      %v2763 = vpop.f32.mrb[0].mxu0
      %v2764 = vadd.f32 0.0, %v2763
      %v2765 = vpop.f32.mrb[0].mxu0
      %2766 = vdwg.mxu0
      %v2767 = vadd.f32 %v2537, %v2737
      %v2768 = vadd.f32 %v2538, %v2740
      %v2769 = vadd.f32 %v2539, %v2745
      %v2770 = vadd.f32 %v2540, %v2748
      %v2771 = vadd.f32 %v2541, %v2753
      %v2772 = vadd.f32 %v2542, %v2756
      %v2773 = vadd.f32 %v2543, %v2761
      %v2774 = vadd.f32 %v2544, %v2764
      %v2775 = vld [vmem:[%s1890] sm:$0xe]
      %v2776 = vld [vmem:[%s1890 + $0x8] sm:$0xe]
      %v2777 = vld [vmem:[%s1890 + $0x10] sm:$0xe]
      %v2778 = vld [vmem:[%s1890 + $0x18] sm:$0xe]
      %v2779 = vld [vmem:[%s1890 + $0x20] sm:$0xe]
      %v2780 = vld [vmem:[%s1890 + $0x28] sm:$0xe]
      %v2781 = vld [vmem:[%s1890 + $0x30] sm:$0xe]
      %v2782 = vld [vmem:[%s1890 + $0x38] sm:$0xe]
      %v2799 = vrot.slane %v2775, 5
      %v2800 = vrot.slane %v2799, 4
      %v2801 = vrot.slane %v2546, 5
      %v2802 = vsel %vm2292, %v2800, %v2801
      %v2803 = vrot.slane %v2776, 5
      %v2804 = vrot.slane %v2803, 4
      %v2805 = vrot.slane %v2548, 5
      %v2806 = vsel %vm2292, %v2804, %v2805
      %v2807 = vrot.slane %v2777, 5
      %v2808 = vrot.slane %v2807, 4
      %v2809 = vrot.slane %v2550, 5
      %v2810 = vsel %vm2292, %v2808, %v2809
      %v2811 = vrot.slane %v2778, 5
      %v2812 = vrot.slane %v2811, 4
      %v2813 = vrot.slane %v2552, 5
      %v2814 = vsel %vm2292, %v2812, %v2813
      %v2815 = vrot.slane %v2779, 5
      %v2816 = vrot.slane %v2815, 4
      %v2817 = vrot.slane %v2554, 5
      %v2818 = vsel %vm2292, %v2816, %v2817
      %v2819 = vrot.slane %v2780, 5
      %v2820 = vrot.slane %v2819, 4
      %v2821 = vrot.slane %v2556, 5
      %v2822 = vsel %vm2292, %v2820, %v2821
      %v2823 = vrot.slane %v2781, 5
      %v2824 = vrot.slane %v2823, 4
      %v2825 = vrot.slane %v2558, 5
      %v2826 = vsel %vm2292, %v2824, %v2825
      %v2827 = vrot.slane %v2782, 5
      %v2828 = vrot.slane %v2827, 4
      %v2829 = vrot.slane %v2560, 5
      %v2830 = vsel %vm2292, %v2828, %v2829
      %s2831 = scalar_lea.vmem %s4, 20
      %v2832 = vld [vmem:[%s2831] sm:$0xf]
      %v2833 = vunpack.c.l.b16 %v2802
      %v2834 = vunpack.c.l.b16 %v2806
      %v2835 = vunpack.c.l.b16 %v2810
      %v2836 = vunpack.c.l.b16 %v2814
      %v2837 = vunpack.c.l.b16 %v2818
      %v2838 = vunpack.c.l.b16 %v2822
      %v2839 = vunpack.c.l.b16 %v2826
      %v2840 = vunpack.c.l.b16 %v2830
      %v2841 = vpack.c.b16 %v2834, %v2833
      %v2842 = vpack.c.b16 %v2836, %v2835
      %v2843 = vpack.c.b16 %v2838, %v2837
      %v2844 = vpack.c.b16 %v2840, %v2839
      %v2846 = vsel %vm2084, %v2841, 0
      %v2849 = vsel %vm2084, %v2842, 0
      %v2852 = vsel %vm2084, %v2843, 0
      %v2855 = vsel %vm2084, %v2844, 0
      %v2858 = vsel %vm2097, %v2832, 0
      %2860 = vmatprep.subr.bf16.mxu0 0
      %2861 = vmatpush1.bf16.msra.mxu0 %v2858
      %2862 = vmatprep.subr.bf16.mxu0 0
      %2863 = vmatpush1.bf16.msra.mxu0 0
      %2864 = vmatprep.subr.bf16.mxu0 0
      %2865 = vmatpush1.bf16.msra.mxu0 0
      %2866 = vmatprep.subr.bf16.mxu0 0
      %2867 = vmatpush1.bf16.msra.mxu0 0
      %2868 = vmatprep.subr.bf16.mxu0 0
      %2869 = vmatpush1.bf16.msra.mxu0 0
      %2870 = vmatprep.subr.bf16.mxu0 0
      %2871 = vmatpush1.bf16.msra.mxu0 0
      %2872 = vmatprep.subr.bf16.mxu0 0
      %2873 = vmatpush1.bf16.msra.mxu0 0
      %2874 = vmatprep.subr.bf16.mxu0 0
      %2875 = vmatpush1.bf16.msra.mxu0 0
      %2876 = vmatprep.subr.bf16.mxu0 0
      %2877 = vmatpush1.bf16.msra.mxu0 0
      %2878 = vmatprep.subr.bf16.mxu0 0
      %2879 = vmatpush1.bf16.msra.mxu0 0
      %2880 = vmatprep.subr.bf16.mxu0 0
      %2881 = vmatpush1.bf16.msra.mxu0 0
      %2882 = vmatprep.subr.bf16.mxu0 0
      %2883 = vmatpush1.bf16.msra.mxu0 0
      %2884 = vmatprep.subr.bf16.mxu0 0
      %2885 = vmatpush1.bf16.msra.mxu0 0
      %2886 = vmatprep.subr.bf16.mxu0 0
      %2887 = vmatpush1.bf16.msra.mxu0 0
      %2888 = vmatprep.subr.bf16.mxu0 0
      %2889 = vmatpush1.bf16.msra.mxu0 0
      %2890 = vmatprep.subr.bf16.mxu0 0
      %2891 = vmatpush1.bf16.msra.mxu0 0
      %2892 = vmatprep.mubr.bf16.mxu0 0
      %2893 = vmatmul.mubr.bf16.gmra.mrb[0].mxu0 %v2846
      %v2894 = vpop.f32.mrb[0].mxu0
      %v2895 = vadd.f32 0.0, %v2894
      %v2896 = vpop.f32.mrb[0].mxu0
      %v2897 = vpop.f32.mrb[0].mxu0
      %v2898 = vadd.f32 0.0, %v2897
      %v2899 = vpop.f32.mrb[0].mxu0
      %2900 = vmatprep.mubr.bf16.mxu0 0
      %2901 = vmatmul.mubr.bf16.gmra.mrb[0].mxu0 %v2849
      %v2902 = vpop.f32.mrb[0].mxu0
      %v2903 = vadd.f32 0.0, %v2902
      %v2904 = vpop.f32.mrb[0].mxu0
      %v2905 = vpop.f32.mrb[0].mxu0
      %v2906 = vadd.f32 0.0, %v2905
      %v2907 = vpop.f32.mrb[0].mxu0
      %2908 = vmatprep.mubr.bf16.mxu0 0
      %2909 = vmatmul.mubr.bf16.gmra.mrb[0].mxu0 %v2852
      %v2910 = vpop.f32.mrb[0].mxu0
      %v2911 = vadd.f32 0.0, %v2910
      %v2912 = vpop.f32.mrb[0].mxu0
      %v2913 = vpop.f32.mrb[0].mxu0
      %v2914 = vadd.f32 0.0, %v2913
      %v2915 = vpop.f32.mrb[0].mxu0
      %2916 = vmatprep.mubr.bf16.mxu0 0
      %2917 = vmatmul.mubr.bf16.gmra.mrb[0].mxu0 %v2855
      %v2918 = vpop.f32.mrb[0].mxu0
      %v2919 = vadd.f32 0.0, %v2918
      %v2920 = vpop.f32.mrb[0].mxu0
      %v2921 = vpop.f32.mrb[0].mxu0
      %v2922 = vadd.f32 0.0, %v2921
      %v2923 = vpop.f32.mrb[0].mxu0
      %2924 = vdwg.mxu0
      %v2925 = vadd.f32 %v2767, %v2895
      %v2926 = vadd.f32 %v2768, %v2898
      %v2927 = vadd.f32 %v2769, %v2903
      %v2928 = vadd.f32 %v2770, %v2906
      %v2929 = vadd.f32 %v2771, %v2911
      %v2930 = vadd.f32 %v2772, %v2914
      %v2931 = vadd.f32 %v2773, %v2919
      %v2932 = vadd.f32 %v2774, %v2922
      %s2933 = scalar_lea.vmem [#allocation2], 16
      %v2934 = vld [vmem:[%s2933] sm:$0xf]
      %v2935 = vld [vmem:[%s2933 + $0x8] sm:$0xf]
      %v2936 = vld [vmem:[%s2933 + $0x10] sm:$0xf]
      %v2937 = vld [vmem:[%s2933 + $0x18] sm:$0xf]
      %v2938 = vld [vmem:[%s2933 + $0x20] sm:$0xf]
      %v2939 = vld [vmem:[%s2933 + $0x28] sm:$0xf]
      %v2940 = vld [vmem:[%s2933 + $0x30] sm:$0xf]
      %v2941 = vld [vmem:[%s2933 + $0x38] sm:$0xf]
      %s2942 = scalar_lea.vmem %s4, 24
      %v2943 = vld [vmem:[%s2942] sm:$0xf]
      %v2952 = vunpack.c.l.b16 %v2934
      %v2953 = vunpack.c.l.b16 %v2935
      %v2954 = vunpack.c.l.b16 %v2936
      %v2955 = vunpack.c.l.b16 %v2937
      %v2956 = vunpack.c.l.b16 %v2938
      %v2957 = vunpack.c.l.b16 %v2939
      %v2958 = vunpack.c.l.b16 %v2940
      %v2959 = vunpack.c.l.b16 %v2941
      %v2960 = vpack.c.b16 %v2953, %v2952
      %v2961 = vpack.c.b16 %v2955, %v2954
      %v2962 = vpack.c.b16 %v2957, %v2956
      %v2963 = vpack.c.b16 %v2959, %v2958
      %v2965 = vsel %vm2084, %v2960, 0
      %v2968 = vsel %vm2084, %v2961, 0
      %v2971 = vsel %vm2084, %v2962, 0
      %v2974 = vsel %vm2084, %v2963, 0
      %v2977 = vsel %vm2097, %v2943, 0
      %2979 = vmatprep.subr.bf16.mxu0 0
      %2980 = vmatpush1.bf16.msra.mxu0 %v2977
      %2981 = vmatprep.subr.bf16.mxu0 0
      %2982 = vmatpush1.bf16.msra.mxu0 0
      %2983 = vmatprep.subr.bf16.mxu0 0
      %2984 = vmatpush1.bf16.msra.mxu0 0
      %2985 = vmatprep.subr.bf16.mxu0 0
      %2986 = vmatpush1.bf16.msra.mxu0 0
      %2987 = vmatprep.subr.bf16.mxu0 0
      %2988 = vmatpush1.bf16.msra.mxu0 0
      %2989 = vmatprep.subr.bf16.mxu0 0
      %2990 = vmatpush1.bf16.msra.mxu0 0
      %2991 = vmatprep.subr.bf16.mxu0 0
      %2992 = vmatpush1.bf16.msra.mxu0 0
      %2993 = vmatprep.subr.bf16.mxu0 0
      %2994 = vmatpush1.bf16.msra.mxu0 0
      %2995 = vmatprep.subr.bf16.mxu0 0
      %2996 = vmatpush1.bf16.msra.mxu0 0
      %2997 = vmatprep.subr.bf16.mxu0 0
      %2998 = vmatpush1.bf16.msra.mxu0 0
      %2999 = vmatprep.subr.bf16.mxu0 0
      %3000 = vmatpush1.bf16.msra.mxu0 0
      %3001 = vmatprep.subr.bf16.mxu0 0
      %3002 = vmatpush1.bf16.msra.mxu0 0
      %3003 = vmatprep.subr.bf16.mxu0 0
      %3004 = vmatpush1.bf16.msra.mxu0 0
      %3005 = vmatprep.subr.bf16.mxu0 0
      %3006 = vmatpush1.bf16.msra.mxu0 0
      %3007 = vmatprep.subr.bf16.mxu0 0
      %3008 = vmatpush1.bf16.msra.mxu0 0
      %3009 = vmatprep.subr.bf16.mxu0 0
      %3010 = vmatpush1.bf16.msra.mxu0 0
      %3011 = vmatprep.mubr.bf16.mxu0 0
      %3012 = vmatmul.mubr.bf16.gmra.mrb[0].mxu0 %v2965
      %v3013 = vpop.f32.mrb[0].mxu0
      %v3014 = vadd.f32 0.0, %v3013
      %v3015 = vpop.f32.mrb[0].mxu0
      %v3016 = vpop.f32.mrb[0].mxu0
      %v3017 = vadd.f32 0.0, %v3016
      %v3018 = vpop.f32.mrb[0].mxu0
      %3019 = vmatprep.mubr.bf16.mxu0 0
      %3020 = vmatmul.mubr.bf16.gmra.mrb[0].mxu0 %v2968
      %v3021 = vpop.f32.mrb[0].mxu0
      %v3022 = vadd.f32 0.0, %v3021
      %v3023 = vpop.f32.mrb[0].mxu0
      %v3024 = vpop.f32.mrb[0].mxu0
      %v3025 = vadd.f32 0.0, %v3024
      %v3026 = vpop.f32.mrb[0].mxu0
      %3027 = vmatprep.mubr.bf16.mxu0 0
      %3028 = vmatmul.mubr.bf16.gmra.mrb[0].mxu0 %v2971
      %v3029 = vpop.f32.mrb[0].mxu0
      %v3030 = vadd.f32 0.0, %v3029
      %v3031 = vpop.f32.mrb[0].mxu0
      %v3032 = vpop.f32.mrb[0].mxu0
      %v3033 = vadd.f32 0.0, %v3032
      %v3034 = vpop.f32.mrb[0].mxu0
      %3035 = vmatprep.mubr.bf16.mxu0 0
      %3036 = vmatmul.mubr.bf16.gmra.mrb[0].mxu0 %v2974
      %v3037 = vpop.f32.mrb[0].mxu0
      %v3038 = vadd.f32 0.0, %v3037
      %v3039 = vpop.f32.mrb[0].mxu0
      %v3040 = vpop.f32.mrb[0].mxu0
      %v3041 = vadd.f32 0.0, %v3040
      %v3042 = vpop.f32.mrb[0].mxu0
      %3043 = vdwg.mxu0
      %v3044 = vadd.f32 %v2925, %v3014
      %v3045 = vadd.f32 %v2926, %v3017
      %v3046 = vadd.f32 %v2927, %v3022
      %v3047 = vadd.f32 %v2928, %v3025
      %v3048 = vadd.f32 %v2929, %v3030
      %v3049 = vadd.f32 %v2930, %v3033
      %v3050 = vadd.f32 %v2931, %v3038
      %v3051 = vadd.f32 %v2932, %v3041
      %v3052 = vld [vmem:[%s2933] sm:$0xf]
      %v3053 = vld [vmem:[%s2933 + $0x4] sm:$0x1]
      %v3054 = vld [vmem:[%s2933 + $0x8] sm:$0xf]
      %v3055 = vld [vmem:[%s2933 + $0xc] sm:$0x1]
      %v3056 = vld [vmem:[%s2933 + $0x10] sm:$0xf]
      %v3057 = vld [vmem:[%s2933 + $0x14] sm:$0x1]
      %v3058 = vld [vmem:[%s2933 + $0x18] sm:$0xf]
      %v3059 = vld [vmem:[%s2933 + $0x1c] sm:$0x1]
      %v3060 = vld [vmem:[%s2933 + $0x20] sm:$0xf]
      %v3061 = vld [vmem:[%s2933 + $0x24] sm:$0x1]
      %v3062 = vld [vmem:[%s2933 + $0x28] sm:$0xf]
      %v3063 = vld [vmem:[%s2933 + $0x2c] sm:$0x1]
      %v3064 = vld [vmem:[%s2933 + $0x30] sm:$0xf]
      %v3065 = vld [vmem:[%s2933 + $0x34] sm:$0x1]
      %v3066 = vld [vmem:[%s2933 + $0x38] sm:$0xf]
      %v3067 = vld [vmem:[%s2933 + $0x3c] sm:$0x1]
      %v3069 = vshrl.u32 %v3052, 16
      %v3071 = vrot.slane %v3069, 4
      %v3072 = vshll.u32 %v3052, 16
      %v3074 = vrot.slane %v3072, 5
      %v3075 = vor.u32 %v3071, %v3074
      %v3076 = vrot.slane %v3075, 4
      %v3078 = vshll.u32 %v3053, 16
      %v3080 = vrot.slane %v3078, 5
      %v3081 = vsel %vm612, %v3076, %v3080
      %v3083 = vshrl.u32 %v3054, 16
      %v3085 = vrot.slane %v3083, 4
      %v3086 = vshll.u32 %v3054, 16
      %v3088 = vrot.slane %v3086, 5
      %v3089 = vor.u32 %v3085, %v3088
      %v3090 = vrot.slane %v3089, 4
      %v3092 = vshll.u32 %v3055, 16
      %v3094 = vrot.slane %v3092, 5
      %v3095 = vsel %vm612, %v3090, %v3094
      %v3097 = vshrl.u32 %v3056, 16
      %v3099 = vrot.slane %v3097, 4
      %v3100 = vshll.u32 %v3056, 16
      %v3102 = vrot.slane %v3100, 5
      %v3103 = vor.u32 %v3099, %v3102
      %v3104 = vrot.slane %v3103, 4
      %v3106 = vshll.u32 %v3057, 16
      %v3108 = vrot.slane %v3106, 5
      %v3109 = vsel %vm612, %v3104, %v3108
      %v3111 = vshrl.u32 %v3058, 16
      %v3113 = vrot.slane %v3111, 4
      %v3114 = vshll.u32 %v3058, 16
      %v3116 = vrot.slane %v3114, 5
      %v3117 = vor.u32 %v3113, %v3116
      %v3118 = vrot.slane %v3117, 4
      %v3120 = vshll.u32 %v3059, 16
      %v3122 = vrot.slane %v3120, 5
      %v3123 = vsel %vm612, %v3118, %v3122
      %v3125 = vshrl.u32 %v3060, 16
      %v3127 = vrot.slane %v3125, 4
      %v3128 = vshll.u32 %v3060, 16
      %v3130 = vrot.slane %v3128, 5
      %v3131 = vor.u32 %v3127, %v3130
      %v3132 = vrot.slane %v3131, 4
      %v3134 = vshll.u32 %v3061, 16
      %v3136 = vrot.slane %v3134, 5
      %v3137 = vsel %vm612, %v3132, %v3136
      %v3139 = vshrl.u32 %v3062, 16
      %v3141 = vrot.slane %v3139, 4
      %v3142 = vshll.u32 %v3062, 16
      %v3144 = vrot.slane %v3142, 5
      %v3145 = vor.u32 %v3141, %v3144
      %v3146 = vrot.slane %v3145, 4
      %v3148 = vshll.u32 %v3063, 16
      %v3150 = vrot.slane %v3148, 5
      %v3151 = vsel %vm612, %v3146, %v3150
      %v3153 = vshrl.u32 %v3064, 16
      %v3155 = vrot.slane %v3153, 4
      %v3156 = vshll.u32 %v3064, 16
      %v3158 = vrot.slane %v3156, 5
      %v3159 = vor.u32 %v3155, %v3158
      %v3160 = vrot.slane %v3159, 4
      %v3162 = vshll.u32 %v3065, 16
      %v3164 = vrot.slane %v3162, 5
      %v3165 = vsel %vm612, %v3160, %v3164
      %v3167 = vshrl.u32 %v3066, 16
      %v3169 = vrot.slane %v3167, 4
      %v3170 = vshll.u32 %v3066, 16
      %v3172 = vrot.slane %v3170, 5
      %v3173 = vor.u32 %v3169, %v3172
      %v3174 = vrot.slane %v3173, 4
      %v3176 = vshll.u32 %v3067, 16
      %v3178 = vrot.slane %v3176, 5
      %v3179 = vsel %vm612, %v3174, %v3178
      %s3180 = scalar_lea.vmem %s4, 28
      %v3181 = vld [vmem:[%s3180] sm:$0xf]
      %v3182 = vunpack.c.l.b16 %v3081
      %v3183 = vunpack.c.l.b16 %v3095
      %v3184 = vunpack.c.l.b16 %v3109
      %v3185 = vunpack.c.l.b16 %v3123
      %v3186 = vunpack.c.l.b16 %v3137
      %v3187 = vunpack.c.l.b16 %v3151
      %v3188 = vunpack.c.l.b16 %v3165
      %v3189 = vunpack.c.l.b16 %v3179
      %v3190 = vpack.c.b16 %v3183, %v3182
      %v3191 = vpack.c.b16 %v3185, %v3184
      %v3192 = vpack.c.b16 %v3187, %v3186
      %v3193 = vpack.c.b16 %v3189, %v3188
      %v3195 = vsel %vm2084, %v3190, 0
      %v3198 = vsel %vm2084, %v3191, 0
      %v3201 = vsel %vm2084, %v3192, 0
      %v3204 = vsel %vm2084, %v3193, 0
      %v3207 = vsel %vm2097, %v3181, 0
      %3209 = vmatprep.subr.bf16.mxu0 0
      %3210 = vmatpush1.bf16.msra.mxu0 %v3207
      %3211 = vmatprep.subr.bf16.mxu0 0
      %3212 = vmatpush1.bf16.msra.mxu0 0
      %3213 = vmatprep.subr.bf16.mxu0 0
      %3214 = vmatpush1.bf16.msra.mxu0 0
      %3215 = vmatprep.subr.bf16.mxu0 0
      %3216 = vmatpush1.bf16.msra.mxu0 0
      %3217 = vmatprep.subr.bf16.mxu0 0
      %3218 = vmatpush1.bf16.msra.mxu0 0
      %3219 = vmatprep.subr.bf16.mxu0 0
      %3220 = vmatpush1.bf16.msra.mxu0 0
      %3221 = vmatprep.subr.bf16.mxu0 0
      %3222 = vmatpush1.bf16.msra.mxu0 0
      %3223 = vmatprep.subr.bf16.mxu0 0
      %3224 = vmatpush1.bf16.msra.mxu0 0
      %3225 = vmatprep.subr.bf16.mxu0 0
      %3226 = vmatpush1.bf16.msra.mxu0 0
      %3227 = vmatprep.subr.bf16.mxu0 0
      %3228 = vmatpush1.bf16.msra.mxu0 0
      %3229 = vmatprep.subr.bf16.mxu0 0
      %3230 = vmatpush1.bf16.msra.mxu0 0
      %3231 = vmatprep.subr.bf16.mxu0 0
      %3232 = vmatpush1.bf16.msra.mxu0 0
      %3233 = vmatprep.subr.bf16.mxu0 0
      %3234 = vmatpush1.bf16.msra.mxu0 0
      %3235 = vmatprep.subr.bf16.mxu0 0
      %3236 = vmatpush1.bf16.msra.mxu0 0
      %3237 = vmatprep.subr.bf16.mxu0 0
      %3238 = vmatpush1.bf16.msra.mxu0 0
      %3239 = vmatprep.subr.bf16.mxu0 0
      %3240 = vmatpush1.bf16.msra.mxu0 0
      %3241 = vmatprep.mubr.bf16.mxu0 0
      %3242 = vmatmul.mubr.bf16.gmra.mrb[0].mxu0 %v3195
      %v3243 = vpop.f32.mrb[0].mxu0
      %v3244 = vadd.f32 0.0, %v3243
      %v3245 = vpop.f32.mrb[0].mxu0
      %v3246 = vpop.f32.mrb[0].mxu0
      %v3247 = vadd.f32 0.0, %v3246
      %v3248 = vpop.f32.mrb[0].mxu0
      %3249 = vmatprep.mubr.bf16.mxu0 0
      %3250 = vmatmul.mubr.bf16.gmra.mrb[0].mxu0 %v3198
      %v3251 = vpop.f32.mrb[0].mxu0
      %v3252 = vadd.f32 0.0, %v3251
      %v3253 = vpop.f32.mrb[0].mxu0
      %v3254 = vpop.f32.mrb[0].mxu0
      %v3255 = vadd.f32 0.0, %v3254
      %v3256 = vpop.f32.mrb[0].mxu0
      %3257 = vmatprep.mubr.bf16.mxu0 0
      %3258 = vmatmul.mubr.bf16.gmra.mrb[0].mxu0 %v3201
      %v3259 = vpop.f32.mrb[0].mxu0
      %v3260 = vadd.f32 0.0, %v3259
      %v3261 = vpop.f32.mrb[0].mxu0
      %v3262 = vpop.f32.mrb[0].mxu0
      %v3263 = vadd.f32 0.0, %v3262
      %v3264 = vpop.f32.mrb[0].mxu0
      %3265 = vmatprep.mubr.bf16.mxu0 0
      %3266 = vmatmul.mubr.bf16.gmra.mrb[0].mxu0 %v3204
      %v3267 = vpop.f32.mrb[0].mxu0
      %v3268 = vadd.f32 0.0, %v3267
      %v3269 = vpop.f32.mrb[0].mxu0
      %v3270 = vpop.f32.mrb[0].mxu0
      %v3271 = vadd.f32 0.0, %v3270
      %v3272 = vpop.f32.mrb[0].mxu0
      %3273 = vdwg.mxu0
      %v3274 = vadd.f32 %v3044, %v3244
      %v3275 = vadd.f32 %v3045, %v3247
      %v3276 = vadd.f32 %v3046, %v3252
      %v3277 = vadd.f32 %v3047, %v3255
      %v3278 = vadd.f32 %v3048, %v3260
      %v3279 = vadd.f32 %v3049, %v3263
      %v3280 = vadd.f32 %v3050, %v3268
      %v3281 = vadd.f32 %v3051, %v3271
      %v3282 = vld [vmem:[%s2933] sm:$0xe]
      %v3283 = vld [vmem:[%s2933 + $0x8] sm:$0xe]
      %v3284 = vld [vmem:[%s2933 + $0x10] sm:$0xe]
      %v3285 = vld [vmem:[%s2933 + $0x18] sm:$0xe]
      %v3286 = vld [vmem:[%s2933 + $0x20] sm:$0xe]
      %v3287 = vld [vmem:[%s2933 + $0x28] sm:$0xe]
      %v3288 = vld [vmem:[%s2933 + $0x30] sm:$0xe]
      %v3289 = vld [vmem:[%s2933 + $0x38] sm:$0xe]
      %v3306 = vrot.slane %v3282, 5
      %v3307 = vrot.slane %v3306, 4
      %v3308 = vrot.slane %v3053, 5
      %v3309 = vsel %vm2292, %v3307, %v3308
      %v3310 = vrot.slane %v3283, 5
      %v3311 = vrot.slane %v3310, 4
      %v3312 = vrot.slane %v3055, 5
      %v3313 = vsel %vm2292, %v3311, %v3312
      %v3314 = vrot.slane %v3284, 5
      %v3315 = vrot.slane %v3314, 4
      %v3316 = vrot.slane %v3057, 5
      %v3317 = vsel %vm2292, %v3315, %v3316
      %v3318 = vrot.slane %v3285, 5
      %v3319 = vrot.slane %v3318, 4
      %v3320 = vrot.slane %v3059, 5
      %v3321 = vsel %vm2292, %v3319, %v3320
      %v3322 = vrot.slane %v3286, 5
      %v3323 = vrot.slane %v3322, 4
      %v3324 = vrot.slane %v3061, 5
      %v3325 = vsel %vm2292, %v3323, %v3324
      %v3326 = vrot.slane %v3287, 5
      %v3327 = vrot.slane %v3326, 4
      %v3328 = vrot.slane %v3063, 5
      %v3329 = vsel %vm2292, %v3327, %v3328
      %v3330 = vrot.slane %v3288, 5
      %v3331 = vrot.slane %v3330, 4
      %v3332 = vrot.slane %v3065, 5
      %v3333 = vsel %vm2292, %v3331, %v3332
      %v3334 = vrot.slane %v3289, 5
      %v3335 = vrot.slane %v3334, 4
      %v3336 = vrot.slane %v3067, 5
      %v3337 = vsel %vm2292, %v3335, %v3336
      %s3338 = scalar_lea.vmem %s4, 32
      %v3339 = vld [vmem:[%s3338] sm:$0xf]
      %v3340 = vunpack.c.l.b16 %v3309
      %v3341 = vunpack.c.l.b16 %v3313
      %v3342 = vunpack.c.l.b16 %v3317
      %v3343 = vunpack.c.l.b16 %v3321
      %v3344 = vunpack.c.l.b16 %v3325
      %v3345 = vunpack.c.l.b16 %v3329
      %v3346 = vunpack.c.l.b16 %v3333
      %v3347 = vunpack.c.l.b16 %v3337
      %v3348 = vpack.c.b16 %v3341, %v3340
      %v3349 = vpack.c.b16 %v3343, %v3342
      %v3350 = vpack.c.b16 %v3345, %v3344
      %v3351 = vpack.c.b16 %v3347, %v3346
      %v3353 = vsel %vm2084, %v3348, 0
      %v3356 = vsel %vm2084, %v3349, 0
      %v3359 = vsel %vm2084, %v3350, 0
      %v3362 = vsel %vm2084, %v3351, 0
      %v3365 = vsel %vm2097, %v3339, 0
      %3367 = vmatprep.subr.bf16.mxu0 0
      %3368 = vmatpush1.bf16.msra.mxu0 %v3365
      %3369 = vmatprep.subr.bf16.mxu0 0
      %3370 = vmatpush1.bf16.msra.mxu0 0
      %3371 = vmatprep.subr.bf16.mxu0 0
      %3372 = vmatpush1.bf16.msra.mxu0 0
      %3373 = vmatprep.subr.bf16.mxu0 0
      %3374 = vmatpush1.bf16.msra.mxu0 0
      %3375 = vmatprep.subr.bf16.mxu0 0
      %3376 = vmatpush1.bf16.msra.mxu0 0
      %3377 = vmatprep.subr.bf16.mxu0 0
      %3378 = vmatpush1.bf16.msra.mxu0 0
      %3379 = vmatprep.subr.bf16.mxu0 0
      %3380 = vmatpush1.bf16.msra.mxu0 0
      %3381 = vmatprep.subr.bf16.mxu0 0
      %3382 = vmatpush1.bf16.msra.mxu0 0
      %3383 = vmatprep.subr.bf16.mxu0 0
      %3384 = vmatpush1.bf16.msra.mxu0 0
      %3385 = vmatprep.subr.bf16.mxu0 0
      %3386 = vmatpush1.bf16.msra.mxu0 0
      %3387 = vmatprep.subr.bf16.mxu0 0
      %3388 = vmatpush1.bf16.msra.mxu0 0
      %3389 = vmatprep.subr.bf16.mxu0 0
      %3390 = vmatpush1.bf16.msra.mxu0 0
      %3391 = vmatprep.subr.bf16.mxu0 0
      %3392 = vmatpush1.bf16.msra.mxu0 0
      %3393 = vmatprep.subr.bf16.mxu0 0
      %3394 = vmatpush1.bf16.msra.mxu0 0
      %3395 = vmatprep.subr.bf16.mxu0 0
      %3396 = vmatpush1.bf16.msra.mxu0 0
      %3397 = vmatprep.subr.bf16.mxu0 0
      %3398 = vmatpush1.bf16.msra.mxu0 0
      %3399 = vmatprep.mubr.bf16.mxu0 0
      %3400 = vmatmul.mubr.bf16.gmra.mrb[0].mxu0 %v3353
      %v3401 = vpop.f32.mrb[0].mxu0
      %v3402 = vadd.f32 0.0, %v3401
      %v3403 = vpop.f32.mrb[0].mxu0
      %v3404 = vpop.f32.mrb[0].mxu0
      %v3405 = vadd.f32 0.0, %v3404
      %v3406 = vpop.f32.mrb[0].mxu0
      %3407 = vmatprep.mubr.bf16.mxu0 0
      %3408 = vmatmul.mubr.bf16.gmra.mrb[0].mxu0 %v3356
      %v3409 = vpop.f32.mrb[0].mxu0
      %v3410 = vadd.f32 0.0, %v3409
      %v3411 = vpop.f32.mrb[0].mxu0
      %v3412 = vpop.f32.mrb[0].mxu0
      %v3413 = vadd.f32 0.0, %v3412
      %v3414 = vpop.f32.mrb[0].mxu0
      %3415 = vmatprep.mubr.bf16.mxu0 0
      %3416 = vmatmul.mubr.bf16.gmra.mrb[0].mxu0 %v3359
      %v3417 = vpop.f32.mrb[0].mxu0
      %v3418 = vadd.f32 0.0, %v3417
      %v3419 = vpop.f32.mrb[0].mxu0
      %v3420 = vpop.f32.mrb[0].mxu0
      %v3421 = vadd.f32 0.0, %v3420
      %v3422 = vpop.f32.mrb[0].mxu0
      %3423 = vmatprep.mubr.bf16.mxu0 0
      %3424 = vmatmul.mubr.bf16.gmra.mrb[0].mxu0 %v3362
      %v3425 = vpop.f32.mrb[0].mxu0
      %v3426 = vadd.f32 0.0, %v3425
      %v3427 = vpop.f32.mrb[0].mxu0
      %v3428 = vpop.f32.mrb[0].mxu0
      %v3429 = vadd.f32 0.0, %v3428
      %v3430 = vpop.f32.mrb[0].mxu0
      %3431 = vdwg.mxu0
      %v3432 = vadd.f32 %v3274, %v3402
      %v3433 = vadd.f32 %v3275, %v3405
      %v3434 = vadd.f32 %v3276, %v3410
      %v3435 = vadd.f32 %v3277, %v3413
      %v3436 = vadd.f32 %v3278, %v3418
      %v3437 = vadd.f32 %v3279, %v3421
      %v3438 = vadd.f32 %v3280, %v3426
      %v3439 = vadd.f32 %v3281, %v3429
      %v3440 = vld [vmem:[%s293] sm:$0xf]
      %v3441 = vld [vmem:[%s293 + $0x4] sm:$0xf]
      %v3442 = vld [vmem:[%s293 + $0x8] sm:$0xf]
      %v3443 = vld [vmem:[%s293 + $0xc] sm:$0xf]
      %v3444 = vld [vmem:[%s293 + $0x10] sm:$0xf]
      %v3445 = vld [vmem:[%s293 + $0x14] sm:$0xf]
      %v3446 = vld [vmem:[%s293 + $0x18] sm:$0xf]
      %v3447 = vld [vmem:[%s293 + $0x1c] sm:$0xf]
      %v3448 = vld [vmem:[%s6] sm:$0x3]
      %v3457 = vunpack.c.l.b16 %v3440
      %v3458 = vunpack.c.l.b16 %v3441
      %v3459 = vunpack.c.l.b16 %v3442
      %v3460 = vunpack.c.l.b16 %v3443
      %v3461 = vunpack.c.l.b16 %v3444
      %v3462 = vunpack.c.l.b16 %v3445
      %v3463 = vunpack.c.l.b16 %v3446
      %v3464 = vunpack.c.l.b16 %v3447
      %v3465 = vpack.c.b16 %v3458, %v3457
      %v3466 = vpack.c.b16 %v3460, %v3459
      %v3467 = vpack.c.b16 %v3462, %v3461
      %v3468 = vpack.c.b16 %v3464, %v3463
      %v3470 = vsel %vm412, %v3465, 0
      %v3473 = vsel %vm412, %v3466, 0
      %v3476 = vsel %vm412, %v3467, 0
      %v3479 = vsel %vm412, %v3468, 0
      %v3482 = vsel %vm425, %v3448, 0
      %3484 = vmatprep.subr.bf16.mxu0 0
      %3485 = vmatpush1.bf16.msra.mxu0 %v3482
      %3486 = vmatprep.subr.bf16.mxu0 0
      %3487 = vmatpush1.bf16.msra.mxu0 0
      %3488 = vmatprep.subr.bf16.mxu0 0
      %3489 = vmatpush1.bf16.msra.mxu0 0
      %3490 = vmatprep.subr.bf16.mxu0 0
      %3491 = vmatpush1.bf16.msra.mxu0 0
      %3492 = vmatprep.subr.bf16.mxu0 0
      %3493 = vmatpush1.bf16.msra.mxu0 0
      %3494 = vmatprep.subr.bf16.mxu0 0
      %3495 = vmatpush1.bf16.msra.mxu0 0
      %3496 = vmatprep.subr.bf16.mxu0 0
      %3497 = vmatpush1.bf16.msra.mxu0 0
      %3498 = vmatprep.subr.bf16.mxu0 0
      %3499 = vmatpush1.bf16.msra.mxu0 0
      %3500 = vmatprep.subr.bf16.mxu0 0
      %3501 = vmatpush1.bf16.msra.mxu0 0
      %3502 = vmatprep.subr.bf16.mxu0 0
      %3503 = vmatpush1.bf16.msra.mxu0 0
      %3504 = vmatprep.subr.bf16.mxu0 0
      %3505 = vmatpush1.bf16.msra.mxu0 0
      %3506 = vmatprep.subr.bf16.mxu0 0
      %3507 = vmatpush1.bf16.msra.mxu0 0
      %3508 = vmatprep.subr.bf16.mxu0 0
      %3509 = vmatpush1.bf16.msra.mxu0 0
      %3510 = vmatprep.subr.bf16.mxu0 0
      %3511 = vmatpush1.bf16.msra.mxu0 0
      %3512 = vmatprep.subr.bf16.mxu0 0
      %3513 = vmatpush1.bf16.msra.mxu0 0
      %3514 = vmatprep.subr.bf16.mxu0 0
      %3515 = vmatpush1.bf16.msra.mxu0 0
      %3516 = vmatprep.mubr.bf16.mxu0 0
      %3517 = vmatmul.mubr.bf16.gmra.mrb[0].mxu0 %v3470
      %v3518 = vpop.f32.mrb[0].mxu0
      %v3519 = vadd.f32 0.0, %v3518
      %v3520 = vpop.f32.mrb[0].mxu0
      %v3521 = vpop.f32.mrb[0].mxu0
      %v3522 = vadd.f32 0.0, %v3521
      %v3523 = vpop.f32.mrb[0].mxu0
      %3524 = vmatprep.mubr.bf16.mxu0 0
      %3525 = vmatmul.mubr.bf16.gmra.mrb[0].mxu0 %v3473
      %v3526 = vpop.f32.mrb[0].mxu0
      %v3527 = vadd.f32 0.0, %v3526
      %v3528 = vpop.f32.mrb[0].mxu0
      %v3529 = vpop.f32.mrb[0].mxu0
      %v3530 = vadd.f32 0.0, %v3529
      %v3531 = vpop.f32.mrb[0].mxu0
      %3532 = vmatprep.mubr.bf16.mxu0 0
      %3533 = vmatmul.mubr.bf16.gmra.mrb[0].mxu0 %v3476
      %v3534 = vpop.f32.mrb[0].mxu0
      %v3535 = vadd.f32 0.0, %v3534
      %v3536 = vpop.f32.mrb[0].mxu0
      %v3537 = vpop.f32.mrb[0].mxu0
      %v3538 = vadd.f32 0.0, %v3537
      %v3539 = vpop.f32.mrb[0].mxu0
      %3540 = vmatprep.mubr.bf16.mxu0 0
      %3541 = vmatmul.mubr.bf16.gmra.mrb[0].mxu0 %v3479
      %v3542 = vpop.f32.mrb[0].mxu0
      %v3543 = vadd.f32 0.0, %v3542
      %v3544 = vpop.f32.mrb[0].mxu0
      %v3545 = vpop.f32.mrb[0].mxu0
      %v3546 = vadd.f32 0.0, %v3545
      %v3547 = vpop.f32.mrb[0].mxu0
      %3548 = vdwg.mxu0
      %v3549 = vadd.f32 %v3432, %v3519
      %v3550 = vadd.f32 %v3433, %v3522
      %v3551 = vadd.f32 %v3434, %v3527
      %v3552 = vadd.f32 %v3435, %v3530
      %v3553 = vadd.f32 %v3436, %v3535
      %v3554 = vadd.f32 %v3437, %v3538
      %v3555 = vadd.f32 %v3438, %v3543
      %v3556 = vadd.f32 %v3439, %v3546
      %v3557 = vld [vmem:[%s5] sm:$0x1]
      %v3559 = vlaneseq
      %v3560 = vshrl.u32 %v3559, 7
      %v3561 = vsub.s32 0, %v3560
      %v3562 = vrot.slane %v3557, %v3561
      %v3564 = vadd.f32 %v3549, %v3562
      %v3565 = vadd.f32 %v3550, %v3562
      %v3566 = vadd.f32 %v3551, %v3562
      %v3567 = vadd.f32 %v3552, %v3562
      %v3568 = vadd.f32 %v3553, %v3562
      %v3569 = vadd.f32 %v3554, %v3562
      %v3570 = vadd.f32 %v3555, %v3562
      %v3571 = vadd.f32 %v3556, %v3562
      %v3572 = vmax.f32 %v3564, 0.0
      %v3573 = vmax.f32 %v3565, 0.0
      %v3574 = vmax.f32 %v3566, 0.0
      %v3575 = vmax.f32 %v3567, 0.0
      %v3576 = vmax.f32 %v3568, 0.0
      %v3577 = vmax.f32 %v3569, 0.0
      %v3578 = vmax.f32 %v3570, 0.0
      %v3579 = vmax.f32 %v3571, 0.0
      %v3580 = vpack.c.bf16 %v3573, %v3572
      %v3581 = vpack.c.bf16 %v3575, %v3574
      %v3582 = vpack.c.bf16 %v3577, %v3576
      %v3583 = vpack.c.bf16 %v3579, %v3578
      %v3588 = vunpack.c.l.b16 %v3580
      %v3589 = vunpack.c.h.b16 %v3580
      %v3590 = vunpack.c.l.b16 %v3581
      %v3591 = vunpack.c.h.b16 %v3581
      %v3592 = vunpack.c.l.b16 %v3582
      %v3593 = vunpack.c.h.b16 %v3582
      %v3594 = vunpack.c.l.b16 %v3583
      %v3595 = vunpack.c.h.b16 %v3583
      %v3596 = vpack.c.b16 %v3588, %v3588
      %v3597 = vpack.c.b16 %v3589, %v3589
      %v3598 = vpack.c.b16 %v3590, %v3590
      %v3599 = vpack.c.b16 %v3591, %v3591
      %v3600 = vpack.c.b16 %v3592, %v3592
      %v3601 = vpack.c.b16 %v3593, %v3593
      %v3602 = vpack.c.b16 %v3594, %v3594
      %v3603 = vpack.c.b16 %v3595, %v3595
      %3612 = vst.msk [vmem:[%s298] sm:$0xf] %vm300, %v3596
      %3613 = vst.msk [vmem:[%s298 + $0x4] sm:$0xf] %vm300, %v3597
      %3614 = vst.msk [vmem:[%s298 + $0x8] sm:$0xf] %vm300, %v3598
      %3615 = vst.msk [vmem:[%s298 + $0xc] sm:$0xf] %vm300, %v3599
      %3616 = vst.msk [vmem:[%s298 + $0x10] sm:$0xf] %vm300, %v3600
      %3617 = vst.msk [vmem:[%s298 + $0x14] sm:$0xf] %vm300, %v3601
      %3618 = vst.msk [vmem:[%s298 + $0x18] sm:$0xf] %vm300, %v3602
      %3619 = vst.msk [vmem:[%s298 + $0x1c] sm:$0xf] %vm300, %v3603
      %p3620 = scmp.lt.s32.totalorder %s18, 1
      %s3621 = scalar_select %p3620, %s18, 1
      %s3622 = smul.addr %s3621, 8
      %s3623 = smul.addr %s3622, 4
      %s3624 = scalar_lea.vmem %s7, %s3623
      // Predicated region
      $region49: #{basic_block_forward.1} parent=47 // pred_check
        %p3625 = pneg %p193
      $region50: #{basic_block_forward.1} parent=47 // pred_check_branch
        %3627 = sbr.rel (%p3625) target = $region52
      $region51: #{basic_block_forward.1} parent=47 // pred_region
        _
      $region52: #{basic_block_forward.1} parent=47 // pred_fallthru
        _
    $region48: #{basic_block_forward.1} parent=5 // pred_fallthru
      _
    %p3628 = scmp.le.s32.totalorder 2, %s13
    // Predicated region
    $region53: #{basic_block_forward.1} parent=5 // pred_check
      %p3629 = pneg %p3628
    $region54: #{basic_block_forward.1} parent=5 // pred_check_branch
      %3631 = sbr.rel (%p3629) target = $region56
    $region55: #{basic_block_forward.1} parent=5 // pred_region
      %s3632 = ssub.s32 %s13, 2
      // Predicated region
      $region57: #{basic_block_forward.1} parent=55 // pred_check
        %p3633 = pneg %p199
      $region58: #{basic_block_forward.1} parent=55 // pred_check_branch
        %3635 = sbr.rel (%p3633) target = $region60
      $region59: #{basic_block_forward.1} parent=55 // pred_region
        %p3636 = scmp.lt.s32.totalorder %s19, 1
        %s3637 = scalar_select %p3636, %s19, 1
        %s3638 = smul.addr %s3637, 8
        %s3639 = smul.addr %s3638, 4
        %s3640 = scalar_lea.vmem %s7, %s3639
      $region60: #{basic_block_forward.1} parent=55 // pred_fallthru
        _
    $region56: #{basic_block_forward.1} parent=5 // pred_fallthru
      _
  $region6: #{basic_block_forward.1} parent=0 // loop_footer
    %s17 = sadd.s32 1, %s13
  $region7: #{basic_block_forward.1} parent=0 // loop_footer_branch
    %12 = sbr.rel target = $region3
  $region8: #{basic_block_forward.1} parent=0 // loop_exit
    _

</llo_original>
